<compile_context>
chip_gen: v7x
topology: tpu7x:2x2x1
jax: 0.10.0
libtpu: 0.0.40
codegen_flags: <defaults>
</compile_context>

<pallas_src>
import jax
import jax.numpy as jnp
from jax.experimental import pallas as pl
from jax.experimental.pallas import tpu as pltpu


def _make_kernel(band_width: int, head_dim: int, dim_ff: int, ffn_chunk: int,
                 eps: float):
    scale = float(head_dim) ** -0.5
    halo = band_width - 1
    base = 8 - halo                    # first carry-buffer row read by offset 0
    n_ffn_chunks = dim_ff // ffn_chunk
    C = ffn_chunk

    def kernel(x_ref, wq_ref, wk_ref, wv_ref, wo_ref,
               lastk8_ref, lastv8_ref, g1_ref, g2_ref,
               wfc2_ref, bfc2_ref, wfco_ref, bfco_ref,
               hsum_ref, hexp_ref,
               o_ref,
               kcat_ref, vcat_ref):
        tl = x_ref.shape[0]
        l_idx = pl.program_id(1)

        # ---- 8-row, sublane-aligned K/V halo carry ----
        @pl.when(l_idx == 0)
        def _():
            kcat_ref[0:8, :] = lastk8_ref[...]
            vcat_ref[0:8, :] = lastv8_ref[...]

        @pl.when(l_idx != 0)
        def _():
            kcat_ref[0:8, :] = kcat_ref[tl:tl + 8, :]
            vcat_ref[0:8, :] = vcat_ref[tl:tl + 8, :]

        x = x_ref[...]                                           # (TL, dim) f32

        # ---- RMSNorm (pre-attention) ----
        ms = jnp.mean(x * x, axis=-1, keepdims=True)
        xn_b = (x * jax.lax.rsqrt(ms + eps) * g1_ref[...]).astype(jnp.bfloat16)

        # ---- Q/K/V projections (bf16 MXU operands, f32 accumulation) ----
        q = jnp.dot(xn_b, wq_ref[...], preferred_element_type=jnp.float32)
        k = jnp.dot(xn_b, wk_ref[...], preferred_element_type=jnp.float32)
        v = jnp.dot(xn_b, wv_ref[...], preferred_element_type=jnp.float32)

        kcat_ref[8:, :] = k                                      # aligned stores
        vcat_ref[8:, :] = v

        # ---- band attention ----
        hsum = hsum_ref[...]                                     # (dim, H) bf16
        hexp = hexp_ref[...]                                     # (H, dim) bf16

        # All band offsets stacked along M -> one head-reduce MXU matmul.
        prods = jnp.concatenate(
            [(q * kcat_ref[base + i:base + i + tl, :]).astype(jnp.bfloat16)
             for i in range(band_width)], axis=0)                # (bw*TL, dim)
        scores_all = jnp.dot(prods, hsum,
                             preferred_element_type=jnp.float32) * scale
        scores = [scores_all[i * tl:(i + 1) * tl, :]             # aligned slices
                  for i in range(band_width)]

        m = scores[0]
        for i in range(1, band_width):
            m = jnp.maximum(m, scores[i])

        e_list = [jnp.exp(s - m) for s in scores]                # (TL, H) f32
        denom = e_list[0]
        for i in range(1, band_width):
            denom = denom + e_list[i]

        # One head-broadcast matmul for all offsets' softmax numerators.
        e_all = jnp.concatenate([e.astype(jnp.bfloat16) for e in e_list], axis=0)
        e_full = jnp.dot(e_all, hexp, preferred_element_type=jnp.float32)

        out_acc = e_full[0:tl, :] * vcat_ref[base:base + tl, :]
        for i in range(1, band_width):
            out_acc = out_acc + (e_full[i * tl:(i + 1) * tl, :]
                                 * vcat_ref[base + i:base + i + tl, :])

        inv = pl.reciprocal(denom, approx=True)                  # EUP slot
        inv_full = jnp.dot(inv.astype(jnp.bfloat16), hexp,
                           preferred_element_type=jnp.float32)
        out_band = out_acc * inv_full                            # (TL, dim)

        attn_out = jnp.dot(out_band.astype(jnp.bfloat16), wo_ref[...],
                           preferred_element_type=jnp.float32)
        x1 = attn_out + x                                        # residual 1

        # ---- RMSNorm (pre-FFN) + SwiGLU FFN, chunked over dim_ff ----
        ms2 = jnp.mean(x1 * x1, axis=-1, keepdims=True)
        x1n_b = (x1 * jax.lax.rsqrt(ms2 + eps) * g2_ref[...]).astype(jnp.bfloat16)

        y = jnp.zeros_like(x)
        for c in range(n_ffn_chunks):
            w2c = wfc2_ref[:, 2 * c * C:2 * (c + 1) * C]         # (dim, 2C) bf16
            b2c = bfc2_ref[:, 2 * c * C:2 * (c + 1) * C]         # (1, 2C) f32
            h12 = jnp.dot(x1n_b, w2c,
                          preferred_element_type=jnp.float32) + b2c
            h_lin = h12[:, :C]
            h_act = h12[:, C:]
            h = (h_lin * (h_act * jax.nn.sigmoid(h_act))).astype(jnp.bfloat16)
            y = y + jnp.dot(h, wfco_ref[c * C:(c + 1) * C, :],
                            preferred_element_type=jnp.float32)

        o_ref[...] = y + bfco_ref[...] + x1                      # residual 2

    return kernel


def bt_block_forward(x, params, *, num_head, band_width, eps=1e-6,
                     tile_l=None, ffn_chunk=None):
    B, L, dim = x.shape
    assert dim % num_head == 0
    head_dim = dim // num_head
    dim_ff = params["wfc"].shape[1]
    halo = band_width - 1
    assert 0 <= halo <= 8, "band_width-1 must be <= 8 for the 8-row halo carry"
    # TODO(synk): pad the carry to the next multiple of 8 for wider bands.

    if tile_l is None:
        tile_l = L
        for cand in (512, 256, 128, 64, 32, 16, 8):
            if L % cand == 0:
                tile_l = cand
                break
    assert L % tile_l == 0, "L must be a multiple of tile_l"
    assert tile_l % 8 == 0 and tile_l >= 8, "tile_l must be sublane-aligned"
    n_lt = L // tile_l

    if ffn_chunk is None:
        ffn_chunk = dim_ff if (dim_ff <= 1024 or dim_ff % 512 != 0) else 512
    assert dim_ff % ffn_chunk == 0

    kernel = _make_kernel(band_width, head_dim, dim_ff, ffn_chunk, eps)

    bf16 = lambda w: w.astype(jnp.bfloat16)

    # Fused, chunk-interleaved up-projection weight: per dim_ff chunk c, columns
    # [2cC, 2cC+C) are fc and [2cC+C, 2(c+1)C) are fc_act.
    n_ch = dim_ff // ffn_chunk
    C = ffn_chunk
    wfc2 = jnp.concatenate(
        [params["wfc"].reshape(dim, n_ch, 1, C),
         params["wfca"].reshape(dim, n_ch, 1, C)], axis=2).reshape(dim, 2 * dim_ff)
    bfc2 = jnp.concatenate(
        [params["bfc"].reshape(1, n_ch, 1, C),
         params["bfca"].reshape(1, n_ch, 1, C)], axis=2).reshape(1, 2 * dim_ff)

    # 0/1 block-diagonal head-reduce / head-broadcast matrices (exact in bf16).
    col_head = jnp.arange(dim)[:, None] // head_dim
    hsum = (col_head == jnp.arange(num_head)[None, :]).astype(jnp.bfloat16)
    hexp = hsum.T

    # 8-row, zero-padded initial K/V halo (rows [8-halo:8] hold last_*_init;
    # the zero rows are never read).
    pad = jnp.zeros((8 - halo, dim), jnp.float32)
    lastk8 = jnp.concatenate([pad, params["lastk2d"].astype(jnp.float32)], axis=0)
    lastv8 = jnp.concatenate([pad, params["lastv2d"].astype(jnp.float32)], axis=0)

    args = (x,
            bf16(params["wq"]), bf16(params["wk"]),
            bf16(params["wv"]), bf16(params["wo"]),
            lastk8, lastv8,
            params["g1"], params["g2"],
            bf16(wfc2), bfc2, bf16(params["wfco"]), params["bfco"],
            hsum, hexp)

    def run(buffered_weights: bool):
        def const_spec(shape):
            kwargs = {}
            if buffered_weights:
                # Constant index_map -> DMA'd once; single-buffer to halve
                # resident weight VMEM (matters on v7x's 64 MiB).
                kwargs["pipeline_mode"] = pl.Buffered(1)
            return pl.BlockSpec(shape, lambda b, l: (0, 0), **kwargs)

        in_specs = [
            pl.BlockSpec((None, tile_l, dim), lambda b, l: (b, l, 0)),  # x tile
            const_spec((dim, dim)), const_spec((dim, dim)),
            const_spec((dim, dim)), const_spec((dim, dim)),
            const_spec((8, dim)), const_spec((8, dim)),
            const_spec((1, dim)), const_spec((1, dim)),
            const_spec((dim, 2 * dim_ff)), const_spec((1, 2 * dim_ff)),
            const_spec((dim_ff, dim)), const_spec((1, dim)),
            const_spec((dim, num_head)), const_spec((num_head, dim)),
        ]
        out_spec = pl.BlockSpec((None, tile_l, dim), lambda b, l: (b, l, 0))

        grid_spec = pltpu.PrefetchScalarGridSpec(
            num_scalar_prefetch=0,
            grid=(B, n_lt),
            in_specs=in_specs,
            out_specs=out_spec,
            scratch_shapes=[
                pltpu.VMEM((tile_l + 8, dim), jnp.float32),   # K cat + carry
                pltpu.VMEM((tile_l + 8, dim), jnp.float32),   # V cat + carry
            ],
        )

        # Scoped-VMEM budget: resident bf16 weights (x2 only when actually
        # double-buffered), double-buffered f32 I/O tiles, carry scratch, and
        # in-kernel f32 temporaries; clamped below physical VMEM.
        w_bytes = 2 * (4 * dim * dim + 2 * dim * dim_ff + dim_ff * dim)
        if not buffered_weights:
            w_bytes *= 2
        io_bytes = 2 * 2 * 4 * tile_l * dim
        carry_bytes = 2 * 4 * (tile_l + 8) * dim
        act_bytes = 4 * tile_l * ((12 + 3 * band_width) * dim + 4 * ffn_chunk)
        need = w_bytes + io_bytes + carry_bytes + 2 * act_bytes + (4 << 20)
        try:
            cap = pltpu.get_tpu_info().vmem_capacity_bytes - (8 << 20)
        except Exception:
            cap = 56 << 20   # conservative (v7x-safe) fallback
        vmem_limit = int(max(32 << 20, min(cap, need)))

        fn = pl.pallas_call(
            kernel,
            out_shape=jax.ShapeDtypeStruct((B, L, dim), jnp.float32),
            grid_spec=grid_spec,
            compiler_params=pltpu.CompilerParams(
                dimension_semantics=("parallel", "arbitrary"),
                vmem_limit_bytes=vmem_limit),
        )
        return jax.block_until_ready(fn(*args))

    try:
        return run(buffered_weights=True)
    except Exception:
        # pipeline_mode=pl.Buffered(1) rejected by this jax/Mosaic version:
        # fall back to default double-buffered weight specs.
        return run(buffered_weights=False)


def ref_forward(x, params, *, num_head, band_width, eps=1e-6):
    """Pure-JAX reference mirroring the PyTorch module; weight matrices are
    round-tripped through bf16 to match the kernel's MXU operand dtype."""
    B, L, dim = x.shape
    D = dim // num_head
    bf = lambda w: w.astype(jnp.bfloat16).astype(jnp.float32)

    def rms(z, g):
        return z * jax.lax.rsqrt(jnp.mean(z * z, -1, keepdims=True) + eps) * g[0]

    xn = rms(x, params["g1"])
    q = (xn @ bf(params["wq"])).reshape(B, L, num_head, D)
    k = (xn @ bf(params["wk"])).reshape(B, L, num_head, D)
    v = (xn @ bf(params["wv"])).reshape(B, L, num_head, D)
    lastk = jnp.broadcast_to(
        params["lastk2d"].reshape(1, band_width - 1, num_head, D),
        (B, band_width - 1, num_head, D))
    lastv = jnp.broadcast_to(
        params["lastv2d"].reshape(1, band_width - 1, num_head, D),
        (B, band_width - 1, num_head, D))
    kcat = jnp.concatenate([lastk, k], axis=1)
    vcat = jnp.concatenate([lastv, v], axis=1)
    att = jnp.stack(
        [jnp.einsum("blhd,blhd->blh", q, kcat[:, i:i + L])
         for i in range(band_width)], axis=2) * (D ** -0.5)
    att = jax.nn.softmax(att, axis=2)
    out = sum(jnp.einsum("blh,blhd->blhd", att[:, :, i], vcat[:, i:i + L])
              for i in range(band_width))
    attn_out = out.reshape(B, L, dim) @ bf(params["wo"])
    x1 = attn_out + x
    x1n = rms(x1, params["g2"])
    h = (x1n @ bf(params["wfc"]) + params["bfc"][0]) * jax.nn.silu(
        x1n @ bf(params["wfca"]) + params["bfca"][0])
    y = h @ bf(params["wfco"]) + params["bfco"][0]
    return y + x1


if __name__ == "__main__":
    # Small, lane-aligned shapes; L=16 with tile_l=8 exercises the L-tiling +
    # 8-row halo-carry path; dim/dim_ff multiples of 128 keep stores unmasked.
    B, L = 2, 16
    dim, num_head, dim_ff, band_width = 128, 4, 256, 4
    head_dim = dim // num_head

    key = jax.random.PRNGKey(0)
    ks = jax.random.split(key, 12)
    s = 0.1  # keep activations well-conditioned

    def lin(k_, fin, fout):
        return jax.random.normal(k_, (fin, fout), jnp.float32) * s

    params = {
        "wq": lin(ks[0], dim, dim),
        "wk": lin(ks[1], dim, dim),
        "wv": lin(ks[2], dim, dim),
        "wo": lin(ks[3], dim, dim),
        # last_k_init / last_v_init: (band_width-1, num_head, head_dim) ~ randn,
        # flattened to (band_width-1, dim) with the same h*head_dim+d packing.
        "lastk2d": jax.random.normal(
            ks[4], (band_width - 1, num_head, head_dim), jnp.float32
        ).reshape(band_width - 1, dim),
        "lastv2d": jax.random.normal(
            ks[5], (band_width - 1, num_head, head_dim), jnp.float32
        ).reshape(band_width - 1, dim),
        # RMSNorm weights init to ones, as in the module.
        "g1": jnp.ones((1, dim), jnp.float32),
        "g2": jnp.ones((1, dim), jnp.float32),
        "wfc": lin(ks[6], dim, dim_ff),
        "bfc": jax.random.normal(ks[7], (1, dim_ff), jnp.float32) * s,
        "wfca": lin(ks[8], dim, dim_ff),
        "bfca": jax.random.normal(ks[9], (1, dim_ff), jnp.float32) * s,
        "wfco": lin(ks[10], dim_ff, dim),
        "bfco": jax.random.normal(ks[11], (1, dim), jnp.float32) * s,
    }

    x = jax.random.normal(jax.random.PRNGKey(42), (B, L, dim), jnp.float32)

    out = bt_block_forward(x, params, num_head=num_head, band_width=band_width,
                           tile_l=8)
    out = jax.block_until_ready(out)

    ref = ref_forward(x, params, num_head=num_head, band_width=band_width)
    assert out.shape == (B, L, dim)
    max_err = float(jnp.max(jnp.abs(out - ref)))
    # bf16 MXU operands (weights + normalized activations + softmax weights)
    # with f32 accumulation -> loosened tolerance vs the f32 reference.
    assert jnp.allclose(out, ref, atol=4e-2, rtol=4e-2), max_err

    print("KERNEL_OK")
</pallas_src>

<mosaic_0001>
module attributes {stable_mosaic.version = 11 : i64} {
  func.func @kernel(%arg0: i32, %arg1: i32, %arg2: memref<1x8x128xf32, #tpu.memory_space<vmem>>, %arg3: memref<128x128xbf16, #tpu.memory_space<vmem>>, %arg4: memref<128x128xbf16, #tpu.memory_space<vmem>>, %arg5: memref<128x128xbf16, #tpu.memory_space<vmem>>, %arg6: memref<128x128xbf16, #tpu.memory_space<vmem>>, %arg7: memref<8x128xf32, #tpu.memory_space<vmem>>, %arg8: memref<8x128xf32, #tpu.memory_space<vmem>>, %arg9: memref<1x128xf32, #tpu.memory_space<vmem>>, %arg10: memref<1x128xf32, #tpu.memory_space<vmem>>, %arg11: memref<128x512xbf16, #tpu.memory_space<vmem>>, %arg12: memref<1x512xf32, #tpu.memory_space<vmem>>, %arg13: memref<256x128xbf16, #tpu.memory_space<vmem>>, %arg14: memref<1x128xf32, #tpu.memory_space<vmem>>, %arg15: memref<128x4xbf16, #tpu.memory_space<vmem>>, %arg16: memref<4x128xbf16, #tpu.memory_space<vmem>>, %arg17: memref<1x8x128xf32, #tpu.memory_space<vmem>>, %arg18: memref<16x128xf32, #tpu.memory_space<vmem>>, %arg19: memref<16x128xf32, #tpu.memory_space<vmem>>) attributes {dimension_semantics = [#tpu.dimension_semantics<parallel>, #tpu.dimension_semantics<arbitrary>], iteration_bounds = array<i64: 2, 2>, scalar_prefetch = 0 : i64, scratch_operands = 2 : i64, tpu.core_type = #tpu.core_type<tc>, window_params = [{transform_indices = @transform_0, window_bounds = array<i64: 1, 8, 128>}, {pipeline_mode = #tpu.pipeline_mode<synchronous>, transform_indices = @transform_1, window_bounds = array<i64: 128, 128>}, {pipeline_mode = #tpu.pipeline_mode<synchronous>, transform_indices = @transform_2, window_bounds = array<i64: 128, 128>}, {pipeline_mode = #tpu.pipeline_mode<synchronous>, transform_indices = @transform_3, window_bounds = array<i64: 128, 128>}, {pipeline_mode = #tpu.pipeline_mode<synchronous>, transform_indices = @transform_4, window_bounds = array<i64: 128, 128>}, {pipeline_mode = #tpu.pipeline_mode<synchronous>, transform_indices = @transform_5, window_bounds = array<i64: 8, 128>}, {pipeline_mode = #tpu.pipeline_mode<synchronous>, transform_indices = @transform_6, window_bounds = array<i64: 8, 128>}, {pipeline_mode = #tpu.pipeline_mode<synchronous>, transform_indices = @transform_7, window_bounds = array<i64: 1, 128>}, {pipeline_mode = #tpu.pipeline_mode<synchronous>, transform_indices = @transform_8, window_bounds = array<i64: 1, 128>}, {pipeline_mode = #tpu.pipeline_mode<synchronous>, transform_indices = @transform_9, window_bounds = array<i64: 128, 512>}, {pipeline_mode = #tpu.pipeline_mode<synchronous>, transform_indices = @transform_10, window_bounds = array<i64: 1, 512>}, {pipeline_mode = #tpu.pipeline_mode<synchronous>, transform_indices = @transform_11, window_bounds = array<i64: 256, 128>}, {pipeline_mode = #tpu.pipeline_mode<synchronous>, transform_indices = @transform_12, window_bounds = array<i64: 1, 128>}, {pipeline_mode = #tpu.pipeline_mode<synchronous>, transform_indices = @transform_13, window_bounds = array<i64: 128, 4>}, {pipeline_mode = #tpu.pipeline_mode<synchronous>, transform_indices = @transform_14, window_bounds = array<i64: 4, 128>}, {transform_indices = @transform_15, window_bounds = array<i64: 1, 8, 128>}]} {
    %c0_i32 = arith.constant 0 : i32
    %0 = arith.cmpi eq, %arg1, %c0_i32 : i32
    %1 = arith.extui %0 : i1 to i32
    %c0_i32_0 = arith.constant 0 : i32
    %2 = arith.cmpi ne, %1, %c0_i32_0 : i32
    scf.if %2 {
      %c0_65 = arith.constant 0 : index
      %c0_66 = arith.constant 0 : index
      %135 = vector.load %arg7[%c0_65, %c0_66] : memref<8x128xf32, #tpu.memory_space<vmem>>, vector<8x128xf32>
      %c0_67 = arith.constant 0 : index
      %c0_68 = arith.constant 0 : index
      %136 = vector.load %arg18[%c0_67, %c0_68] : memref<16x128xf32, #tpu.memory_space<vmem>>, vector<8x128xf32>
      tpu.vector_store %arg18[%c0_67, %c0_68], %135 {strides = array<i32>} : memref<16x128xf32, #tpu.memory_space<vmem>>, vector<8x128xf32>,
      %c0_69 = arith.constant 0 : index
      %c0_70 = arith.constant 0 : index
      %137 = vector.load %arg8[%c0_69, %c0_70] : memref<8x128xf32, #tpu.memory_space<vmem>>, vector<8x128xf32>
      %c0_71 = arith.constant 0 : index
      %c0_72 = arith.constant 0 : index
      %138 = vector.load %arg19[%c0_71, %c0_72] : memref<16x128xf32, #tpu.memory_space<vmem>>, vector<8x128xf32>
      tpu.vector_store %arg19[%c0_71, %c0_72], %137 {strides = array<i32>} : memref<16x128xf32, #tpu.memory_space<vmem>>, vector<8x128xf32>,
    } else {
    }
    %c0_i32_1 = arith.constant 0 : i32
    %3 = arith.cmpi ne, %arg1, %c0_i32_1 : i32
    %4 = arith.extui %3 : i1 to i32
    %c0_i32_2 = arith.constant 0 : i32
    %5 = arith.cmpi ne, %4, %c0_i32_2 : i32
    scf.if %5 {
      %c8_65 = arith.constant 8 : index
      %c0_66 = arith.constant 0 : index
      %135 = vector.load %arg18[%c8_65, %c0_66] : memref<16x128xf32, #tpu.memory_space<vmem>>, vector<8x128xf32>
      %c0_67 = arith.constant 0 : index
      %c0_68 = arith.constant 0 : index
      %136 = vector.load %arg18[%c0_67, %c0_68] : memref<16x128xf32, #tpu.memory_space<vmem>>, vector<8x128xf32>
      tpu.vector_store %arg18[%c0_67, %c0_68], %135 {strides = array<i32>} : memref<16x128xf32, #tpu.memory_space<vmem>>, vector<8x128xf32>,
      %c8_69 = arith.constant 8 : index
      %c0_70 = arith.constant 0 : index
      %137 = vector.load %arg19[%c8_69, %c0_70] : memref<16x128xf32, #tpu.memory_space<vmem>>, vector<8x128xf32>
      %c0_71 = arith.constant 0 : index
      %c0_72 = arith.constant 0 : index
      %138 = vector.load %arg19[%c0_71, %c0_72] : memref<16x128xf32, #tpu.memory_space<vmem>>, vector<8x128xf32>
      tpu.vector_store %arg19[%c0_71, %c0_72], %137 {strides = array<i32>} : memref<16x128xf32, #tpu.memory_space<vmem>>, vector<8x128xf32>,
    } else {
    }
    %c0 = arith.constant 0 : index
    %c0_3 = arith.constant 0 : index
    %c0_4 = arith.constant 0 : index
    %6 = vector.load %arg2[%c0, %c0_3, %c0_4] : memref<1x8x128xf32, #tpu.memory_space<vmem>>, vector<1x8x128xf32>
    %7 = vector.shape_cast %6 : vector<1x8x128xf32> to vector<8x128xf32>
    %8 = arith.mulf %7, %7 : vector<8x128xf32>
    %cst = arith.constant dense<0.000000e+00> : vector<8xf32>
    %9 = vector.multi_reduction <add>, %8, %cst [1] : vector<8x128xf32> to vector<8xf32>
    %10 = vector.shape_cast %9 : vector<8xf32> to vector<8x1xf32>
    %cst_5 = arith.constant 1.280000e+02 : f32
    %11 = vector.broadcast %cst_5 : f32 to vector<8x1xf32>
    %12 = arith.divf %10, %11 : vector<8x1xf32>
    %cst_6 = arith.constant 9.99999997E-7 : f32
    %13 = vector.broadcast %cst_6 : f32 to vector<8x1xf32>
    %14 = arith.addf %12, %13 : vector<8x1xf32>
    %15 = math.rsqrt %14 : vector<8x1xf32>
    %16 = vector.broadcast %15 : vector<8x1xf32> to vector<8x128xf32>
    %17 = arith.mulf %7, %16 : vector<8x128xf32>
    %c0_7 = arith.constant 0 : index
    %c0_8 = arith.constant 0 : index
    %18 = vector.load %arg9[%c0_7, %c0_8] : memref<1x128xf32, #tpu.memory_space<vmem>>, vector<1x128xf32>
    %19 = vector.broadcast %18 : vector<1x128xf32> to vector<8x128xf32>
    %20 = arith.mulf %17, %19 : vector<8x128xf32>
    %21 = arith.truncf %20 : vector<8x128xf32> to vector<8x128xbf16>
    %c0_9 = arith.constant 0 : index
    %c0_10 = arith.constant 0 : index
    %22 = vector.load %arg3[%c0_9, %c0_10] : memref<128x128xbf16, #tpu.memory_space<vmem>>, vector<128x128xbf16>
    %cst_11 = arith.constant dense<0.000000e+00> : vector<8x128xf32>
    %23 = tpu.matmul %21, %22, %cst_11 {dimension_numbers = #tpu.dot_dimension_numbers<[1], [0], [0], [1], [0, 0, 1, 1], [], []>} : vector<8x128xbf16>, vector<128x128xbf16>, vector<8x128xf32> -> vector<8x128xf32>
    %c0_12 = arith.constant 0 : index
    %c0_13 = arith.constant 0 : index
    %24 = vector.load %arg4[%c0_12, %c0_13] : memref<128x128xbf16, #tpu.memory_space<vmem>>, vector<128x128xbf16>
    %cst_14 = arith.constant dense<0.000000e+00> : vector<8x128xf32>
    %25 = tpu.matmul %21, %24, %cst_14 {dimension_numbers = #tpu.dot_dimension_numbers<[1], [0], [0], [1], [0, 0, 1, 1], [], []>} : vector<8x128xbf16>, vector<128x128xbf16>, vector<8x128xf32> -> vector<8x128xf32>
    %c0_15 = arith.constant 0 : index
    %c0_16 = arith.constant 0 : index
    %26 = vector.load %arg5[%c0_15, %c0_16] : memref<128x128xbf16, #tpu.memory_space<vmem>>, vector<128x128xbf16>
    %cst_17 = arith.constant dense<0.000000e+00> : vector<8x128xf32>
    %27 = tpu.matmul %21, %26, %cst_17 {dimension_numbers = #tpu.dot_dimension_numbers<[1], [0], [0], [1], [0, 0, 1, 1], [], []>} : vector<8x128xbf16>, vector<128x128xbf16>, vector<8x128xf32> -> vector<8x128xf32>
    %c8 = arith.constant 8 : index
    %c0_18 = arith.constant 0 : index
    %28 = vector.load %arg18[%c8, %c0_18] : memref<16x128xf32, #tpu.memory_space<vmem>>, vector<8x128xf32>
    tpu.vector_store %arg18[%c8, %c0_18], %25 {strides = array<i32>} : memref<16x128xf32, #tpu.memory_space<vmem>>, vector<8x128xf32>,
    %c8_19 = arith.constant 8 : index
    %c0_20 = arith.constant 0 : index
    %29 = vector.load %arg19[%c8_19, %c0_20] : memref<16x128xf32, #tpu.memory_space<vmem>>, vector<8x128xf32>
    tpu.vector_store %arg19[%c8_19, %c0_20], %27 {strides = array<i32>} : memref<16x128xf32, #tpu.memory_space<vmem>>, vector<8x128xf32>,
    %c0_21 = arith.constant 0 : index
    %c0_22 = arith.constant 0 : index
    %30 = vector.load %arg15[%c0_21, %c0_22] : memref<128x4xbf16, #tpu.memory_space<vmem>>, vector<128x4xbf16>
    %c0_23 = arith.constant 0 : index
    %c0_24 = arith.constant 0 : index
    %31 = vector.load %arg16[%c0_23, %c0_24] : memref<4x128xbf16, #tpu.memory_space<vmem>>, vector<4x128xbf16>
    %c5 = arith.constant 5 : index
    %c0_25 = arith.constant 0 : index
    %32 = vector.load %arg18[%c5, %c0_25] : memref<16x128xf32, #tpu.memory_space<vmem>>, vector<8x128xf32>
    %33 = arith.mulf %23, %32 : vector<8x128xf32>
    %34 = arith.truncf %33 : vector<8x128xf32> to vector<8x128xbf16>
    %c6 = arith.constant 6 : index
    %c0_26 = arith.constant 0 : index
    %35 = vector.load %arg18[%c6, %c0_26] : memref<16x128xf32, #tpu.memory_space<vmem>>, vector<8x128xf32>
    %36 = arith.mulf %23, %35 : vector<8x128xf32>
    %37 = arith.truncf %36 : vector<8x128xf32> to vector<8x128xbf16>
    %c7 = arith.constant 7 : index
    %c0_27 = arith.constant 0 : index
    %38 = vector.load %arg18[%c7, %c0_27] : memref<16x128xf32, #tpu.memory_space<vmem>>, vector<8x128xf32>
    %39 = arith.mulf %23, %38 : vector<8x128xf32>
    %40 = arith.truncf %39 : vector<8x128xf32> to vector<8x128xbf16>
    %c8_28 = arith.constant 8 : index
    %c0_29 = arith.constant 0 : index
    %41 = vector.load %arg18[%c8_28, %c0_29] : memref<16x128xf32, #tpu.memory_space<vmem>>, vector<8x128xf32>
    %42 = arith.mulf %23, %41 : vector<8x128xf32>
    %43 = arith.truncf %42 : vector<8x128xf32> to vector<8x128xbf16>
    %44 = tpu.concatenate %34, %37, %40, %43 in 0 : vector<8x128xbf16>, vector<8x128xbf16>, vector<8x128xbf16>, vector<8x128xbf16> -> vector<32x128xbf16>
    %cst_30 = arith.constant dense<0.000000e+00> : vector<32x4xf32>
    %45 = tpu.matmul %44, %30, %cst_30 {dimension_numbers = #tpu.dot_dimension_numbers<[1], [0], [0], [1], [0, 0, 1, 1], [], []>} : vector<32x128xbf16>, vector<128x4xbf16>, vector<32x4xf32> -> vector<32x4xf32>
    %cst_31 = arith.constant 0.176776692 : f32
    %46 = vector.broadcast %cst_31 : f32 to vector<32x4xf32>
    %47 = arith.mulf %45, %46 : vector<32x4xf32>
    %48 = vector.extract_strided_slice %47 {offsets = [0, 0], sizes = [8, 4], strides = [1, 1]} : vector<32x4xf32> to vector<8x4xf32>
    %49 = vector.extract_strided_slice %47 {offsets = [8, 0], sizes = [8, 4], strides = [1, 1]} : vector<32x4xf32> to vector<8x4xf32>
    %50 = vector.extract_strided_slice %47 {offsets = [16, 0], sizes = [8, 4], strides = [1, 1]} : vector<32x4xf32> to vector<8x4xf32>
    %51 = vector.extract_strided_slice %47 {offsets = [24, 0], sizes = [8, 4], strides = [1, 1]} : vector<32x4xf32> to vector<8x4xf32>
    %52 = arith.maximumf %48, %49 : vector<8x4xf32>
    %53 = arith.maximumf %52, %50 : vector<8x4xf32>
    %54 = arith.maximumf %53, %51 : vector<8x4xf32>
    %55 = arith.subf %48, %54 : vector<8x4xf32>
    %56 = math.exp %55 : vector<8x4xf32>
    %57 = arith.subf %49, %54 : vector<8x4xf32>
    %58 = math.exp %57 : vector<8x4xf32>
    %59 = arith.subf %50, %54 : vector<8x4xf32>
    %60 = math.exp %59 : vector<8x4xf32>
    %61 = arith.subf %51, %54 : vector<8x4xf32>
    %62 = math.exp %61 : vector<8x4xf32>
    %63 = arith.addf %56, %58 : vector<8x4xf32>
    %64 = arith.addf %63, %60 : vector<8x4xf32>
    %65 = arith.addf %64, %62 : vector<8x4xf32>
    %66 = arith.truncf %56 : vector<8x4xf32> to vector<8x4xbf16>
    %67 = arith.truncf %58 : vector<8x4xf32> to vector<8x4xbf16>
    %68 = arith.truncf %60 : vector<8x4xf32> to vector<8x4xbf16>
    %69 = arith.truncf %62 : vector<8x4xf32> to vector<8x4xbf16>
    %70 = tpu.concatenate %66, %67, %68, %69 in 0 : vector<8x4xbf16>, vector<8x4xbf16>, vector<8x4xbf16>, vector<8x4xbf16> -> vector<32x4xbf16>
    %cst_32 = arith.constant dense<0.000000e+00> : vector<32x128xf32>
    %71 = tpu.matmul %70, %31, %cst_32 {dimension_numbers = #tpu.dot_dimension_numbers<[1], [0], [0], [1], [0, 0, 1, 1], [], []>} : vector<32x4xbf16>, vector<4x128xbf16>, vector<32x128xf32> -> vector<32x128xf32>
    %72 = vector.extract_strided_slice %71 {offsets = [0, 0], sizes = [8, 128], strides = [1, 1]} : vector<32x128xf32> to vector<8x128xf32>
    %c5_33 = arith.constant 5 : index
    %c0_34 = arith.constant 0 : index
    %73 = vector.load %arg19[%c5_33, %c0_34] : memref<16x128xf32, #tpu.memory_space<vmem>>, vector<8x128xf32>
    %74 = arith.mulf %72, %73 : vector<8x128xf32>
    %75 = vector.extract_strided_slice %71 {offsets = [8, 0], sizes = [8, 128], strides = [1, 1]} : vector<32x128xf32> to vector<8x128xf32>
    %c6_35 = arith.constant 6 : index
    %c0_36 = arith.constant 0 : index
    %76 = vector.load %arg19[%c6_35, %c0_36] : memref<16x128xf32, #tpu.memory_space<vmem>>, vector<8x128xf32>
    %77 = arith.mulf %75, %76 : vector<8x128xf32>
    %78 = arith.addf %74, %77 : vector<8x128xf32>
    %79 = vector.extract_strided_slice %71 {offsets = [16, 0], sizes = [8, 128], strides = [1, 1]} : vector<32x128xf32> to vector<8x128xf32>
    %c7_37 = arith.constant 7 : index
    %c0_38 = arith.constant 0 : index
    %80 = vector.load %arg19[%c7_37, %c0_38] : memref<16x128xf32, #tpu.memory_space<vmem>>, vector<8x128xf32>
    %81 = arith.mulf %79, %80 : vector<8x128xf32>
    %82 = arith.addf %78, %81 : vector<8x128xf32>
    %83 = vector.extract_strided_slice %71 {offsets = [24, 0], sizes = [8, 128], strides = [1, 1]} : vector<32x128xf32> to vector<8x128xf32>
    %c8_39 = arith.constant 8 : index
    %c0_40 = arith.constant 0 : index
    %84 = vector.load %arg19[%c8_39, %c0_40] : memref<16x128xf32, #tpu.memory_space<vmem>>, vector<8x128xf32>
    %85 = arith.mulf %83, %84 : vector<8x128xf32>
    %86 = arith.addf %82, %85 : vector<8x128xf32>
    %87 = tpu.reciprocal %65 {approx = true} : vector<8x4xf32> -> vector<8x4xf32>
    %88 = arith.truncf %87 : vector<8x4xf32> to vector<8x4xbf16>
    %cst_41 = arith.constant dense<0.000000e+00> : vector<8x128xf32>
    %89 = tpu.matmul %88, %31, %cst_41 {dimension_numbers = #tpu.dot_dimension_numbers<[1], [0], [0], [1], [0, 0, 1, 1], [], []>} : vector<8x4xbf16>, vector<4x128xbf16>, vector<8x128xf32> -> vector<8x128xf32>
    %90 = arith.mulf %86, %89 : vector<8x128xf32>
    %91 = arith.truncf %90 : vector<8x128xf32> to vector<8x128xbf16>
    %c0_42 = arith.constant 0 : index
    %c0_43 = arith.constant 0 : index
    %92 = vector.load %arg6[%c0_42, %c0_43] : memref<128x128xbf16, #tpu.memory_space<vmem>>, vector<128x128xbf16>
    %cst_44 = arith.constant dense<0.000000e+00> : vector<8x128xf32>
    %93 = tpu.matmul %91, %92, %cst_44 {dimension_numbers = #tpu.dot_dimension_numbers<[1], [0], [0], [1], [0, 0, 1, 1], [], []>} : vector<8x128xbf16>, vector<128x128xbf16>, vector<8x128xf32> -> vector<8x128xf32>
    %94 = arith.addf %93, %7 : vector<8x128xf32>
    %95 = arith.mulf %94, %94 : vector<8x128xf32>
    %cst_45 = arith.constant dense<0.000000e+00> : vector<8xf32>
    %96 = vector.multi_reduction <add>, %95, %cst_45 [1] : vector<8x128xf32> to vector<8xf32>
    %97 = vector.shape_cast %96 : vector<8xf32> to vector<8x1xf32>
    %cst_46 = arith.constant 1.280000e+02 : f32
    %98 = vector.broadcast %cst_46 : f32 to vector<8x1xf32>
    %99 = arith.divf %97, %98 : vector<8x1xf32>
    %cst_47 = arith.constant 9.99999997E-7 : f32
    %100 = vector.broadcast %cst_47 : f32 to vector<8x1xf32>
    %101 = arith.addf %99, %100 : vector<8x1xf32>
    %102 = math.rsqrt %101 : vector<8x1xf32>
    %103 = vector.broadcast %102 : vector<8x1xf32> to vector<8x128xf32>
    %104 = arith.mulf %94, %103 : vector<8x128xf32>
    %c0_48 = arith.constant 0 : index
    %c0_49 = arith.constant 0 : index
    %105 = vector.load %arg10[%c0_48, %c0_49] : memref<1x128xf32, #tpu.memory_space<vmem>>, vector<1x128xf32>
    %106 = vector.broadcast %105 : vector<1x128xf32> to vector<8x128xf32>
    %107 = arith.mulf %104, %106 : vector<8x128xf32>
    %108 = arith.truncf %107 : vector<8x128xf32> to vector<8x128xbf16>
    %cst_50 = arith.constant 0.000000e+00 : f32
    %109 = vector.broadcast %cst_50 : f32 to vector<8x128xf32>
    %c0_51 = arith.constant 0 : index
    %c0_52 = arith.constant 0 : index
    %110 = vector.load %arg11[%c0_51, %c0_52] : memref<128x512xbf16, #tpu.memory_space<vmem>>, vector<128x512xbf16>
    %c0_53 = arith.constant 0 : index
    %c0_54 = arith.constant 0 : index
    %111 = vector.load %arg12[%c0_53, %c0_54] : memref<1x512xf32, #tpu.memory_space<vmem>>, vector<1x512xf32>
    %cst_55 = arith.constant dense<0.000000e+00> : vector<8x512xf32>
    %112 = tpu.matmul %108, %110, %cst_55 {dimension_numbers = #tpu.dot_dimension_numbers<[1], [0], [0], [1], [0, 0, 1, 1], [], []>} : vector<8x128xbf16>, vector<128x512xbf16>, vector<8x512xf32> -> vector<8x512xf32>
    %113 = vector.broadcast %111 : vector<1x512xf32> to vector<8x512xf32>
    %114 = arith.addf %112, %113 : vector<8x512xf32>
    %115 = vector.extract_strided_slice %114 {offsets = [0, 0], sizes = [8, 256], strides = [1, 1]} : vector<8x512xf32> to vector<8x256xf32>
    %116 = vector.extract_strided_slice %114 {offsets = [0, 256], sizes = [8, 256], strides = [1, 1]} : vector<8x512xf32> to vector<8x256xf32>
    %117 = arith.negf %116 : vector<8x256xf32>
    %118 = math.exp %117 : vector<8x256xf32>
    %cst_56 = arith.constant 1.000000e+00 : f32
    %119 = vector.broadcast %cst_56 : f32 to vector<8x256xf32>
    %120 = arith.addf %119, %118 : vector<8x256xf32>
    %121 = arith.divf %119, %120 : vector<8x256xf32>
    %122 = arith.mulf %116, %121 : vector<8x256xf32>
    %123 = arith.mulf %115, %122 : vector<8x256xf32>
    %124 = arith.truncf %123 : vector<8x256xf32> to vector<8x256xbf16>
    %c0_57 = arith.constant 0 : index
    %c0_58 = arith.constant 0 : index
    %125 = vector.load %arg13[%c0_57, %c0_58] : memref<256x128xbf16, #tpu.memory_space<vmem>>, vector<256x128xbf16>
    %cst_59 = arith.constant dense<0.000000e+00> : vector<8x128xf32>
    %126 = tpu.matmul %124, %125, %cst_59 {dimension_numbers = #tpu.dot_dimension_numbers<[1], [0], [0], [1], [0, 0, 1, 1], [], []>} : vector<8x256xbf16>, vector<256x128xbf16>, vector<8x128xf32> -> vector<8x128xf32>
    %127 = arith.addf %109, %126 : vector<8x128xf32>
    %c0_60 = arith.constant 0 : index
    %c0_61 = arith.constant 0 : index
    %128 = vector.load %arg14[%c0_60, %c0_61] : memref<1x128xf32, #tpu.memory_space<vmem>>, vector<1x128xf32>
    %129 = vector.broadcast %128 : vector<1x128xf32> to vector<8x128xf32>
    %130 = arith.addf %127, %129 : vector<8x128xf32>
    %131 = arith.addf %130, %94 : vector<8x128xf32>
    %c0_62 = arith.constant 0 : index
    %c0_63 = arith.constant 0 : index
    %c0_64 = arith.constant 0 : index
    %132 = vector.load %arg17[%c0_62, %c0_63, %c0_64] : memref<1x8x128xf32, #tpu.memory_space<vmem>>, vector<1x8x128xf32>
    %133 = vector.shape_cast %132 : vector<1x8x128xf32> to vector<8x128xf32>
    %134 = vector.shape_cast %131 : vector<8x128xf32> to vector<1x8x128xf32>
    tpu.vector_store %arg17[%c0_62, %c0_63, %c0_64], %134 {strides = array<i32>} : memref<1x8x128xf32, #tpu.memory_space<vmem>>, vector<1x8x128xf32>,
    return
  }
  func.func @transform_0(%arg0: i32, %arg1: i32) -> (i32, i32, i32) {
    %c0_i32 = arith.constant 0 : i32
    %c0_i32_0 = arith.constant 0 : i32
    return %arg0, %arg1, %c0_i32 : i32, i32, i32
  }
  func.func @transform_1(%arg0: i32, %arg1: i32) -> (i32, i32) {
    %c0_i32 = arith.constant 0 : i32
    %c0_i32_0 = arith.constant 0 : i32
    %c0_i32_1 = arith.constant 0 : i32
    return %c0_i32, %c0_i32_0 : i32, i32
  }
  func.func @transform_2(%arg0: i32, %arg1: i32) -> (i32, i32) {
    %c0_i32 = arith.constant 0 : i32
    %c0_i32_0 = arith.constant 0 : i32
    %c0_i32_1 = arith.constant 0 : i32
    return %c0_i32, %c0_i32_0 : i32, i32
  }
  func.func @transform_3(%arg0: i32, %arg1: i32) -> (i32, i32) {
    %c0_i32 = arith.constant 0 : i32
    %c0_i32_0 = arith.constant 0 : i32
    %c0_i32_1 = arith.constant 0 : i32
    return %c0_i32, %c0_i32_0 : i32, i32
  }
  func.func @transform_4(%arg0: i32, %arg1: i32) -> (i32, i32) {
    %c0_i32 = arith.constant 0 : i32
    %c0_i32_0 = arith.constant 0 : i32
    %c0_i32_1 = arith.constant 0 : i32
    return %c0_i32, %c0_i32_0 : i32, i32
  }
  func.func @transform_5(%arg0: i32, %arg1: i32) -> (i32, i32) {
    %c0_i32 = arith.constant 0 : i32
    %c0_i32_0 = arith.constant 0 : i32
    %c0_i32_1 = arith.constant 0 : i32
    return %c0_i32, %c0_i32_0 : i32, i32
  }
  func.func @transform_6(%arg0: i32, %arg1: i32) -> (i32, i32) {
    %c0_i32 = arith.constant 0 : i32
    %c0_i32_0 = arith.constant 0 : i32
    %c0_i32_1 = arith.constant 0 : i32
    return %c0_i32, %c0_i32_0 : i32, i32
  }
  func.func @transform_7(%arg0: i32, %arg1: i32) -> (i32, i32) {
    %c0_i32 = arith.constant 0 : i32
    %c0_i32_0 = arith.constant 0 : i32
    %c0_i32_1 = arith.constant 0 : i32
    return %c0_i32, %c0_i32_0 : i32, i32
  }
  func.func @transform_8(%arg0: i32, %arg1: i32) -> (i32, i32) {
    %c0_i32 = arith.constant 0 : i32
    %c0_i32_0 = arith.constant 0 : i32
    %c0_i32_1 = arith.constant 0 : i32
    return %c0_i32, %c0_i32_0 : i32, i32
  }
  func.func @transform_9(%arg0: i32, %arg1: i32) -> (i32, i32) {
    %c0_i32 = arith.constant 0 : i32
    %c0_i32_0 = arith.constant 0 : i32
    %c0_i32_1 = arith.constant 0 : i32
    return %c0_i32, %c0_i32_0 : i32, i32
  }
  func.func @transform_10(%arg0: i32, %arg1: i32) -> (i32, i32) {
    %c0_i32 = arith.constant 0 : i32
    %c0_i32_0 = arith.constant 0 : i32
    %c0_i32_1 = arith.constant 0 : i32
    return %c0_i32, %c0_i32_0 : i32, i32
  }
  func.func @transform_11(%arg0: i32, %arg1: i32) -> (i32, i32) {
    %c0_i32 = arith.constant 0 : i32
    %c0_i32_0 = arith.constant 0 : i32
    %c0_i32_1 = arith.constant 0 : i32
    return %c0_i32, %c0_i32_0 : i32, i32
  }
  func.func @transform_12(%arg0: i32, %arg1: i32) -> (i32, i32) {
    %c0_i32 = arith.constant 0 : i32
    %c0_i32_0 = arith.constant 0 : i32
    %c0_i32_1 = arith.constant 0 : i32
    return %c0_i32, %c0_i32_0 : i32, i32
  }
  func.func @transform_13(%arg0: i32, %arg1: i32) -> (i32, i32) {
    %c0_i32 = arith.constant 0 : i32
    %c0_i32_0 = arith.constant 0 : i32
    %c0_i32_1 = arith.constant 0 : i32
    return %c0_i32, %c0_i32_0 : i32, i32
  }
  func.func @transform_14(%arg0: i32, %arg1: i32) -> (i32, i32) {
    %c0_i32 = arith.constant 0 : i32
    %c0_i32_0 = arith.constant 0 : i32
    %c0_i32_1 = arith.constant 0 : i32
    return %c0_i32, %c0_i32_0 : i32, i32
  }
  func.func @transform_15(%arg0: i32, %arg1: i32) -> (i32, i32, i32) {
    %c0_i32 = arith.constant 0 : i32
    %c0_i32_0 = arith.constant 0 : i32
    return %arg0, %arg1, %c0_i32 : i32, i32, i32
  }
}

module attributes {stable_mosaic.version = 11 : i64} {
  func.func @kernel(%arg0: i32, %arg1: i32, %arg2: memref<1x8x128xf32, #tpu.memory_space<vmem>>, %arg3: memref<128x128xbf16, #tpu.memory_space<vmem>>, %arg4: memref<128x128xbf16, #tpu.memory_space<vmem>>, %arg5: memref<128x128xbf16, #tpu.memory_space<vmem>>, %arg6: memref<128x128xbf16, #tpu.memory_space<vmem>>, %arg7: memref<8x128xf32, #tpu.memory_space<vmem>>, %arg8: memref<8x128xf32, #tpu.memory_space<vmem>>, %arg9: memref<1x128xf32, #tpu.memory_space<vmem>>, %arg10: memref<1x128xf32, #tpu.memory_space<vmem>>, %arg11: memref<128x512xbf16, #tpu.memory_space<vmem>>, %arg12: memref<1x512xf32, #tpu.memory_space<vmem>>, %arg13: memref<256x128xbf16, #tpu.memory_space<vmem>>, %arg14: memref<1x128xf32, #tpu.memory_space<vmem>>, %arg15: memref<128x4xbf16, #tpu.memory_space<vmem>>, %arg16: memref<4x128xbf16, #tpu.memory_space<vmem>>, %arg17: memref<1x8x128xf32, #tpu.memory_space<vmem>>, %arg18: memref<16x128xf32, #tpu.memory_space<vmem>>, %arg19: memref<16x128xf32, #tpu.memory_space<vmem>>) attributes {dimension_semantics = [#tpu.dimension_semantics<parallel>, #tpu.dimension_semantics<arbitrary>], iteration_bounds = array<i64: 2, 2>, scalar_prefetch = 0 : i64, scratch_operands = 2 : i64, tpu.core_type = #tpu.core_type<tc>, window_params = [{transform_indices = @transform_0, window_bounds = array<i64: 1, 8, 128>}, {pipeline_mode = #tpu.pipeline_mode<synchronous>, transform_indices = @transform_1, window_bounds = array<i64: 128, 128>}, {pipeline_mode = #tpu.pipeline_mode<synchronous>, transform_indices = @transform_2, window_bounds = array<i64: 128, 128>}, {pipeline_mode = #tpu.pipeline_mode<synchronous>, transform_indices = @transform_3, window_bounds = array<i64: 128, 128>}, {pipeline_mode = #tpu.pipeline_mode<synchronous>, transform_indices = @transform_4, window_bounds = array<i64: 128, 128>}, {pipeline_mode = #tpu.pipeline_mode<synchronous>, transform_indices = @transform_5, window_bounds = array<i64: 8, 128>}, {pipeline_mode = #tpu.pipeline_mode<synchronous>, transform_indices = @transform_6, window_bounds = array<i64: 8, 128>}, {pipeline_mode = #tpu.pipeline_mode<synchronous>, transform_indices = @transform_7, window_bounds = array<i64: 1, 128>}, {pipeline_mode = #tpu.pipeline_mode<synchronous>, transform_indices = @transform_8, window_bounds = array<i64: 1, 128>}, {pipeline_mode = #tpu.pipeline_mode<synchronous>, transform_indices = @transform_9, window_bounds = array<i64: 128, 512>}, {pipeline_mode = #tpu.pipeline_mode<synchronous>, transform_indices = @transform_10, window_bounds = array<i64: 1, 512>}, {pipeline_mode = #tpu.pipeline_mode<synchronous>, transform_indices = @transform_11, window_bounds = array<i64: 256, 128>}, {pipeline_mode = #tpu.pipeline_mode<synchronous>, transform_indices = @transform_12, window_bounds = array<i64: 1, 128>}, {pipeline_mode = #tpu.pipeline_mode<synchronous>, transform_indices = @transform_13, window_bounds = array<i64: 128, 4>}, {pipeline_mode = #tpu.pipeline_mode<synchronous>, transform_indices = @transform_14, window_bounds = array<i64: 4, 128>}, {transform_indices = @transform_15, window_bounds = array<i64: 1, 8, 128>}]} {
    %c0_i32 = arith.constant 0 : i32
    %0 = arith.cmpi eq, %arg1, %c0_i32 : i32
    %1 = arith.extui %0 : i1 to i32
    %c0_i32_0 = arith.constant 0 : i32
    %2 = arith.cmpi ne, %1, %c0_i32_0 : i32
    scf.if %2 {
      %c0_65 = arith.constant 0 : index
      %c0_66 = arith.constant 0 : index
      %135 = vector.load %arg7[%c0_65, %c0_66] : memref<8x128xf32, #tpu.memory_space<vmem>>, vector<8x128xf32>
      %c0_67 = arith.constant 0 : index
      %c0_68 = arith.constant 0 : index
      %136 = vector.load %arg18[%c0_67, %c0_68] : memref<16x128xf32, #tpu.memory_space<vmem>>, vector<8x128xf32>
      tpu.vector_store %arg18[%c0_67, %c0_68], %135 {strides = array<i32>} : memref<16x128xf32, #tpu.memory_space<vmem>>, vector<8x128xf32>,
      %c0_69 = arith.constant 0 : index
      %c0_70 = arith.constant 0 : index
      %137 = vector.load %arg8[%c0_69, %c0_70] : memref<8x128xf32, #tpu.memory_space<vmem>>, vector<8x128xf32>
      %c0_71 = arith.constant 0 : index
      %c0_72 = arith.constant 0 : index
      %138 = vector.load %arg19[%c0_71, %c0_72] : memref<16x128xf32, #tpu.memory_space<vmem>>, vector<8x128xf32>
      tpu.vector_store %arg19[%c0_71, %c0_72], %137 {strides = array<i32>} : memref<16x128xf32, #tpu.memory_space<vmem>>, vector<8x128xf32>,
    } else {
    }
    %c0_i32_1 = arith.constant 0 : i32
    %3 = arith.cmpi ne, %arg1, %c0_i32_1 : i32
    %4 = arith.extui %3 : i1 to i32
    %c0_i32_2 = arith.constant 0 : i32
    %5 = arith.cmpi ne, %4, %c0_i32_2 : i32
    scf.if %5 {
      %c8_65 = arith.constant 8 : index
      %c0_66 = arith.constant 0 : index
      %135 = vector.load %arg18[%c8_65, %c0_66] : memref<16x128xf32, #tpu.memory_space<vmem>>, vector<8x128xf32>
      %c0_67 = arith.constant 0 : index
      %c0_68 = arith.constant 0 : index
      %136 = vector.load %arg18[%c0_67, %c0_68] : memref<16x128xf32, #tpu.memory_space<vmem>>, vector<8x128xf32>
      tpu.vector_store %arg18[%c0_67, %c0_68], %135 {strides = array<i32>} : memref<16x128xf32, #tpu.memory_space<vmem>>, vector<8x128xf32>,
      %c8_69 = arith.constant 8 : index
      %c0_70 = arith.constant 0 : index
      %137 = vector.load %arg19[%c8_69, %c0_70] : memref<16x128xf32, #tpu.memory_space<vmem>>, vector<8x128xf32>
      %c0_71 = arith.constant 0 : index
      %c0_72 = arith.constant 0 : index
      %138 = vector.load %arg19[%c0_71, %c0_72] : memref<16x128xf32, #tpu.memory_space<vmem>>, vector<8x128xf32>
      tpu.vector_store %arg19[%c0_71, %c0_72], %137 {strides = array<i32>} : memref<16x128xf32, #tpu.memory_space<vmem>>, vector<8x128xf32>,
    } else {
    }
    %c0 = arith.constant 0 : index
    %c0_3 = arith.constant 0 : index
    %c0_4 = arith.constant 0 : index
    %6 = vector.load %arg2[%c0, %c0_3, %c0_4] : memref<1x8x128xf32, #tpu.memory_space<vmem>>, vector<1x8x128xf32>
    %7 = vector.shape_cast %6 : vector<1x8x128xf32> to vector<8x128xf32>
    %8 = arith.mulf %7, %7 : vector<8x128xf32>
    %cst = arith.constant dense<0.000000e+00> : vector<8xf32>
    %9 = vector.multi_reduction <add>, %8, %cst [1] : vector<8x128xf32> to vector<8xf32>
    %10 = vector.shape_cast %9 : vector<8xf32> to vector<8x1xf32>
    %cst_5 = arith.constant 1.280000e+02 : f32
    %11 = vector.broadcast %cst_5 : f32 to vector<8x1xf32>
    %12 = arith.divf %10, %11 : vector<8x1xf32>
    %cst_6 = arith.constant 9.99999997E-7 : f32
    %13 = vector.broadcast %cst_6 : f32 to vector<8x1xf32>
    %14 = arith.addf %12, %13 : vector<8x1xf32>
    %15 = math.rsqrt %14 : vector<8x1xf32>
    %16 = vector.broadcast %15 : vector<8x1xf32> to vector<8x128xf32>
    %17 = arith.mulf %7, %16 : vector<8x128xf32>
    %c0_7 = arith.constant 0 : index
    %c0_8 = arith.constant 0 : index
    %18 = vector.load %arg9[%c0_7, %c0_8] : memref<1x128xf32, #tpu.memory_space<vmem>>, vector<1x128xf32>
    %19 = vector.broadcast %18 : vector<1x128xf32> to vector<8x128xf32>
    %20 = arith.mulf %17, %19 : vector<8x128xf32>
    %21 = arith.truncf %20 : vector<8x128xf32> to vector<8x128xbf16>
    %c0_9 = arith.constant 0 : index
    %c0_10 = arith.constant 0 : index
    %22 = vector.load %arg3[%c0_9, %c0_10] : memref<128x128xbf16, #tpu.memory_space<vmem>>, vector<128x128xbf16>
    %cst_11 = arith.constant dense<0.000000e+00> : vector<8x128xf32>
    %23 = tpu.matmul %21, %22, %cst_11 {dimension_numbers = #tpu.dot_dimension_numbers<[1], [0], [0], [1], [0, 0, 1, 1], [], []>} : vector<8x128xbf16>, vector<128x128xbf16>, vector<8x128xf32> -> vector<8x128xf32>
    %c0_12 = arith.constant 0 : index
    %c0_13 = arith.constant 0 : index
    %24 = vector.load %arg4[%c0_12, %c0_13] : memref<128x128xbf16, #tpu.memory_space<vmem>>, vector<128x128xbf16>
    %cst_14 = arith.constant dense<0.000000e+00> : vector<8x128xf32>
    %25 = tpu.matmul %21, %24, %cst_14 {dimension_numbers = #tpu.dot_dimension_numbers<[1], [0], [0], [1], [0, 0, 1, 1], [], []>} : vector<8x128xbf16>, vector<128x128xbf16>, vector<8x128xf32> -> vector<8x128xf32>
    %c0_15 = arith.constant 0 : index
    %c0_16 = arith.constant 0 : index
    %26 = vector.load %arg5[%c0_15, %c0_16] : memref<128x128xbf16, #tpu.memory_space<vmem>>, vector<128x128xbf16>
    %cst_17 = arith.constant dense<0.000000e+00> : vector<8x128xf32>
    %27 = tpu.matmul %21, %26, %cst_17 {dimension_numbers = #tpu.dot_dimension_numbers<[1], [0], [0], [1], [0, 0, 1, 1], [], []>} : vector<8x128xbf16>, vector<128x128xbf16>, vector<8x128xf32> -> vector<8x128xf32>
    %c8 = arith.constant 8 : index
    %c0_18 = arith.constant 0 : index
    %28 = vector.load %arg18[%c8, %c0_18] : memref<16x128xf32, #tpu.memory_space<vmem>>, vector<8x128xf32>
    tpu.vector_store %arg18[%c8, %c0_18], %25 {strides = array<i32>} : memref<16x128xf32, #tpu.memory_space<vmem>>, vector<8x128xf32>,
    %c8_19 = arith.constant 8 : index
    %c0_20 = arith.constant 0 : index
    %29 = vector.load %arg19[%c8_19, %c0_20] : memref<16x128xf32, #tpu.memory_space<vmem>>, vector<8x128xf32>
    tpu.vector_store %arg19[%c8_19, %c0_20], %27 {strides = array<i32>} : memref<16x128xf32, #tpu.memory_space<vmem>>, vector<8x128xf32>,
    %c0_21 = arith.constant 0 : index
    %c0_22 = arith.constant 0 : index
    %30 = vector.load %arg15[%c0_21, %c0_22] : memref<128x4xbf16, #tpu.memory_space<vmem>>, vector<128x4xbf16>
    %c0_23 = arith.constant 0 : index
    %c0_24 = arith.constant 0 : index
    %31 = vector.load %arg16[%c0_23, %c0_24] : memref<4x128xbf16, #tpu.memory_space<vmem>>, vector<4x128xbf16>
    %c5 = arith.constant 5 : index
    %c0_25 = arith.constant 0 : index
    %32 = vector.load %arg18[%c5, %c0_25] : memref<16x128xf32, #tpu.memory_space<vmem>>, vector<8x128xf32>
    %33 = arith.mulf %23, %32 : vector<8x128xf32>
    %34 = arith.truncf %33 : vector<8x128xf32> to vector<8x128xbf16>
    %c6 = arith.constant 6 : index
    %c0_26 = arith.constant 0 : index
    %35 = vector.load %arg18[%c6, %c0_26] : memref<16x128xf32, #tpu.memory_space<vmem>>, vector<8x128xf32>
    %36 = arith.mulf %23, %35 : vector<8x128xf32>
    %37 = arith.truncf %36 : vector<8x128xf32> to vector<8x128xbf16>
    %c7 = arith.constant 7 : index
    %c0_27 = arith.constant 0 : index
    %38 = vector.load %arg18[%c7, %c0_27] : memref<16x128xf32, #tpu.memory_space<vmem>>, vector<8x128xf32>
    %39 = arith.mulf %23, %38 : vector<8x128xf32>
    %40 = arith.truncf %39 : vector<8x128xf32> to vector<8x128xbf16>
    %c8_28 = arith.constant 8 : index
    %c0_29 = arith.constant 0 : index
    %41 = vector.load %arg18[%c8_28, %c0_29] : memref<16x128xf32, #tpu.memory_space<vmem>>, vector<8x128xf32>
    %42 = arith.mulf %23, %41 : vector<8x128xf32>
    %43 = arith.truncf %42 : vector<8x128xf32> to vector<8x128xbf16>
    %44 = tpu.concatenate %34, %37, %40, %43 in 0 : vector<8x128xbf16>, vector<8x128xbf16>, vector<8x128xbf16>, vector<8x128xbf16> -> vector<32x128xbf16>
    %cst_30 = arith.constant dense<0.000000e+00> : vector<32x4xf32>
    %45 = tpu.matmul %44, %30, %cst_30 {dimension_numbers = #tpu.dot_dimension_numbers<[1], [0], [0], [1], [0, 0, 1, 1], [], []>} : vector<32x128xbf16>, vector<128x4xbf16>, vector<32x4xf32> -> vector<32x4xf32>
    %cst_31 = arith.constant 0.176776692 : f32
    %46 = vector.broadcast %cst_31 : f32 to vector<32x4xf32>
    %47 = arith.mulf %45, %46 : vector<32x4xf32>
    %48 = vector.extract_strided_slice %47 {offsets = [0, 0], sizes = [8, 4], strides = [1, 1]} : vector<32x4xf32> to vector<8x4xf32>
    %49 = vector.extract_strided_slice %47 {offsets = [8, 0], sizes = [8, 4], strides = [1, 1]} : vector<32x4xf32> to vector<8x4xf32>
    %50 = vector.extract_strided_slice %47 {offsets = [16, 0], sizes = [8, 4], strides = [1, 1]} : vector<32x4xf32> to vector<8x4xf32>
    %51 = vector.extract_strided_slice %47 {offsets = [24, 0], sizes = [8, 4], strides = [1, 1]} : vector<32x4xf32> to vector<8x4xf32>
    %52 = arith.maximumf %48, %49 : vector<8x4xf32>
    %53 = arith.maximumf %52, %50 : vector<8x4xf32>
    %54 = arith.maximumf %53, %51 : vector<8x4xf32>
    %55 = arith.subf %48, %54 : vector<8x4xf32>
    %56 = math.exp %55 : vector<8x4xf32>
    %57 = arith.subf %49, %54 : vector<8x4xf32>
    %58 = math.exp %57 : vector<8x4xf32>
    %59 = arith.subf %50, %54 : vector<8x4xf32>
    %60 = math.exp %59 : vector<8x4xf32>
    %61 = arith.subf %51, %54 : vector<8x4xf32>
    %62 = math.exp %61 : vector<8x4xf32>
    %63 = arith.addf %56, %58 : vector<8x4xf32>
    %64 = arith.addf %63, %60 : vector<8x4xf32>
    %65 = arith.addf %64, %62 : vector<8x4xf32>
    %66 = arith.truncf %56 : vector<8x4xf32> to vector<8x4xbf16>
    %67 = arith.truncf %58 : vector<8x4xf32> to vector<8x4xbf16>
    %68 = arith.truncf %60 : vector<8x4xf32> to vector<8x4xbf16>
    %69 = arith.truncf %62 : vector<8x4xf32> to vector<8x4xbf16>
    %70 = tpu.concatenate %66, %67, %68, %69 in 0 : vector<8x4xbf16>, vector<8x4xbf16>, vector<8x4xbf16>, vector<8x4xbf16> -> vector<32x4xbf16>
    %cst_32 = arith.constant dense<0.000000e+00> : vector<32x128xf32>
    %71 = tpu.matmul %70, %31, %cst_32 {dimension_numbers = #tpu.dot_dimension_numbers<[1], [0], [0], [1], [0, 0, 1, 1], [], []>} : vector<32x4xbf16>, vector<4x128xbf16>, vector<32x128xf32> -> vector<32x128xf32>
    %72 = vector.extract_strided_slice %71 {offsets = [0, 0], sizes = [8, 128], strides = [1, 1]} : vector<32x128xf32> to vector<8x128xf32>
    %c5_33 = arith.constant 5 : index
    %c0_34 = arith.constant 0 : index
    %73 = vector.load %arg19[%c5_33, %c0_34] : memref<16x128xf32, #tpu.memory_space<vmem>>, vector<8x128xf32>
    %74 = arith.mulf %72, %73 : vector<8x128xf32>
    %75 = vector.extract_strided_slice %71 {offsets = [8, 0], sizes = [8, 128], strides = [1, 1]} : vector<32x128xf32> to vector<8x128xf32>
    %c6_35 = arith.constant 6 : index
    %c0_36 = arith.constant 0 : index
    %76 = vector.load %arg19[%c6_35, %c0_36] : memref<16x128xf32, #tpu.memory_space<vmem>>, vector<8x128xf32>
    %77 = arith.mulf %75, %76 : vector<8x128xf32>
    %78 = arith.addf %74, %77 : vector<8x128xf32>
    %79 = vector.extract_strided_slice %71 {offsets = [16, 0], sizes = [8, 128], strides = [1, 1]} : vector<32x128xf32> to vector<8x128xf32>
    %c7_37 = arith.constant 7 : index
    %c0_38 = arith.constant 0 : index
    %80 = vector.load %arg19[%c7_37, %c0_38] : memref<16x128xf32, #tpu.memory_space<vmem>>, vector<8x128xf32>
    %81 = arith.mulf %79, %80 : vector<8x128xf32>
    %82 = arith.addf %78, %81 : vector<8x128xf32>
    %83 = vector.extract_strided_slice %71 {offsets = [24, 0], sizes = [8, 128], strides = [1, 1]} : vector<32x128xf32> to vector<8x128xf32>
    %c8_39 = arith.constant 8 : index
    %c0_40 = arith.constant 0 : index
    %84 = vector.load %arg19[%c8_39, %c0_40] : memref<16x128xf32, #tpu.memory_space<vmem>>, vector<8x128xf32>
    %85 = arith.mulf %83, %84 : vector<8x128xf32>
    %86 = arith.addf %82, %85 : vector<8x128xf32>
    %87 = tpu.reciprocal %65 {approx = true} : vector<8x4xf32> -> vector<8x4xf32>
    %88 = arith.truncf %87 : vector<8x4xf32> to vector<8x4xbf16>
    %cst_41 = arith.constant dense<0.000000e+00> : vector<8x128xf32>
    %89 = tpu.matmul %88, %31, %cst_41 {dimension_numbers = #tpu.dot_dimension_numbers<[1], [0], [0], [1], [0, 0, 1, 1], [], []>} : vector<8x4xbf16>, vector<4x128xbf16>, vector<8x128xf32> -> vector<8x128xf32>
    %90 = arith.mulf %86, %89 : vector<8x128xf32>
    %91 = arith.truncf %90 : vector<8x128xf32> to vector<8x128xbf16>
    %c0_42 = arith.constant 0 : index
    %c0_43 = arith.constant 0 : index
    %92 = vector.load %arg6[%c0_42, %c0_43] : memref<128x128xbf16, #tpu.memory_space<vmem>>, vector<128x128xbf16>
    %cst_44 = arith.constant dense<0.000000e+00> : vector<8x128xf32>
    %93 = tpu.matmul %91, %92, %cst_44 {dimension_numbers = #tpu.dot_dimension_numbers<[1], [0], [0], [1], [0, 0, 1, 1], [], []>} : vector<8x128xbf16>, vector<128x128xbf16>, vector<8x128xf32> -> vector<8x128xf32>
    %94 = arith.addf %93, %7 : vector<8x128xf32>
    %95 = arith.mulf %94, %94 : vector<8x128xf32>
    %cst_45 = arith.constant dense<0.000000e+00> : vector<8xf32>
    %96 = vector.multi_reduction <add>, %95, %cst_45 [1] : vector<8x128xf32> to vector<8xf32>
    %97 = vector.shape_cast %96 : vector<8xf32> to vector<8x1xf32>
    %cst_46 = arith.constant 1.280000e+02 : f32
    %98 = vector.broadcast %cst_46 : f32 to vector<8x1xf32>
    %99 = arith.divf %97, %98 : vector<8x1xf32>
    %cst_47 = arith.constant 9.99999997E-7 : f32
    %100 = vector.broadcast %cst_47 : f32 to vector<8x1xf32>
    %101 = arith.addf %99, %100 : vector<8x1xf32>
    %102 = math.rsqrt %101 : vector<8x1xf32>
    %103 = vector.broadcast %102 : vector<8x1xf32> to vector<8x128xf32>
    %104 = arith.mulf %94, %103 : vector<8x128xf32>
    %c0_48 = arith.constant 0 : index
    %c0_49 = arith.constant 0 : index
    %105 = vector.load %arg10[%c0_48, %c0_49] : memref<1x128xf32, #tpu.memory_space<vmem>>, vector<1x128xf32>
    %106 = vector.broadcast %105 : vector<1x128xf32> to vector<8x128xf32>
    %107 = arith.mulf %104, %106 : vector<8x128xf32>
    %108 = arith.truncf %107 : vector<8x128xf32> to vector<8x128xbf16>
    %cst_50 = arith.constant 0.000000e+00 : f32
    %109 = vector.broadcast %cst_50 : f32 to vector<8x128xf32>
    %c0_51 = arith.constant 0 : index
    %c0_52 = arith.constant 0 : index
    %110 = vector.load %arg11[%c0_51, %c0_52] : memref<128x512xbf16, #tpu.memory_space<vmem>>, vector<128x512xbf16>
    %c0_53 = arith.constant 0 : index
    %c0_54 = arith.constant 0 : index
    %111 = vector.load %arg12[%c0_53, %c0_54] : memref<1x512xf32, #tpu.memory_space<vmem>>, vector<1x512xf32>
    %cst_55 = arith.constant dense<0.000000e+00> : vector<8x512xf32>
    %112 = tpu.matmul %108, %110, %cst_55 {dimension_numbers = #tpu.dot_dimension_numbers<[1], [0], [0], [1], [0, 0, 1, 1], [], []>} : vector<8x128xbf16>, vector<128x512xbf16>, vector<8x512xf32> -> vector<8x512xf32>
    %113 = vector.broadcast %111 : vector<1x512xf32> to vector<8x512xf32>
    %114 = arith.addf %112, %113 : vector<8x512xf32>
    %115 = vector.extract_strided_slice %114 {offsets = [0, 0], sizes = [8, 256], strides = [1, 1]} : vector<8x512xf32> to vector<8x256xf32>
    %116 = vector.extract_strided_slice %114 {offsets = [0, 256], sizes = [8, 256], strides = [1, 1]} : vector<8x512xf32> to vector<8x256xf32>
    %117 = arith.negf %116 : vector<8x256xf32>
    %118 = math.exp %117 : vector<8x256xf32>
    %cst_56 = arith.constant 1.000000e+00 : f32
    %119 = vector.broadcast %cst_56 : f32 to vector<8x256xf32>
    %120 = arith.addf %119, %118 : vector<8x256xf32>
    %121 = arith.divf %119, %120 : vector<8x256xf32>
    %122 = arith.mulf %116, %121 : vector<8x256xf32>
    %123 = arith.mulf %115, %122 : vector<8x256xf32>
    %124 = arith.truncf %123 : vector<8x256xf32> to vector<8x256xbf16>
    %c0_57 = arith.constant 0 : index
    %c0_58 = arith.constant 0 : index
    %125 = vector.load %arg13[%c0_57, %c0_58] : memref<256x128xbf16, #tpu.memory_space<vmem>>, vector<256x128xbf16>
    %cst_59 = arith.constant dense<0.000000e+00> : vector<8x128xf32>
    %126 = tpu.matmul %124, %125, %cst_59 {dimension_numbers = #tpu.dot_dimension_numbers<[1], [0], [0], [1], [0, 0, 1, 1], [], []>} : vector<8x256xbf16>, vector<256x128xbf16>, vector<8x128xf32> -> vector<8x128xf32>
    %127 = arith.addf %109, %126 : vector<8x128xf32>
    %c0_60 = arith.constant 0 : index
    %c0_61 = arith.constant 0 : index
    %128 = vector.load %arg14[%c0_60, %c0_61] : memref<1x128xf32, #tpu.memory_space<vmem>>, vector<1x128xf32>
    %129 = vector.broadcast %128 : vector<1x128xf32> to vector<8x128xf32>
    %130 = arith.addf %127, %129 : vector<8x128xf32>
    %131 = arith.addf %130, %94 : vector<8x128xf32>
    %c0_62 = arith.constant 0 : index
    %c0_63 = arith.constant 0 : index
    %c0_64 = arith.constant 0 : index
    %132 = vector.load %arg17[%c0_62, %c0_63, %c0_64] : memref<1x8x128xf32, #tpu.memory_space<vmem>>, vector<1x8x128xf32>
    %133 = vector.shape_cast %132 : vector<1x8x128xf32> to vector<8x128xf32>
    %134 = vector.shape_cast %131 : vector<8x128xf32> to vector<1x8x128xf32>
    tpu.vector_store %arg17[%c0_62, %c0_63, %c0_64], %134 {strides = array<i32>} : memref<1x8x128xf32, #tpu.memory_space<vmem>>, vector<1x8x128xf32>,
    return
  }
  func.func @transform_0(%arg0: i32, %arg1: i32) -> (i32, i32, i32) {
    %c0_i32 = arith.constant 0 : i32
    %c0_i32_0 = arith.constant 0 : i32
    return %arg0, %arg1, %c0_i32 : i32, i32, i32
  }
  func.func @transform_1(%arg0: i32, %arg1: i32) -> (i32, i32) {
    %c0_i32 = arith.constant 0 : i32
    %c0_i32_0 = arith.constant 0 : i32
    %c0_i32_1 = arith.constant 0 : i32
    return %c0_i32, %c0_i32_0 : i32, i32
  }
  func.func @transform_2(%arg0: i32, %arg1: i32) -> (i32, i32) {
    %c0_i32 = arith.constant 0 : i32
    %c0_i32_0 = arith.constant 0 : i32
    %c0_i32_1 = arith.constant 0 : i32
    return %c0_i32, %c0_i32_0 : i32, i32
  }
  func.func @transform_3(%arg0: i32, %arg1: i32) -> (i32, i32) {
    %c0_i32 = arith.constant 0 : i32
    %c0_i32_0 = arith.constant 0 : i32
    %c0_i32_1 = arith.constant 0 : i32
    return %c0_i32, %c0_i32_0 : i32, i32
  }
  func.func @transform_4(%arg0: i32, %arg1: i32) -> (i32, i32) {
    %c0_i32 = arith.constant 0 : i32
    %c0_i32_0 = arith.constant 0 : i32
    %c0_i32_1 = arith.constant 0 : i32
    return %c0_i32, %c0_i32_0 : i32, i32
  }
  func.func @transform_5(%arg0: i32, %arg1: i32) -> (i32, i32) {
    %c0_i32 = arith.constant 0 : i32
    %c0_i32_0 = arith.constant 0 : i32
    %c0_i32_1 = arith.constant 0 : i32
    return %c0_i32, %c0_i32_0 : i32, i32
  }
  func.func @transform_6(%arg0: i32, %arg1: i32) -> (i32, i32) {
    %c0_i32 = arith.constant 0 : i32
    %c0_i32_0 = arith.constant 0 : i32
    %c0_i32_1 = arith.constant 0 : i32
    return %c0_i32, %c0_i32_0 : i32, i32
  }
  func.func @transform_7(%arg0: i32, %arg1: i32) -> (i32, i32) {
    %c0_i32 = arith.constant 0 : i32
    %c0_i32_0 = arith.constant 0 : i32
    %c0_i32_1 = arith.constant 0 : i32
    return %c0_i32, %c0_i32_0 : i32, i32
  }
  func.func @transform_8(%arg0: i32, %arg1: i32) -> (i32, i32) {
    %c0_i32 = arith.constant 0 : i32
    %c0_i32_0 = arith.constant 0 : i32
    %c0_i32_1 = arith.constant 0 : i32
    return %c0_i32, %c0_i32_0 : i32, i32
  }
  func.func @transform_9(%arg0: i32, %arg1: i32) -> (i32, i32) {
    %c0_i32 = arith.constant 0 : i32
    %c0_i32_0 = arith.constant 0 : i32
    %c0_i32_1 = arith.constant 0 : i32
    return %c0_i32, %c0_i32_0 : i32, i32
  }
  func.func @transform_10(%arg0: i32, %arg1: i32) -> (i32, i32) {
    %c0_i32 = arith.constant 0 : i32
    %c0_i32_0 = arith.constant 0 : i32
    %c0_i32_1 = arith.constant 0 : i32
    return %c0_i32, %c0_i32_0 : i32, i32
  }
  func.func @transform_11(%arg0: i32, %arg1: i32) -> (i32, i32) {
    %c0_i32 = arith.constant 0 : i32
    %c0_i32_0 = arith.constant 0 : i32
    %c0_i32_1 = arith.constant 0 : i32
    return %c0_i32, %c0_i32_0 : i32, i32
  }
  func.func @transform_12(%arg0: i32, %arg1: i32) -> (i32, i32) {
    %c0_i32 = arith.constant 0 : i32
    %c0_i32_0 = arith.constant 0 : i32
    %c0_i32_1 = arith.constant 0 : i32
    return %c0_i32, %c0_i32_0 : i32, i32
  }
  func.func @transform_13(%arg0: i32, %arg1: i32) -> (i32, i32) {
    %c0_i32 = arith.constant 0 : i32
    %c0_i32_0 = arith.constant 0 : i32
    %c0_i32_1 = arith.constant 0 : i32
    return %c0_i32, %c0_i32_0 : i32, i32
  }
  func.func @transform_14(%arg0: i32, %arg1: i32) -> (i32, i32) {
    %c0_i32 = arith.constant 0 : i32
    %c0_i32_0 = arith.constant 0 : i32
    %c0_i32_1 = arith.constant 0 : i32
    return %c0_i32, %c0_i32_0 : i32, i32
  }
  func.func @transform_15(%arg0: i32, %arg1: i32) -> (i32, i32, i32) {
    %c0_i32 = arith.constant 0 : i32
    %c0_i32_0 = arith.constant 0 : i32
    return %arg0, %arg1, %c0_i32 : i32, i32, i32
  }
}

</mosaic_0001>

<llo_original>
// kernel: tpu_custom_call.1
$region0: #{tpu_custom_call.1}
  #allocation0 [shape = 'u32[]', space=smem, size = 0x4, offset = 0x4, fixed_abs, tag = 'smem constant byte address 0x4 - core index']
  #allocation1 [shape = 'u32[144,128]{1,0:T(1,128)}', space=vmem, size = 0x12000, scoped, tag = 'internal scratch']
  #allocation2 [shape = 'f32[16,128]{1,0:T(8,128)}', space=vmem, size = 0x2000, scoped, tag = 'scratch operand']
  #allocation3 [shape = 'f32[16,128]{1,0:T(8,128)}', space=vmem, size = 0x2000, scoped, tag = 'scratch operand']
  %s0 = inlined_call_operand.hbm [shape: f32[2,16,128], index: 0, kind: input, shape index: {}]
  %s1 = inlined_call_operand.vmem [shape: bf16[128,128], index: 1, kind: input, shape index: {}]
  %s2 = inlined_call_operand.hbm [shape: bf16[128,128], index: 2, kind: input, shape index: {}]
  %s3 = inlined_call_operand.hbm [shape: bf16[128,128], index: 3, kind: input, shape index: {}]
  %s4 = inlined_call_operand.hbm [shape: bf16[128,128], index: 4, kind: input, shape index: {}]
  %s5 = inlined_call_operand.vmem [shape: f32[8,128], index: 5, kind: input, shape index: {}]
  %s6 = inlined_call_operand.vmem [shape: f32[8,128], index: 6, kind: input, shape index: {}]
  %s7 = inlined_call_operand.vmem [shape: f32[1,128], index: 7, kind: input, shape index: {}]
  %s8 = inlined_call_operand.vmem [shape: f32[1,128], index: 8, kind: input, shape index: {}]
  %s9 = inlined_call_operand.hbm [shape: bf16[128,512], index: 9, kind: input, shape index: {}]
  %s10 = inlined_call_operand.vmem [shape: f32[1,512], index: 10, kind: input, shape index: {}]
  %s11 = inlined_call_operand.hbm [shape: bf16[256,128], index: 11, kind: input, shape index: {}]
  %s12 = inlined_call_operand.vmem [shape: f32[1,128], index: 12, kind: input, shape index: {}]
  %s13 = inlined_call_operand.vmem [shape: bf16[128,4], index: 13, kind: input, shape index: {}]
  %s14 = inlined_call_operand.vmem [shape: bf16[4,128], index: 14, kind: input, shape index: {}]
  %s15 = inlined_call_operand.hbm [shape: f32[2,16,128], index: 15, kind: output, shape index: {}]
  %s16 = sld [smem:[#allocation0]]
  $region125: #{tpu_custom_call.1} parent=0
    _
  %s18 = ssub.s32 1, %s16
  %s19 = scalar_select 0, %s18, %s16
  $region1: #{tpu_custom_call.1} parent=0
    #allocation4 [shape = 'u8[8192]{0}', space=vmem, size = 0x2000, scoped, tag = 'input window, operand 0']
    #allocation5 [shape = 's32[2]{0}', space=sflag, size = 0x8, scoped, tag = 'scoped memory for tpu_custom_call.1']
    #allocation6 [shape = 's32[2]{0}', space=sflag, size = 0x8, scoped, tag = 'scoped memory for tpu_custom_call.1']
    #allocation7 [shape = 'u8[32768]{0}', space=vmem, size = 0x8000, scoped, tag = 'input window, operand 2, single buffered']
    #allocation8 [shape = 's32[1]{0}', space=sflag, size = 0x4, scoped, tag = 'scoped memory for tpu_custom_call.1']
    #allocation9 [shape = 'u8[32768]{0}', space=vmem, size = 0x8000, scoped, tag = 'input window, operand 3, single buffered']
    #allocation10 [shape = 'u8[32768]{0}', space=vmem, size = 0x8000, scoped, tag = 'input window, operand 4, single buffered']
    #allocation11 [shape = 's32[1]{0}', space=sflag, size = 0x4, scoped, tag = 'scoped memory for tpu_custom_call.1']
    #allocation12 [shape = 'u8[131072]{0}', space=vmem, size = 0x20000, scoped, tag = 'input window, operand 9, single buffered']
    #allocation13 [shape = 'u8[65536]{0}', space=vmem, size = 0x10000, scoped, tag = 'input window, operand 11, single buffered']
    #allocation14 [shape = 's32[1]{0}', space=sflag, size = 0x4, scoped, tag = 'scoped memory for tpu_custom_call.1']
    #allocation15 [shape = 'u8[8192]{0}', space=vmem, size = 0x2000, scoped, tag = 'output window, operand 0']
    %20 = vsyncpa [#allocation5], 0
    %s21 = scalar_lea.sflag [#allocation5], 1
    %22 = vsyncpa %s21, 0
    %23 = vsyncpa [#allocation8], 0
    %24 = vsyncpa [#allocation11], 0
    %25 = vsyncpa [#allocation14], 0
    %26 = vsyncpa [#allocation6], 0
    %s27 = scalar_lea.sflag [#allocation6], 1
    %28 = vsyncpa %s27, 0
    loop: start=0, step=1, limit=6
    $region2: #{tpu_custom_call.1} parent=1 // loop_pre_header
      _
    $region3: #{tpu_custom_call.1} parent=1 // loop_header
      %s30 = sphi 0, %s34
      %p31 = scmp.ge.s32.totalorder %s30, 6
      %s37 = sphi 0, %s49
      %s38 = sphi 0, %s45
      %s39 = sphi 0, %s37
      %s40 = sphi 0, %s38
      %s41 = sphi 0, %s39
      %s42 = sphi 0, %s40
      %s54 = sphi 0, %s56
      %s57 = sphi 0, %s54
      %s58 = sphi 0, %s57
      %s74 = sphi 0, %s58
      %s78 = sphi 0, %s78
      %s80 = sphi 0, %s78
      %s81 = sphi 0, %s80
      %s95 = sphi 0, %s81
      %s99 = sphi 0, %s99
      %s101 = sphi 0, %s99
      %s102 = sphi 0, %s101
      %s116 = sphi 0, %s102
      %s120 = sphi 0, %s120
      %s122 = sphi 0, %s120
      %s123 = sphi 0, %s122
      %s137 = sphi 0, %s123
      %s141 = sphi 0, %s141
      %s143 = sphi 0, %s141
      %s144 = sphi 0, %s143
      %s158 = sphi 0, %s144
      %s162 = sphi 0, %s162
      %s164 = sphi 0, %s162
      %s165 = sphi 0, %s164
      %s179 = sphi 0, %s165
      %s183 = sphi 0, %s183
      %s185 = sphi 0, %s183
      %s186 = sphi 0, %s185
      %s200 = sphi 0, %s186
      %s204 = sphi 0, %s204
      %s206 = sphi 0, %s204
      %s207 = sphi 0, %s206
      %s221 = sphi 0, %s207
      %s225 = sphi 0, %s225
      %s227 = sphi 0, %s225
      %s228 = sphi 0, %s227
      %s242 = sphi 0, %s228
      %s246 = sphi 0, %s246
      %s248 = sphi 0, %s246
      %s249 = sphi 0, %s248
      %s263 = sphi 0, %s249
      %s267 = sphi 0, %s267
      %s269 = sphi 0, %s267
      %s270 = sphi 0, %s269
      %s284 = sphi 0, %s270
      %s288 = sphi 0, %s288
      %s290 = sphi 0, %s288
      %s291 = sphi 0, %s290
      %s305 = sphi 0, %s291
      %s309 = sphi 0, %s309
      %s311 = sphi 0, %s309
      %s312 = sphi 0, %s311
      %s326 = sphi 0, %s312
      %s330 = sphi 0, %s330
      %s332 = sphi 0, %s330
      %s333 = sphi 0, %s332
      %s347 = sphi 0, %s333
      %s351 = sphi 0, %s351
      %s353 = sphi 0, %s351
      %s354 = sphi 0, %s353
      %s368 = sphi 0, %s354
      %s376 = sphi 0, %s378
      %s379 = sphi 0, %s376
      %s380 = sphi 0, %s379
      %s396 = sphi 0, %s380
    $region4: #{tpu_custom_call.1} parent=1 // loop_header_branch
      %33 = sbr.rel (%p31) target = $region8
    $region5: #{tpu_custom_call.1} parent=1 // loop_body
      %s35 = ssub.s32 %s30, 1
      %s36 = ssub.s32 %s30, 2
      %s43 = sadd.s32 1, %s38
      %p44 = scmp.ge.s32.totalorder %s43, 2
      %s45 = scalar_select %p44, 0, %s43
      %s46 = sadd.s32 1, %s37
      %s47 = scalar_select %p44, %s46, %s37
      %p48 = scmp.ge.s32.totalorder %s47, 2
      %s49 = scalar_select %p48, 0, %s47
      %s50 = ssub.s32 %s37, %s49
      %s51 = ssub.s32 %s38, %s45
      %s52 = sor.u32 %s50, %s51
      %p53 = scmp.eq.s32.totalorder %s52, 0
      %s55 = sadd.s32 %s54, 1
      %s56 = scalar_select %p53, %s54, %s55
      %p59 = pneg %p53
      %p60 = scmp.eq.s32.totalorder %s30, 3
      %p61 = por %p59, %p60
      %p62 = scmp.ne.s32.totalorder %s54, %s57
      %p63 = scmp.eq.s32.totalorder %s30, 0
      %p64 = por %p62, %p63
      %p65 = scmp.ne.s32.totalorder %s54, %s57
      %p66 = scmp.eq.s32.totalorder %s35, 3
      %p67 = por %p65, %p66
      %p68 = scmp.ne.s32.totalorder %s57, %s58
      %p69 = scmp.eq.s32.totalorder %s35, 0
      %p70 = por %p68, %p69
      %p71 = scmp.ne.s32.totalorder %s57, %s58
      %p72 = scmp.eq.s32.totalorder %s36, 3
      %p73 = por %p71, %p72
      %p75 = scmp.ne.s32.totalorder %s58, %s74
      %p76 = scmp.eq.s32.totalorder %s36, 0
      %p77 = por %p75, %p76
      %s79 = sadd.s32 %s78, 1
      %p82 = scmp.eq.s32.totalorder %s30, 3
      %p83 = scmp.ne.s32.totalorder %s78, %s80
      %p84 = scmp.eq.s32.totalorder %s30, 0
      %p85 = por %p83, %p84
      %p86 = scmp.ne.s32.totalorder %s78, %s80
      %p87 = scmp.eq.s32.totalorder %s35, 3
      %p88 = por %p86, %p87
      %p89 = scmp.ne.s32.totalorder %s80, %s81
      %p90 = scmp.eq.s32.totalorder %s35, 0
      %p91 = por %p89, %p90
      %p92 = scmp.ne.s32.totalorder %s80, %s81
      %p93 = scmp.eq.s32.totalorder %s36, 3
      %p94 = por %p92, %p93
      %p96 = scmp.ne.s32.totalorder %s81, %s95
      %p97 = scmp.eq.s32.totalorder %s36, 0
      %p98 = por %p96, %p97
      %s100 = sadd.s32 %s99, 1
      %p103 = scmp.eq.s32.totalorder %s30, 3
      %p104 = scmp.ne.s32.totalorder %s99, %s101
      %p105 = scmp.eq.s32.totalorder %s30, 0
      %p106 = por %p104, %p105
      %p107 = scmp.ne.s32.totalorder %s99, %s101
      %p108 = scmp.eq.s32.totalorder %s35, 3
      %p109 = por %p107, %p108
      %p110 = scmp.ne.s32.totalorder %s101, %s102
      %p111 = scmp.eq.s32.totalorder %s35, 0
      %p112 = por %p110, %p111
      %p113 = scmp.ne.s32.totalorder %s101, %s102
      %p114 = scmp.eq.s32.totalorder %s36, 3
      %p115 = por %p113, %p114
      %p117 = scmp.ne.s32.totalorder %s102, %s116
      %p118 = scmp.eq.s32.totalorder %s36, 0
      %p119 = por %p117, %p118
      %s121 = sadd.s32 %s120, 1
      %p124 = scmp.eq.s32.totalorder %s30, 3
      %p125 = scmp.ne.s32.totalorder %s120, %s122
      %p126 = scmp.eq.s32.totalorder %s30, 0
      %p127 = por %p125, %p126
      %p128 = scmp.ne.s32.totalorder %s120, %s122
      %p129 = scmp.eq.s32.totalorder %s35, 3
      %p130 = por %p128, %p129
      %p131 = scmp.ne.s32.totalorder %s122, %s123
      %p132 = scmp.eq.s32.totalorder %s35, 0
      %p133 = por %p131, %p132
      %p134 = scmp.ne.s32.totalorder %s122, %s123
      %p135 = scmp.eq.s32.totalorder %s36, 3
      %p136 = por %p134, %p135
      %p138 = scmp.ne.s32.totalorder %s123, %s137
      %p139 = scmp.eq.s32.totalorder %s36, 0
      %p140 = por %p138, %p139
      %s142 = sadd.s32 %s141, 1
      %p145 = scmp.eq.s32.totalorder %s30, 3
      %p146 = scmp.ne.s32.totalorder %s141, %s143
      %p147 = scmp.eq.s32.totalorder %s30, 0
      %p148 = por %p146, %p147
      %p149 = scmp.ne.s32.totalorder %s141, %s143
      %p150 = scmp.eq.s32.totalorder %s35, 3
      %p151 = por %p149, %p150
      %p152 = scmp.ne.s32.totalorder %s143, %s144
      %p153 = scmp.eq.s32.totalorder %s35, 0
      %p154 = por %p152, %p153
      %p155 = scmp.ne.s32.totalorder %s143, %s144
      %p156 = scmp.eq.s32.totalorder %s36, 3
      %p157 = por %p155, %p156
      %p159 = scmp.ne.s32.totalorder %s144, %s158
      %p160 = scmp.eq.s32.totalorder %s36, 0
      %p161 = por %p159, %p160
      %s163 = sadd.s32 %s162, 1
      %p166 = scmp.eq.s32.totalorder %s30, 3
      %p167 = scmp.ne.s32.totalorder %s162, %s164
      %p168 = scmp.eq.s32.totalorder %s30, 0
      %p169 = por %p167, %p168
      %p170 = scmp.ne.s32.totalorder %s162, %s164
      %p171 = scmp.eq.s32.totalorder %s35, 3
      %p172 = por %p170, %p171
      %p173 = scmp.ne.s32.totalorder %s164, %s165
      %p174 = scmp.eq.s32.totalorder %s35, 0
      %p175 = por %p173, %p174
      %p176 = scmp.ne.s32.totalorder %s164, %s165
      %p177 = scmp.eq.s32.totalorder %s36, 3
      %p178 = por %p176, %p177
      %p180 = scmp.ne.s32.totalorder %s165, %s179
      %p181 = scmp.eq.s32.totalorder %s36, 0
      %p182 = por %p180, %p181
      %s184 = sadd.s32 %s183, 1
      %p187 = scmp.eq.s32.totalorder %s30, 3
      %p188 = scmp.ne.s32.totalorder %s183, %s185
      %p189 = scmp.eq.s32.totalorder %s30, 0
      %p190 = por %p188, %p189
      %p191 = scmp.ne.s32.totalorder %s183, %s185
      %p192 = scmp.eq.s32.totalorder %s35, 3
      %p193 = por %p191, %p192
      %p194 = scmp.ne.s32.totalorder %s185, %s186
      %p195 = scmp.eq.s32.totalorder %s35, 0
      %p196 = por %p194, %p195
      %p197 = scmp.ne.s32.totalorder %s185, %s186
      %p198 = scmp.eq.s32.totalorder %s36, 3
      %p199 = por %p197, %p198
      %p201 = scmp.ne.s32.totalorder %s186, %s200
      %p202 = scmp.eq.s32.totalorder %s36, 0
      %p203 = por %p201, %p202
      %s205 = sadd.s32 %s204, 1
      %p208 = scmp.eq.s32.totalorder %s30, 3
      %p209 = scmp.ne.s32.totalorder %s204, %s206
      %p210 = scmp.eq.s32.totalorder %s30, 0
      %p211 = por %p209, %p210
      %p212 = scmp.ne.s32.totalorder %s204, %s206
      %p213 = scmp.eq.s32.totalorder %s35, 3
      %p214 = por %p212, %p213
      %p215 = scmp.ne.s32.totalorder %s206, %s207
      %p216 = scmp.eq.s32.totalorder %s35, 0
      %p217 = por %p215, %p216
      %p218 = scmp.ne.s32.totalorder %s206, %s207
      %p219 = scmp.eq.s32.totalorder %s36, 3
      %p220 = por %p218, %p219
      %p222 = scmp.ne.s32.totalorder %s207, %s221
      %p223 = scmp.eq.s32.totalorder %s36, 0
      %p224 = por %p222, %p223
      %s226 = sadd.s32 %s225, 1
      %p229 = scmp.eq.s32.totalorder %s30, 3
      %p230 = scmp.ne.s32.totalorder %s225, %s227
      %p231 = scmp.eq.s32.totalorder %s30, 0
      %p232 = por %p230, %p231
      %p233 = scmp.ne.s32.totalorder %s225, %s227
      %p234 = scmp.eq.s32.totalorder %s35, 3
      %p235 = por %p233, %p234
      %p236 = scmp.ne.s32.totalorder %s227, %s228
      %p237 = scmp.eq.s32.totalorder %s35, 0
      %p238 = por %p236, %p237
      %p239 = scmp.ne.s32.totalorder %s227, %s228
      %p240 = scmp.eq.s32.totalorder %s36, 3
      %p241 = por %p239, %p240
      %p243 = scmp.ne.s32.totalorder %s228, %s242
      %p244 = scmp.eq.s32.totalorder %s36, 0
      %p245 = por %p243, %p244
      %s247 = sadd.s32 %s246, 1
      %p250 = scmp.eq.s32.totalorder %s30, 3
      %p251 = scmp.ne.s32.totalorder %s246, %s248
      %p252 = scmp.eq.s32.totalorder %s30, 0
      %p253 = por %p251, %p252
      %p254 = scmp.ne.s32.totalorder %s246, %s248
      %p255 = scmp.eq.s32.totalorder %s35, 3
      %p256 = por %p254, %p255
      %p257 = scmp.ne.s32.totalorder %s248, %s249
      %p258 = scmp.eq.s32.totalorder %s35, 0
      %p259 = por %p257, %p258
      %p260 = scmp.ne.s32.totalorder %s248, %s249
      %p261 = scmp.eq.s32.totalorder %s36, 3
      %p262 = por %p260, %p261
      %p264 = scmp.ne.s32.totalorder %s249, %s263
      %p265 = scmp.eq.s32.totalorder %s36, 0
      %p266 = por %p264, %p265
      %s268 = sadd.s32 %s267, 1
      %p271 = scmp.eq.s32.totalorder %s30, 3
      %p272 = scmp.ne.s32.totalorder %s267, %s269
      %p273 = scmp.eq.s32.totalorder %s30, 0
      %p274 = por %p272, %p273
      %p275 = scmp.ne.s32.totalorder %s267, %s269
      %p276 = scmp.eq.s32.totalorder %s35, 3
      %p277 = por %p275, %p276
      %p278 = scmp.ne.s32.totalorder %s269, %s270
      %p279 = scmp.eq.s32.totalorder %s35, 0
      %p280 = por %p278, %p279
      %p281 = scmp.ne.s32.totalorder %s269, %s270
      %p282 = scmp.eq.s32.totalorder %s36, 3
      %p283 = por %p281, %p282
      %p285 = scmp.ne.s32.totalorder %s270, %s284
      %p286 = scmp.eq.s32.totalorder %s36, 0
      %p287 = por %p285, %p286
      %s289 = sadd.s32 %s288, 1
      %p292 = scmp.eq.s32.totalorder %s30, 3
      %p293 = scmp.ne.s32.totalorder %s288, %s290
      %p294 = scmp.eq.s32.totalorder %s30, 0
      %p295 = por %p293, %p294
      %p296 = scmp.ne.s32.totalorder %s288, %s290
      %p297 = scmp.eq.s32.totalorder %s35, 3
      %p298 = por %p296, %p297
      %p299 = scmp.ne.s32.totalorder %s290, %s291
      %p300 = scmp.eq.s32.totalorder %s35, 0
      %p301 = por %p299, %p300
      %p302 = scmp.ne.s32.totalorder %s290, %s291
      %p303 = scmp.eq.s32.totalorder %s36, 3
      %p304 = por %p302, %p303
      %p306 = scmp.ne.s32.totalorder %s291, %s305
      %p307 = scmp.eq.s32.totalorder %s36, 0
      %p308 = por %p306, %p307
      %s310 = sadd.s32 %s309, 1
      %p313 = scmp.eq.s32.totalorder %s30, 3
      %p314 = scmp.ne.s32.totalorder %s309, %s311
      %p315 = scmp.eq.s32.totalorder %s30, 0
      %p316 = por %p314, %p315
      %p317 = scmp.ne.s32.totalorder %s309, %s311
      %p318 = scmp.eq.s32.totalorder %s35, 3
      %p319 = por %p317, %p318
      %p320 = scmp.ne.s32.totalorder %s311, %s312
      %p321 = scmp.eq.s32.totalorder %s35, 0
      %p322 = por %p320, %p321
      %p323 = scmp.ne.s32.totalorder %s311, %s312
      %p324 = scmp.eq.s32.totalorder %s36, 3
      %p325 = por %p323, %p324
      %p327 = scmp.ne.s32.totalorder %s312, %s326
      %p328 = scmp.eq.s32.totalorder %s36, 0
      %p329 = por %p327, %p328
      %s331 = sadd.s32 %s330, 1
      %p334 = scmp.eq.s32.totalorder %s30, 3
      %p335 = scmp.ne.s32.totalorder %s330, %s332
      %p336 = scmp.eq.s32.totalorder %s30, 0
      %p337 = por %p335, %p336
      %p338 = scmp.ne.s32.totalorder %s330, %s332
      %p339 = scmp.eq.s32.totalorder %s35, 3
      %p340 = por %p338, %p339
      %p341 = scmp.ne.s32.totalorder %s332, %s333
      %p342 = scmp.eq.s32.totalorder %s35, 0
      %p343 = por %p341, %p342
      %p344 = scmp.ne.s32.totalorder %s332, %s333
      %p345 = scmp.eq.s32.totalorder %s36, 3
      %p346 = por %p344, %p345
      %p348 = scmp.ne.s32.totalorder %s333, %s347
      %p349 = scmp.eq.s32.totalorder %s36, 0
      %p350 = por %p348, %p349
      %s352 = sadd.s32 %s351, 1
      %p355 = scmp.eq.s32.totalorder %s30, 3
      %p356 = scmp.ne.s32.totalorder %s351, %s353
      %p357 = scmp.eq.s32.totalorder %s30, 0
      %p358 = por %p356, %p357
      %p359 = scmp.ne.s32.totalorder %s351, %s353
      %p360 = scmp.eq.s32.totalorder %s35, 3
      %p361 = por %p359, %p360
      %p362 = scmp.ne.s32.totalorder %s353, %s354
      %p363 = scmp.eq.s32.totalorder %s35, 0
      %p364 = por %p362, %p363
      %p365 = scmp.ne.s32.totalorder %s353, %s354
      %p366 = scmp.eq.s32.totalorder %s36, 3
      %p367 = por %p365, %p366
      %p369 = scmp.ne.s32.totalorder %s354, %s368
      %p370 = scmp.eq.s32.totalorder %s36, 0
      %p371 = por %p369, %p370
      %s372 = ssub.s32 %s37, %s49
      %s373 = ssub.s32 %s38, %s45
      %s374 = sor.u32 %s372, %s373
      %p375 = scmp.eq.s32.totalorder %s374, 0
      %s377 = sadd.s32 %s376, 1
      %s378 = scalar_select %p375, %s376, %s377
      %p381 = pneg %p375
      %p382 = scmp.eq.s32.totalorder %s30, 3
      %p383 = por %p381, %p382
      %p384 = scmp.ne.s32.totalorder %s376, %s379
      %p385 = scmp.eq.s32.totalorder %s30, 0
      %p386 = por %p384, %p385
      %p387 = scmp.ne.s32.totalorder %s376, %s379
      %p388 = scmp.eq.s32.totalorder %s35, 3
      %p389 = por %p387, %p388
      %p390 = scmp.ne.s32.totalorder %s379, %s380
      %p391 = scmp.eq.s32.totalorder %s35, 0
      %p392 = por %p390, %p391
      %p393 = scmp.ne.s32.totalorder %s379, %s380
      %p394 = scmp.eq.s32.totalorder %s36, 3
      %p395 = por %p393, %p394
      %p397 = scmp.ne.s32.totalorder %s380, %s396
      %p398 = scmp.eq.s32.totalorder %s36, 0
      %p399 = por %p397, %p398
      %p400 = scmp.le.s32.totalorder 1, %s30
      %p401 = scmp.lt.s32.totalorder %s30, 5
      %p402 = pnand %p400, %p401
      %p403 = pneg %p402
      // Predicated region
      $region9: #{tpu_custom_call.1} parent=5 // pred_check
        _
      $region10: #{tpu_custom_call.1} parent=5 // pred_check_branch
        %405 = sbr.rel (%p402) target = $region12
      $region11: #{tpu_custom_call.1} parent=5 // pred_region
        %s406 = ssub.s32 %s30, 1
        // Predicated region
        $region13: #{tpu_custom_call.1} parent=11 // pred_check
          %p407 = pneg %p91
        $region14: #{tpu_custom_call.1} parent=11 // pred_check_branch
          %409 = sbr.rel (%p407) target = $region16
        $region15: #{tpu_custom_call.1} parent=11 // pred_region
          _
        $region16: #{tpu_custom_call.1} parent=11 // pred_fallthru
          _
        // Predicated region
        $region17: #{tpu_custom_call.1} parent=11 // pred_check
          %p410 = pneg %p112
        $region18: #{tpu_custom_call.1} parent=11 // pred_check_branch
          %412 = sbr.rel (%p410) target = $region20
        $region19: #{tpu_custom_call.1} parent=11 // pred_region
          %s414 = ssub.s32 1024, 1024
          %415 = vsyncadd [#allocation8], %s414
          %s416 = sshll.u32 [#allocation7], 4
          %s417 = int_to_ptr.vmem [resolvable:$true] %s416
          %422 = dma.hbm_to_vmem [thread:$0]  %s2, 1024, %s417, [#allocation8], 64, 64, 4
        $region20: #{tpu_custom_call.1} parent=11 // pred_fallthru
          _
        // Predicated region
        $region21: #{tpu_custom_call.1} parent=11 // pred_check
          %p423 = pneg %p133
        $region22: #{tpu_custom_call.1} parent=11 // pred_check_branch
          %425 = sbr.rel (%p423) target = $region24
        $region23: #{tpu_custom_call.1} parent=11 // pred_region
          %s427 = ssub.s32 1024, 1024
          %428 = vsyncadd [#allocation8], %s427
          %s429 = sshll.u32 [#allocation9], 4
          %s430 = int_to_ptr.vmem [resolvable:$true] %s429
          %435 = dma.hbm_to_vmem [thread:$0]  %s3, 1024, %s430, [#allocation8], 64, 64, 4
        $region24: #{tpu_custom_call.1} parent=11 // pred_fallthru
          _
        // Predicated region
        $region25: #{tpu_custom_call.1} parent=11 // pred_check
          %p436 = pneg %p154
        $region26: #{tpu_custom_call.1} parent=11 // pred_check_branch
          %438 = sbr.rel (%p436) target = $region28
        $region27: #{tpu_custom_call.1} parent=11 // pred_region
          %s440 = ssub.s32 1024, 1024
          %441 = vsyncadd [#allocation11], %s440
          %s442 = sshll.u32 [#allocation10], 4
          %s443 = int_to_ptr.vmem [resolvable:$true] %s442
          %448 = dma.hbm_to_vmem [thread:$0]  %s4, 1024, %s443, [#allocation11], 64, 64, 4
        $region28: #{tpu_custom_call.1} parent=11 // pred_fallthru
          _
        // Predicated region
        $region29: #{tpu_custom_call.1} parent=11 // pred_check
          %p449 = pneg %p175
        $region30: #{tpu_custom_call.1} parent=11 // pred_check_branch
          %451 = sbr.rel (%p449) target = $region32
        $region31: #{tpu_custom_call.1} parent=11 // pred_region
          _
        $region32: #{tpu_custom_call.1} parent=11 // pred_fallthru
          _
        // Predicated region
        $region33: #{tpu_custom_call.1} parent=11 // pred_check
          %p452 = pneg %p196
        $region34: #{tpu_custom_call.1} parent=11 // pred_check_branch
          %454 = sbr.rel (%p452) target = $region36
        $region35: #{tpu_custom_call.1} parent=11 // pred_region
          _
        $region36: #{tpu_custom_call.1} parent=11 // pred_fallthru
          _
        // Predicated region
        $region37: #{tpu_custom_call.1} parent=11 // pred_check
          %p455 = pneg %p217
        $region38: #{tpu_custom_call.1} parent=11 // pred_check_branch
          %457 = sbr.rel (%p455) target = $region40
        $region39: #{tpu_custom_call.1} parent=11 // pred_region
          _
        $region40: #{tpu_custom_call.1} parent=11 // pred_fallthru
          _
        // Predicated region
        $region41: #{tpu_custom_call.1} parent=11 // pred_check
          %p458 = pneg %p238
        $region42: #{tpu_custom_call.1} parent=11 // pred_check_branch
          %460 = sbr.rel (%p458) target = $region44
        $region43: #{tpu_custom_call.1} parent=11 // pred_region
          _
        $region44: #{tpu_custom_call.1} parent=11 // pred_fallthru
          _
        // Predicated region
        $region45: #{tpu_custom_call.1} parent=11 // pred_check
          %p461 = pneg %p259
        $region46: #{tpu_custom_call.1} parent=11 // pred_check_branch
          %463 = sbr.rel (%p461) target = $region48
        $region47: #{tpu_custom_call.1} parent=11 // pred_region
          %s465 = ssub.s32 4096, 4096
          %466 = vsyncadd [#allocation11], %s465
          %s467 = sshll.u32 [#allocation12], 4
          %s468 = int_to_ptr.vmem [resolvable:$true] %s467
          %473 = dma.hbm_to_vmem [thread:$0]  %s9, 4096, %s468, [#allocation11], 256, 256, 16
        $region48: #{tpu_custom_call.1} parent=11 // pred_fallthru
          _
        // Predicated region
        $region49: #{tpu_custom_call.1} parent=11 // pred_check
          %p474 = pneg %p280
        $region50: #{tpu_custom_call.1} parent=11 // pred_check_branch
          %476 = sbr.rel (%p474) target = $region52
        $region51: #{tpu_custom_call.1} parent=11 // pred_region
          _
        $region52: #{tpu_custom_call.1} parent=11 // pred_fallthru
          _
        // Predicated region
        $region53: #{tpu_custom_call.1} parent=11 // pred_check
          %p477 = pneg %p301
        $region54: #{tpu_custom_call.1} parent=11 // pred_check_branch
          %479 = sbr.rel (%p477) target = $region56
        $region55: #{tpu_custom_call.1} parent=11 // pred_region
          %s481 = ssub.s32 2048, 2048
          %482 = vsyncadd [#allocation14], %s481
          %s483 = sshll.u32 [#allocation13], 4
          %s484 = int_to_ptr.vmem [resolvable:$true] %s483
          %489 = dma.hbm_to_vmem [thread:$0]  %s11, 2048, %s484, [#allocation14], 64, 64, 4
        $region56: #{tpu_custom_call.1} parent=11 // pred_fallthru
          _
        // Predicated region
        $region57: #{tpu_custom_call.1} parent=11 // pred_check
          %p490 = pneg %p322
        $region58: #{tpu_custom_call.1} parent=11 // pred_check_branch
          %492 = sbr.rel (%p490) target = $region60
        $region59: #{tpu_custom_call.1} parent=11 // pred_region
          _
        $region60: #{tpu_custom_call.1} parent=11 // pred_fallthru
          _
        // Predicated region
        $region61: #{tpu_custom_call.1} parent=11 // pred_check
          %p493 = pneg %p343
        $region62: #{tpu_custom_call.1} parent=11 // pred_check_branch
          %495 = sbr.rel (%p493) target = $region64
        $region63: #{tpu_custom_call.1} parent=11 // pred_region
          _
        $region64: #{tpu_custom_call.1} parent=11 // pred_fallthru
          _
        // Predicated region
        $region65: #{tpu_custom_call.1} parent=11 // pred_check
          %p496 = pneg %p364
        $region66: #{tpu_custom_call.1} parent=11 // pred_check_branch
          %498 = sbr.rel (%p496) target = $region68
        $region67: #{tpu_custom_call.1} parent=11 // pred_region
          _
        $region68: #{tpu_custom_call.1} parent=11 // pred_fallthru
          _
      $region12: #{tpu_custom_call.1} parent=5 // pred_fallthru
        _
      %p499 = scmp.lt.s32.totalorder %s30, 4
      // Predicated region
      $region69: #{tpu_custom_call.1} parent=5 // pred_check
        %p500 = pneg %p499
      $region70: #{tpu_custom_call.1} parent=5 // pred_check_branch
        %502 = sbr.rel (%p500) target = $region72
      $region71: #{tpu_custom_call.1} parent=5 // pred_region
        // Predicated region
        $region73: #{tpu_custom_call.1} parent=71 // pred_check
          %p503 = pneg %p64
        $region74: #{tpu_custom_call.1} parent=71 // pred_check_branch
          %505 = sbr.rel (%p503) target = $region76
        $region75: #{tpu_custom_call.1} parent=71 // pred_region
          %s506 = sand.u32 %s54, 1
          %s507 = scalar_lea.sflag [#allocation5], %s506
          %s508 = sand.u32 %s54, 1
          %s509 = smul.addr %s508, 8
          %s510 = scalar_lea.vmem [#allocation4], %s509
          %s512 = ssub.s32 128, 128
          %513 = vsyncadd %s507, %s512
          %s514 = smul.addr %s37, 2
          %s515 = sadd.s32 %s38, %s514
          %s516 = smul.addr %s515, 128
          %s517 = scalar_lea.hbm %s0, %s516
          %s519 = sshll.u32 %s510, 4
          %s520 = int_to_ptr.vmem [resolvable:$true] %s519
          %522 = dma.hbm_to_vmem [thread:$0]  %s517, 128, %s520, %s507
        $region76: #{tpu_custom_call.1} parent=71 // pred_fallthru
          _
      $region72: #{tpu_custom_call.1} parent=5 // pred_fallthru
        _
      %p523 = scmp.le.s32.totalorder 1, %s30
      %p524 = scmp.lt.s32.totalorder %s30, 5
      %p525 = pnand %p523, %p524
      %p526 = pneg %p525
      // Predicated region
      $region77: #{tpu_custom_call.1} parent=5 // pred_check
        _
      $region78: #{tpu_custom_call.1} parent=5 // pred_check_branch
        %528 = sbr.rel (%p525) target = $region80
      $region79: #{tpu_custom_call.1} parent=5 // pred_region
        %s529 = ssub.s32 %s30, 1
        %s530 = sand.u32 %s57, 1
        %s531 = scalar_lea.sflag [#allocation5], %s530
        %s532 = sand.u32 %s57, 1
        %s533 = smul.addr %s532, 8
        %s534 = scalar_lea.vmem [#allocation4], %s533
        // Predicated region
        $region81: #{tpu_custom_call.1} parent=79 // pred_check
          %p535 = pneg %p70
        $region82: #{tpu_custom_call.1} parent=79 // pred_check_branch
          %537 = sbr.rel (%p535) target = $region84
        $region83: #{tpu_custom_call.1} parent=79 // pred_region
          %538 = dma.done %s531, 128
        $region84: #{tpu_custom_call.1} parent=79 // pred_fallthru
          _
        // Predicated region
        $region85: #{tpu_custom_call.1} parent=79 // pred_check
          %p539 = pneg %p112
        $region86: #{tpu_custom_call.1} parent=79 // pred_check_branch
          %541 = sbr.rel (%p539) target = $region88
        $region87: #{tpu_custom_call.1} parent=79 // pred_region
          %542 = dma.done [#allocation8], 1024
        $region88: #{tpu_custom_call.1} parent=79 // pred_fallthru
          _
        // Predicated region
        $region89: #{tpu_custom_call.1} parent=79 // pred_check
          %p543 = pneg %p133
        $region90: #{tpu_custom_call.1} parent=79 // pred_check_branch
          %545 = sbr.rel (%p543) target = $region92
        $region91: #{tpu_custom_call.1} parent=79 // pred_region
          %546 = dma.done [#allocation8], 1024
        $region92: #{tpu_custom_call.1} parent=79 // pred_fallthru
          _
        // Predicated region
        $region93: #{tpu_custom_call.1} parent=79 // pred_check
          %p547 = pneg %p154
        $region94: #{tpu_custom_call.1} parent=79 // pred_check_branch
          %549 = sbr.rel (%p547) target = $region96
        $region95: #{tpu_custom_call.1} parent=79 // pred_region
          %550 = dma.done [#allocation11], 1024
        $region96: #{tpu_custom_call.1} parent=79 // pred_fallthru
          _
        // Predicated region
        $region97: #{tpu_custom_call.1} parent=79 // pred_check
          %p551 = pneg %p259
        $region98: #{tpu_custom_call.1} parent=79 // pred_check_branch
          %553 = sbr.rel (%p551) target = $region100
        $region99: #{tpu_custom_call.1} parent=79 // pred_region
          %554 = dma.done [#allocation11], 4096
        $region100: #{tpu_custom_call.1} parent=79 // pred_fallthru
          _
        // Predicated region
        $region101: #{tpu_custom_call.1} parent=79 // pred_check
          %p555 = pneg %p301
        $region102: #{tpu_custom_call.1} parent=79 // pred_check_branch
          %557 = sbr.rel (%p555) target = $region104
        $region103: #{tpu_custom_call.1} parent=79 // pred_region
          %558 = dma.done [#allocation14], 2048
        $region104: #{tpu_custom_call.1} parent=79 // pred_fallthru
          _
        %s559 = sand.u32 %s57, 1
        %s560 = scalar_lea.sflag [#allocation5], %s559
        %s561 = sand.u32 %s57, 1
        %s562 = smul.addr %s561, 8
        %s563 = scalar_lea.vmem [#allocation4], %s562
        %p564 = pneg %p70
        %p565 = pneg %p67
        %p566 = pneg %p91
        %p567 = pneg %p88
        %p568 = pneg %p112
        %p569 = pneg %p109
        %p570 = pneg %p133
        %p571 = pneg %p130
        %p572 = pneg %p154
        %p573 = pneg %p151
        %p574 = pneg %p175
        %p575 = pneg %p172
        %p576 = pneg %p196
        %p577 = pneg %p193
        %p578 = pneg %p217
        %p579 = pneg %p214
        %p580 = pneg %p238
        %p581 = pneg %p235
        %p582 = pneg %p259
        %p583 = pneg %p256
        %p584 = pneg %p280
        %p585 = pneg %p277
        %p586 = pneg %p301
        %p587 = pneg %p298
        %p588 = pneg %p322
        %p589 = pneg %p319
        %p590 = pneg %p343
        %p591 = pneg %p340
        %p592 = pneg %p364
        %p593 = pneg %p361
        %p594 = pneg %p392
        %p595 = pneg %p389
        %s596 = sand.u32 %s379, 1
        %s597 = scalar_lea.sflag [#allocation6], %s596
        %s598 = sand.u32 %s379, 1
        %s599 = smul.addr %s598, 8
        %s600 = scalar_lea.vmem [#allocation15], %s599
        %p602 = scmp.eq.s32.totalorder %s40, 0
        // Predicated region
        $region105: #{tpu_custom_call.1} parent=79 // pred_check
          %p603 = pneg %p602
        $region106: #{tpu_custom_call.1} parent=79 // pred_check_branch
          %605 = sbr.rel (%p603) target = $region108
        $region107: #{tpu_custom_call.1} parent=79 // pred_region
          %v606 = vld [vmem:[%s5] sm:$0xff]
          %607 = vst [vmem:[#allocation2] sm:$0xff] %v606
          %v608 = vld [vmem:[%s6] sm:$0xff]
          %609 = vst [vmem:[#allocation3] sm:$0xff] %v608
        $region108: #{tpu_custom_call.1} parent=79 // pred_fallthru
          _
        %p610 = scmp.ne.s32.totalorder %s40, 0
        // Predicated region
        $region109: #{tpu_custom_call.1} parent=79 // pred_check
          %p611 = pneg %p610
        $region110: #{tpu_custom_call.1} parent=79 // pred_check_branch
          %613 = sbr.rel (%p611) target = $region112
        $region111: #{tpu_custom_call.1} parent=79 // pred_region
          %v614 = vld [vmem:[#allocation2 + $0x8] sm:$0xff]
          %615 = vst [vmem:[#allocation2] sm:$0xff] %v614
          %v616 = vld [vmem:[#allocation3 + $0x8] sm:$0xff]
          %617 = vst [vmem:[#allocation3] sm:$0xff] %v616
        $region112: #{tpu_custom_call.1} parent=79 // pred_fallthru
          _
        %v618 = vld [vmem:[%s534] sm:$0xff]
        %v619 = vmul.f32 %v618, %v618
        %620 = vadd.xlane.f32.xlu0 %v619
        %v621 = vpop.xlane.xlu0 %620
        %v622 = vrcp.pop 128.0
        %v623 = vmul.f32 %v621, %v622
        %v624 = vadd.f32 %v623, 1e-06
        %v625 = vrsqrt.pop %v624
        %v626 = vmul.f32 %v618, %v625
        %v627 = vld [vmem:[%s7] sm:$0x1]
        %v629 = vlaneseq
        %v630 = vshrl.u32 %v629, 7
        %v631 = vsub.s32 0, %v630
        %v632 = vrot.slane %v627, %v631
        %v634 = vmul.f32 %v626, %v632
        %v635 = vpack.c.bf16 %v634, %v634
        %v636 = vld [vmem:[%s1] sm:$0xf]
        %v637 = vld [vmem:[%s1 + $0x4] sm:$0xf]
        %v638 = vld [vmem:[%s1 + $0x8] sm:$0xf]
        %v639 = vld [vmem:[%s1 + $0xc] sm:$0xf]
        %v640 = vld [vmem:[%s1 + $0x10] sm:$0xf]
        %v641 = vld [vmem:[%s1 + $0x14] sm:$0xf]
        %v642 = vld [vmem:[%s1 + $0x18] sm:$0xf]
        %v643 = vld [vmem:[%s1 + $0x1c] sm:$0xf]
        %v644 = vld [vmem:[%s1 + $0x20] sm:$0xf]
        %v645 = vld [vmem:[%s1 + $0x24] sm:$0xf]
        %v646 = vld [vmem:[%s1 + $0x28] sm:$0xf]
        %v647 = vld [vmem:[%s1 + $0x2c] sm:$0xf]
        %v648 = vld [vmem:[%s1 + $0x30] sm:$0xf]
        %v649 = vld [vmem:[%s1 + $0x34] sm:$0xf]
        %v650 = vld [vmem:[%s1 + $0x38] sm:$0xf]
        %v651 = vld [vmem:[%s1 + $0x3c] sm:$0xf]
        %v668 = vunpack.c.l.b16 %v636
        %v669 = vunpack.c.l.b16 %v637
        %v670 = vunpack.c.l.b16 %v638
        %v671 = vunpack.c.l.b16 %v639
        %v672 = vunpack.c.l.b16 %v640
        %v673 = vunpack.c.l.b16 %v641
        %v674 = vunpack.c.l.b16 %v642
        %v675 = vunpack.c.l.b16 %v643
        %v676 = vunpack.c.l.b16 %v644
        %v677 = vunpack.c.l.b16 %v645
        %v678 = vunpack.c.l.b16 %v646
        %v679 = vunpack.c.l.b16 %v647
        %v680 = vunpack.c.l.b16 %v648
        %v681 = vunpack.c.l.b16 %v649
        %v682 = vunpack.c.l.b16 %v650
        %v683 = vunpack.c.l.b16 %v651
        %v684 = vpack.c.b16 %v669, %v668
        %v685 = vpack.c.b16 %v671, %v670
        %v686 = vpack.c.b16 %v673, %v672
        %v687 = vpack.c.b16 %v675, %v674
        %v688 = vpack.c.b16 %v677, %v676
        %v689 = vpack.c.b16 %v679, %v678
        %v690 = vpack.c.b16 %v681, %v680
        %v691 = vpack.c.b16 %v683, %v682
        %700 = vmatprep.subr.bf16.mxu0 0
        %701 = vmatpush1.bf16.msra.mxu0 %v684
        %702 = vmatprep.subr.bf16.mxu0 0
        %703 = vmatpush1.bf16.msra.mxu0 %v685
        %704 = vmatprep.subr.bf16.mxu0 0
        %705 = vmatpush1.bf16.msra.mxu0 %v686
        %706 = vmatprep.subr.bf16.mxu0 0
        %707 = vmatpush1.bf16.msra.mxu0 %v687
        %708 = vmatprep.subr.bf16.mxu0 0
        %709 = vmatpush1.bf16.msra.mxu0 %v688
        %710 = vmatprep.subr.bf16.mxu0 0
        %711 = vmatpush1.bf16.msra.mxu0 %v689
        %712 = vmatprep.subr.bf16.mxu0 0
        %713 = vmatpush1.bf16.msra.mxu0 %v690
        %714 = vmatprep.subr.bf16.mxu0 0
        %715 = vmatpush1.bf16.msra.mxu0 %v691
        %716 = vmatprep.subr.bf16.mxu0 0
        %717 = vmatpush1.bf16.msra.mxu0 0
        %718 = vmatprep.subr.bf16.mxu0 0
        %719 = vmatpush1.bf16.msra.mxu0 0
        %720 = vmatprep.subr.bf16.mxu0 0
        %721 = vmatpush1.bf16.msra.mxu0 0
        %722 = vmatprep.subr.bf16.mxu0 0
        %723 = vmatpush1.bf16.msra.mxu0 0
        %724 = vmatprep.subr.bf16.mxu0 0
        %725 = vmatpush1.bf16.msra.mxu0 0
        %726 = vmatprep.subr.bf16.mxu0 0
        %727 = vmatpush1.bf16.msra.mxu0 0
        %728 = vmatprep.subr.bf16.mxu0 0
        %729 = vmatpush1.bf16.msra.mxu0 0
        %730 = vmatprep.subr.bf16.mxu0 0
        %731 = vmatpush1.bf16.msra.mxu0 0
        %732 = vmatprep.mubr.bf16.mxu0 0
        %733 = vmatmul.mubr.bf16.gmra.mrb[0].mxu0 %v635
        %v734 = vpop.f32.mrb[0].mxu0
        %v735 = vadd.f32 0.0, %v734
        %v736 = vpop.f32.mrb[0].mxu0
        %v737 = vpop.f32.mrb[0].mxu0
        %v738 = vpop.f32.mrb[0].mxu0
        %739 = vdwg.mxu0
        %v740 = vld [vmem:[#allocation7] sm:$0xf]
        %v741 = vld [vmem:[#allocation7 + $0x4] sm:$0xf]
        %v742 = vld [vmem:[#allocation7 + $0x8] sm:$0xf]
        %v743 = vld [vmem:[#allocation7 + $0xc] sm:$0xf]
        %v744 = vld [vmem:[#allocation7 + $0x10] sm:$0xf]
        %v745 = vld [vmem:[#allocation7 + $0x14] sm:$0xf]
        %v746 = vld [vmem:[#allocation7 + $0x18] sm:$0xf]
        %v747 = vld [vmem:[#allocation7 + $0x1c] sm:$0xf]
        %v748 = vld [vmem:[#allocation7 + $0x20] sm:$0xf]
        %v749 = vld [vmem:[#allocation7 + $0x24] sm:$0xf]
        %v750 = vld [vmem:[#allocation7 + $0x28] sm:$0xf]
        %v751 = vld [vmem:[#allocation7 + $0x2c] sm:$0xf]
        %v752 = vld [vmem:[#allocation7 + $0x30] sm:$0xf]
        %v753 = vld [vmem:[#allocation7 + $0x34] sm:$0xf]
        %v754 = vld [vmem:[#allocation7 + $0x38] sm:$0xf]
        %v755 = vld [vmem:[#allocation7 + $0x3c] sm:$0xf]
        %v772 = vunpack.c.l.b16 %v740
        %v773 = vunpack.c.l.b16 %v741
        %v774 = vunpack.c.l.b16 %v742
        %v775 = vunpack.c.l.b16 %v743
        %v776 = vunpack.c.l.b16 %v744
        %v777 = vunpack.c.l.b16 %v745
        %v778 = vunpack.c.l.b16 %v746
        %v779 = vunpack.c.l.b16 %v747
        %v780 = vunpack.c.l.b16 %v748
        %v781 = vunpack.c.l.b16 %v749
        %v782 = vunpack.c.l.b16 %v750
        %v783 = vunpack.c.l.b16 %v751
        %v784 = vunpack.c.l.b16 %v752
        %v785 = vunpack.c.l.b16 %v753
        %v786 = vunpack.c.l.b16 %v754
        %v787 = vunpack.c.l.b16 %v755
        %v788 = vpack.c.b16 %v773, %v772
        %v789 = vpack.c.b16 %v775, %v774
        %v790 = vpack.c.b16 %v777, %v776
        %v791 = vpack.c.b16 %v779, %v778
        %v792 = vpack.c.b16 %v781, %v780
        %v793 = vpack.c.b16 %v783, %v782
        %v794 = vpack.c.b16 %v785, %v784
        %v795 = vpack.c.b16 %v787, %v786
        %804 = vmatprep.subr.bf16.mxu0 0
        %805 = vmatpush1.bf16.msra.mxu0 %v788
        %806 = vmatprep.subr.bf16.mxu0 0
        %807 = vmatpush1.bf16.msra.mxu0 %v789
        %808 = vmatprep.subr.bf16.mxu0 0
        %809 = vmatpush1.bf16.msra.mxu0 %v790
        %810 = vmatprep.subr.bf16.mxu0 0
        %811 = vmatpush1.bf16.msra.mxu0 %v791
        %812 = vmatprep.subr.bf16.mxu0 0
        %813 = vmatpush1.bf16.msra.mxu0 %v792
        %814 = vmatprep.subr.bf16.mxu0 0
        %815 = vmatpush1.bf16.msra.mxu0 %v793
        %816 = vmatprep.subr.bf16.mxu0 0
        %817 = vmatpush1.bf16.msra.mxu0 %v794
        %818 = vmatprep.subr.bf16.mxu0 0
        %819 = vmatpush1.bf16.msra.mxu0 %v795
        %820 = vmatprep.subr.bf16.mxu0 0
        %821 = vmatpush1.bf16.msra.mxu0 0
        %822 = vmatprep.subr.bf16.mxu0 0
        %823 = vmatpush1.bf16.msra.mxu0 0
        %824 = vmatprep.subr.bf16.mxu0 0
        %825 = vmatpush1.bf16.msra.mxu0 0
        %826 = vmatprep.subr.bf16.mxu0 0
        %827 = vmatpush1.bf16.msra.mxu0 0
        %828 = vmatprep.subr.bf16.mxu0 0
        %829 = vmatpush1.bf16.msra.mxu0 0
        %830 = vmatprep.subr.bf16.mxu0 0
        %831 = vmatpush1.bf16.msra.mxu0 0
        %832 = vmatprep.subr.bf16.mxu0 0
        %833 = vmatpush1.bf16.msra.mxu0 0
        %834 = vmatprep.subr.bf16.mxu0 0
        %835 = vmatpush1.bf16.msra.mxu0 0
        %836 = vmatprep.mubr.bf16.mxu0 0
        %837 = vmatmul.mubr.bf16.gmra.mrb[0].mxu0 %v635
        %v838 = vpop.f32.mrb[0].mxu0
        %v839 = vadd.f32 0.0, %v838
        %v840 = vpop.f32.mrb[0].mxu0
        %v841 = vpop.f32.mrb[0].mxu0
        %v842 = vpop.f32.mrb[0].mxu0
        %843 = vdwg.mxu0
        %v844 = vld [vmem:[#allocation9] sm:$0xf]
        %v845 = vld [vmem:[#allocation9 + $0x4] sm:$0xf]
        %v846 = vld [vmem:[#allocation9 + $0x8] sm:$0xf]
        %v847 = vld [vmem:[#allocation9 + $0xc] sm:$0xf]
        %v848 = vld [vmem:[#allocation9 + $0x10] sm:$0xf]
        %v849 = vld [vmem:[#allocation9 + $0x14] sm:$0xf]
        %v850 = vld [vmem:[#allocation9 + $0x18] sm:$0xf]
        %v851 = vld [vmem:[#allocation9 + $0x1c] sm:$0xf]
        %v852 = vld [vmem:[#allocation9 + $0x20] sm:$0xf]
        %v853 = vld [vmem:[#allocation9 + $0x24] sm:$0xf]
        %v854 = vld [vmem:[#allocation9 + $0x28] sm:$0xf]
        %v855 = vld [vmem:[#allocation9 + $0x2c] sm:$0xf]
        %v856 = vld [vmem:[#allocation9 + $0x30] sm:$0xf]
        %v857 = vld [vmem:[#allocation9 + $0x34] sm:$0xf]
        %v858 = vld [vmem:[#allocation9 + $0x38] sm:$0xf]
        %v859 = vld [vmem:[#allocation9 + $0x3c] sm:$0xf]
        %v876 = vunpack.c.l.b16 %v844
        %v877 = vunpack.c.l.b16 %v845
        %v878 = vunpack.c.l.b16 %v846
        %v879 = vunpack.c.l.b16 %v847
        %v880 = vunpack.c.l.b16 %v848
        %v881 = vunpack.c.l.b16 %v849
        %v882 = vunpack.c.l.b16 %v850
        %v883 = vunpack.c.l.b16 %v851
        %v884 = vunpack.c.l.b16 %v852
        %v885 = vunpack.c.l.b16 %v853
        %v886 = vunpack.c.l.b16 %v854
        %v887 = vunpack.c.l.b16 %v855
        %v888 = vunpack.c.l.b16 %v856
        %v889 = vunpack.c.l.b16 %v857
        %v890 = vunpack.c.l.b16 %v858
        %v891 = vunpack.c.l.b16 %v859
        %v892 = vpack.c.b16 %v877, %v876
        %v893 = vpack.c.b16 %v879, %v878
        %v894 = vpack.c.b16 %v881, %v880
        %v895 = vpack.c.b16 %v883, %v882
        %v896 = vpack.c.b16 %v885, %v884
        %v897 = vpack.c.b16 %v887, %v886
        %v898 = vpack.c.b16 %v889, %v888
        %v899 = vpack.c.b16 %v891, %v890
        %908 = vmatprep.subr.bf16.mxu0 0
        %909 = vmatpush1.bf16.msra.mxu0 %v892
        %910 = vmatprep.subr.bf16.mxu0 0
        %911 = vmatpush1.bf16.msra.mxu0 %v893
        %912 = vmatprep.subr.bf16.mxu0 0
        %913 = vmatpush1.bf16.msra.mxu0 %v894
        %914 = vmatprep.subr.bf16.mxu0 0
        %915 = vmatpush1.bf16.msra.mxu0 %v895
        %916 = vmatprep.subr.bf16.mxu0 0
        %917 = vmatpush1.bf16.msra.mxu0 %v896
        %918 = vmatprep.subr.bf16.mxu0 0
        %919 = vmatpush1.bf16.msra.mxu0 %v897
        %920 = vmatprep.subr.bf16.mxu0 0
        %921 = vmatpush1.bf16.msra.mxu0 %v898
        %922 = vmatprep.subr.bf16.mxu0 0
        %923 = vmatpush1.bf16.msra.mxu0 %v899
        %924 = vmatprep.subr.bf16.mxu0 0
        %925 = vmatpush1.bf16.msra.mxu0 0
        %926 = vmatprep.subr.bf16.mxu0 0
        %927 = vmatpush1.bf16.msra.mxu0 0
        %928 = vmatprep.subr.bf16.mxu0 0
        %929 = vmatpush1.bf16.msra.mxu0 0
        %930 = vmatprep.subr.bf16.mxu0 0
        %931 = vmatpush1.bf16.msra.mxu0 0
        %932 = vmatprep.subr.bf16.mxu0 0
        %933 = vmatpush1.bf16.msra.mxu0 0
        %934 = vmatprep.subr.bf16.mxu0 0
        %935 = vmatpush1.bf16.msra.mxu0 0
        %936 = vmatprep.subr.bf16.mxu0 0
        %937 = vmatpush1.bf16.msra.mxu0 0
        %938 = vmatprep.subr.bf16.mxu0 0
        %939 = vmatpush1.bf16.msra.mxu0 0
        %940 = vmatprep.mubr.bf16.mxu0 0
        %941 = vmatmul.mubr.bf16.gmra.mrb[0].mxu0 %v635
        %v942 = vpop.f32.mrb[0].mxu0
        %v943 = vadd.f32 0.0, %v942
        %v944 = vpop.f32.mrb[0].mxu0
        %v945 = vpop.f32.mrb[0].mxu0
        %v946 = vpop.f32.mrb[0].mxu0
        %947 = vdwg.mxu0
        %948 = vst [vmem:[#allocation2 + $0x8] sm:$0xff] %v839
        %949 = vst [vmem:[#allocation3 + $0x8] sm:$0xff] %v943
        %v950 = vld [vmem:[%s13] sm:$0xf]
        %v951 = vld [vmem:[%s13 + $0x4] sm:$0xf]
        %v952 = vld [vmem:[%s13 + $0x8] sm:$0xf]
        %v953 = vld [vmem:[%s13 + $0xc] sm:$0xf]
        %v954 = vld [vmem:[%s13 + $0x10] sm:$0xf]
        %v955 = vld [vmem:[%s13 + $0x14] sm:$0xf]
        %v956 = vld [vmem:[%s13 + $0x18] sm:$0xf]
        %v957 = vld [vmem:[%s13 + $0x1c] sm:$0xf]
        %v958 = vld [vmem:[%s13 + $0x20] sm:$0xf]
        %v959 = vld [vmem:[%s13 + $0x24] sm:$0xf]
        %v960 = vld [vmem:[%s13 + $0x28] sm:$0xf]
        %v961 = vld [vmem:[%s13 + $0x2c] sm:$0xf]
        %v962 = vld [vmem:[%s13 + $0x30] sm:$0xf]
        %v963 = vld [vmem:[%s13 + $0x34] sm:$0xf]
        %v964 = vld [vmem:[%s13 + $0x38] sm:$0xf]
        %v965 = vld [vmem:[%s13 + $0x3c] sm:$0xf]
        %v966 = vld [vmem:[%s14] sm:$0x3]
        %v967 = vld [vmem:[#allocation2 + $0x5] sm:$0xff]
        %v968 = vmul.f32 %v735, %v967
        %v969 = vpack.c.bf16 %v968, %v968
        %v970 = vld [vmem:[#allocation2 + $0x6] sm:$0xff]
        %v971 = vmul.f32 %v735, %v970
        %v972 = vpack.c.bf16 %v971, %v971
        %v973 = vld [vmem:[#allocation2 + $0x7] sm:$0xff]
        %v974 = vmul.f32 %v735, %v973
        %v975 = vpack.c.bf16 %v974, %v974
        %v976 = vld [vmem:[#allocation2 + $0x8] sm:$0xff]
        %v977 = vmul.f32 %v735, %v976
        %v978 = vpack.c.bf16 %v977, %v977
        %v980 = vrot.slane %v972, 4
        %v982 = vrot.slane %v978, 4
        %vm983 = vcmask 1043456
        %v986 = vsel %vm983, %v969, %v980
        %v990 = vsel %vm983, %v975, %v982
        %v1008 = vunpack.c.l.b16 %v950
        %v1009 = vunpack.c.l.b16 %v951
        %v1010 = vunpack.c.l.b16 %v952
        %v1011 = vunpack.c.l.b16 %v953
        %v1012 = vunpack.c.l.b16 %v954
        %v1013 = vunpack.c.l.b16 %v955
        %v1014 = vunpack.c.l.b16 %v956
        %v1015 = vunpack.c.l.b16 %v957
        %v1016 = vunpack.c.l.b16 %v958
        %v1017 = vunpack.c.l.b16 %v959
        %v1018 = vunpack.c.l.b16 %v960
        %v1019 = vunpack.c.l.b16 %v961
        %v1020 = vunpack.c.l.b16 %v962
        %v1021 = vunpack.c.l.b16 %v963
        %v1022 = vunpack.c.l.b16 %v964
        %v1023 = vunpack.c.l.b16 %v965
        %v1024 = vpack.c.b16 %v1009, %v1008
        %v1025 = vpack.c.b16 %v1011, %v1010
        %v1026 = vpack.c.b16 %v1013, %v1012
        %v1027 = vpack.c.b16 %v1015, %v1014
        %v1028 = vpack.c.b16 %v1017, %v1016
        %v1029 = vpack.c.b16 %v1019, %v1018
        %v1030 = vpack.c.b16 %v1021, %v1020
        %v1031 = vpack.c.b16 %v1023, %v1022
        %1040 = vmatprep.subr.bf16.mxu0 0
        %1041 = vmatpush1.bf16.msra.mxu0 %v1024
        %1042 = vmatprep.subr.bf16.mxu0 0
        %1043 = vmatpush1.bf16.msra.mxu0 %v1025
        %1044 = vmatprep.subr.bf16.mxu0 0
        %1045 = vmatpush1.bf16.msra.mxu0 %v1026
        %1046 = vmatprep.subr.bf16.mxu0 0
        %1047 = vmatpush1.bf16.msra.mxu0 %v1027
        %1048 = vmatprep.subr.bf16.mxu0 0
        %1049 = vmatpush1.bf16.msra.mxu0 %v1028
        %1050 = vmatprep.subr.bf16.mxu0 0
        %1051 = vmatpush1.bf16.msra.mxu0 %v1029
        %1052 = vmatprep.subr.bf16.mxu0 0
        %1053 = vmatpush1.bf16.msra.mxu0 %v1030
        %1054 = vmatprep.subr.bf16.mxu0 0
        %1055 = vmatpush1.bf16.msra.mxu0 %v1031
        %1056 = vmatprep.subr.bf16.mxu0 0
        %1057 = vmatpush1.bf16.msra.mxu0 0
        %1058 = vmatprep.subr.bf16.mxu0 0
        %1059 = vmatpush1.bf16.msra.mxu0 0
        %1060 = vmatprep.subr.bf16.mxu0 0
        %1061 = vmatpush1.bf16.msra.mxu0 0
        %1062 = vmatprep.subr.bf16.mxu0 0
        %1063 = vmatpush1.bf16.msra.mxu0 0
        %1064 = vmatprep.subr.bf16.mxu0 0
        %1065 = vmatpush1.bf16.msra.mxu0 0
        %1066 = vmatprep.subr.bf16.mxu0 0
        %1067 = vmatpush1.bf16.msra.mxu0 0
        %1068 = vmatprep.subr.bf16.mxu0 0
        %1069 = vmatpush1.bf16.msra.mxu0 0
        %1070 = vmatprep.subr.bf16.mxu0 0
        %1071 = vmatpush1.bf16.msra.mxu0 0
        %1072 = vmatprep.mubr.bf16.mxu0 0
        %1073 = vmatmul.mubr.bf16.gmra.mrb[0].mxu0 %v986
        %v1074 = vpop.f32.mrb[0].mxu0
        %v1075 = vadd.f32 0.0, %v1074
        %v1076 = vpop.f32.mrb[0].mxu0
        %v1077 = vpop.f32.mrb[0].mxu0
        %v1078 = vadd.f32 0.0, %v1077
        %v1079 = vpop.f32.mrb[0].mxu0
        %1080 = vmatprep.mubr.bf16.mxu0 0
        %1081 = vmatmul.mubr.bf16.gmra.mrb[0].mxu0 %v990
        %v1082 = vpop.f32.mrb[0].mxu0
        %v1083 = vadd.f32 0.0, %v1082
        %v1084 = vpop.f32.mrb[0].mxu0
        %v1085 = vpop.f32.mrb[0].mxu0
        %v1086 = vadd.f32 0.0, %v1085
        %v1087 = vpop.f32.mrb[0].mxu0
        %1088 = vdwg.mxu0
        %v1089 = vmul.f32 %v1075, 0.17677669
        %v1090 = vmul.f32 %v1078, 0.17677669
        %v1091 = vmul.f32 %v1083, 0.17677669
        %v1092 = vmul.f32 %v1086, 0.17677669
        %v1093 = vmax.f32 %v1089, %v1090
        %v1094 = vmax.f32 %v1093, %v1091
        %v1095 = vmax.f32 %v1094, %v1092
        %v1096 = vsub.f32 %v1089, %v1095
        %v1097 = vmul.f32 %v1096, 1.442695
        %v1098 = vpow.pop %v1097
        %v1099 = vsub.f32 %v1090, %v1095
        %v1100 = vmul.f32 %v1099, 1.442695
        %v1101 = vpow.pop %v1100
        %v1102 = vsub.f32 %v1091, %v1095
        %v1103 = vmul.f32 %v1102, 1.442695
        %v1104 = vpow.pop %v1103
        %v1105 = vsub.f32 %v1092, %v1095
        %v1106 = vmul.f32 %v1105, 1.442695
        %v1107 = vpow.pop %v1106
        %v1108 = vadd.f32 %v1098, %v1101
        %v1109 = vadd.f32 %v1108, %v1104
        %v1110 = vadd.f32 %v1109, %v1107
        %v1111 = vpack.c.bf16 %v1098, %v1098
        %v1112 = vpack.c.bf16 %v1101, %v1101
        %v1113 = vpack.c.bf16 %v1104, %v1104
        %v1114 = vpack.c.bf16 %v1107, %v1107
        %v1116 = vrot.slane %v1112, 4
        %v1118 = vrot.slane %v1114, 4
        %v1121 = vsel %vm983, %v1111, %v1116
        %v1124 = vsel %vm983, %v1113, %v1118
        %vm1125 = vcmask 31744
        %v1126 = vsel %vm1125, %v1121, 0
        %v1128 = vsel %vm1125, %v1124, 0
        %vm1130 = vcmask 1041408
        %v1132 = vsel %vm1130, %v966, 0
        %1134 = vmatprep.subr.bf16.mxu0 0
        %1135 = vmatpush1.bf16.msra.mxu0 %v1132
        %1136 = vmatprep.subr.bf16.mxu0 0
        %1137 = vmatpush1.bf16.msra.mxu0 0
        %1138 = vmatprep.subr.bf16.mxu0 0
        %1139 = vmatpush1.bf16.msra.mxu0 0
        %1140 = vmatprep.subr.bf16.mxu0 0
        %1141 = vmatpush1.bf16.msra.mxu0 0
        %1142 = vmatprep.subr.bf16.mxu0 0
        %1143 = vmatpush1.bf16.msra.mxu0 0
        %1144 = vmatprep.subr.bf16.mxu0 0
        %1145 = vmatpush1.bf16.msra.mxu0 0
        %1146 = vmatprep.subr.bf16.mxu0 0
        %1147 = vmatpush1.bf16.msra.mxu0 0
        %1148 = vmatprep.subr.bf16.mxu0 0
        %1149 = vmatpush1.bf16.msra.mxu0 0
        %1150 = vmatprep.subr.bf16.mxu0 0
        %1151 = vmatpush1.bf16.msra.mxu0 0
        %1152 = vmatprep.subr.bf16.mxu0 0
        %1153 = vmatpush1.bf16.msra.mxu0 0
        %1154 = vmatprep.subr.bf16.mxu0 0
        %1155 = vmatpush1.bf16.msra.mxu0 0
        %1156 = vmatprep.subr.bf16.mxu0 0
        %1157 = vmatpush1.bf16.msra.mxu0 0
        %1158 = vmatprep.subr.bf16.mxu0 0
        %1159 = vmatpush1.bf16.msra.mxu0 0
        %1160 = vmatprep.subr.bf16.mxu0 0
        %1161 = vmatpush1.bf16.msra.mxu0 0
        %1162 = vmatprep.subr.bf16.mxu0 0
        %1163 = vmatpush1.bf16.msra.mxu0 0
        %1164 = vmatprep.subr.bf16.mxu0 0
        %1165 = vmatpush1.bf16.msra.mxu0 0
        %1166 = vmatprep.mubr.bf16.mxu0 0
        %1167 = vmatmul.mubr.bf16.gmra.mrb[0].mxu0 %v1126
        %v1168 = vpop.f32.mrb[0].mxu0
        %v1169 = vadd.f32 0.0, %v1168
        %v1170 = vpop.f32.mrb[0].mxu0
        %v1171 = vpop.f32.mrb[0].mxu0
        %v1172 = vadd.f32 0.0, %v1171
        %v1173 = vpop.f32.mrb[0].mxu0
        %1174 = vmatprep.mubr.bf16.mxu0 0
        %1175 = vmatmul.mubr.bf16.gmra.mrb[0].mxu0 %v1128
        %v1176 = vpop.f32.mrb[0].mxu0
        %v1177 = vadd.f32 0.0, %v1176
        %v1178 = vpop.f32.mrb[0].mxu0
        %v1179 = vpop.f32.mrb[0].mxu0
        %v1180 = vadd.f32 0.0, %v1179
        %v1181 = vpop.f32.mrb[0].mxu0
        %1182 = vdwg.mxu0
        %v1183 = vld [vmem:[#allocation3 + $0x5] sm:$0xff]
        %v1184 = vmul.f32 %v1169, %v1183
        %v1185 = vld [vmem:[#allocation3 + $0x6] sm:$0xff]
        %v1186 = vmul.f32 %v1172, %v1185
        %v1187 = vadd.f32 %v1184, %v1186
        %v1188 = vld [vmem:[#allocation3 + $0x7] sm:$0xff]
        %v1189 = vmul.f32 %v1177, %v1188
        %v1190 = vadd.f32 %v1187, %v1189
        %v1191 = vld [vmem:[#allocation3 + $0x8] sm:$0xff]
        %v1192 = vmul.f32 %v1180, %v1191
        %v1193 = vadd.f32 %v1190, %v1192
        %v1194 = vrcp.pop %v1110
        %v1195 = vpack.c.bf16 %v1194, %v1194
        %v1197 = vsel %vm1125, %v1195, 0
        %1199 = vmatprep.subr.bf16.mxu0 0
        %1200 = vmatpush1.bf16.msra.mxu0 %v1132
        %1201 = vmatprep.subr.bf16.mxu0 0
        %1202 = vmatpush1.bf16.msra.mxu0 0
        %1203 = vmatprep.subr.bf16.mxu0 0
        %1204 = vmatpush1.bf16.msra.mxu0 0
        %1205 = vmatprep.subr.bf16.mxu0 0
        %1206 = vmatpush1.bf16.msra.mxu0 0
        %1207 = vmatprep.subr.bf16.mxu0 0
        %1208 = vmatpush1.bf16.msra.mxu0 0
        %1209 = vmatprep.subr.bf16.mxu0 0
        %1210 = vmatpush1.bf16.msra.mxu0 0
        %1211 = vmatprep.subr.bf16.mxu0 0
        %1212 = vmatpush1.bf16.msra.mxu0 0
        %1213 = vmatprep.subr.bf16.mxu0 0
        %1214 = vmatpush1.bf16.msra.mxu0 0
        %1215 = vmatprep.subr.bf16.mxu0 0
        %1216 = vmatpush1.bf16.msra.mxu0 0
        %1217 = vmatprep.subr.bf16.mxu0 0
        %1218 = vmatpush1.bf16.msra.mxu0 0
        %1219 = vmatprep.subr.bf16.mxu0 0
        %1220 = vmatpush1.bf16.msra.mxu0 0
        %1221 = vmatprep.subr.bf16.mxu0 0
        %1222 = vmatpush1.bf16.msra.mxu0 0
        %1223 = vmatprep.subr.bf16.mxu0 0
        %1224 = vmatpush1.bf16.msra.mxu0 0
        %1225 = vmatprep.subr.bf16.mxu0 0
        %1226 = vmatpush1.bf16.msra.mxu0 0
        %1227 = vmatprep.subr.bf16.mxu0 0
        %1228 = vmatpush1.bf16.msra.mxu0 0
        %1229 = vmatprep.subr.bf16.mxu0 0
        %1230 = vmatpush1.bf16.msra.mxu0 0
        %1231 = vmatprep.mubr.bf16.mxu0 0
        %1232 = vmatmul.mubr.bf16.gmra.mrb[0].mxu0 %v1197
        %v1233 = vpop.f32.mrb[0].mxu0
        %v1234 = vadd.f32 0.0, %v1233
        %v1235 = vpop.f32.mrb[0].mxu0
        %v1236 = vpop.f32.mrb[0].mxu0
        %v1237 = vpop.f32.mrb[0].mxu0
        %1238 = vdwg.mxu0
        %v1239 = vmul.f32 %v1193, %v1234
        %v1240 = vpack.c.bf16 %v1239, %v1239
        %v1241 = vld [vmem:[#allocation10] sm:$0xf]
        %v1242 = vld [vmem:[#allocation10 + $0x4] sm:$0xf]
        %v1243 = vld [vmem:[#allocation10 + $0x8] sm:$0xf]
        %v1244 = vld [vmem:[#allocation10 + $0xc] sm:$0xf]
        %v1245 = vld [vmem:[#allocation10 + $0x10] sm:$0xf]
        %v1246 = vld [vmem:[#allocation10 + $0x14] sm:$0xf]
        %v1247 = vld [vmem:[#allocation10 + $0x18] sm:$0xf]
        %v1248 = vld [vmem:[#allocation10 + $0x1c] sm:$0xf]
        %v1249 = vld [vmem:[#allocation10 + $0x20] sm:$0xf]
        %v1250 = vld [vmem:[#allocation10 + $0x24] sm:$0xf]
        %v1251 = vld [vmem:[#allocation10 + $0x28] sm:$0xf]
        %v1252 = vld [vmem:[#allocation10 + $0x2c] sm:$0xf]
        %v1253 = vld [vmem:[#allocation10 + $0x30] sm:$0xf]
        %v1254 = vld [vmem:[#allocation10 + $0x34] sm:$0xf]
        %v1255 = vld [vmem:[#allocation10 + $0x38] sm:$0xf]
        %v1256 = vld [vmem:[#allocation10 + $0x3c] sm:$0xf]
        %v1273 = vunpack.c.l.b16 %v1241
        %v1274 = vunpack.c.l.b16 %v1242
        %v1275 = vunpack.c.l.b16 %v1243
        %v1276 = vunpack.c.l.b16 %v1244
        %v1277 = vunpack.c.l.b16 %v1245
        %v1278 = vunpack.c.l.b16 %v1246
        %v1279 = vunpack.c.l.b16 %v1247
        %v1280 = vunpack.c.l.b16 %v1248
        %v1281 = vunpack.c.l.b16 %v1249
        %v1282 = vunpack.c.l.b16 %v1250
        %v1283 = vunpack.c.l.b16 %v1251
        %v1284 = vunpack.c.l.b16 %v1252
        %v1285 = vunpack.c.l.b16 %v1253
        %v1286 = vunpack.c.l.b16 %v1254
        %v1287 = vunpack.c.l.b16 %v1255
        %v1288 = vunpack.c.l.b16 %v1256
        %v1289 = vpack.c.b16 %v1274, %v1273
        %v1290 = vpack.c.b16 %v1276, %v1275
        %v1291 = vpack.c.b16 %v1278, %v1277
        %v1292 = vpack.c.b16 %v1280, %v1279
        %v1293 = vpack.c.b16 %v1282, %v1281
        %v1294 = vpack.c.b16 %v1284, %v1283
        %v1295 = vpack.c.b16 %v1286, %v1285
        %v1296 = vpack.c.b16 %v1288, %v1287
        %1305 = vmatprep.subr.bf16.mxu0 0
        %1306 = vmatpush1.bf16.msra.mxu0 %v1289
        %1307 = vmatprep.subr.bf16.mxu0 0
        %1308 = vmatpush1.bf16.msra.mxu0 %v1290
        %1309 = vmatprep.subr.bf16.mxu0 0
        %1310 = vmatpush1.bf16.msra.mxu0 %v1291
        %1311 = vmatprep.subr.bf16.mxu0 0
        %1312 = vmatpush1.bf16.msra.mxu0 %v1292
        %1313 = vmatprep.subr.bf16.mxu0 0
        %1314 = vmatpush1.bf16.msra.mxu0 %v1293
        %1315 = vmatprep.subr.bf16.mxu0 0
        %1316 = vmatpush1.bf16.msra.mxu0 %v1294
        %1317 = vmatprep.subr.bf16.mxu0 0
        %1318 = vmatpush1.bf16.msra.mxu0 %v1295
        %1319 = vmatprep.subr.bf16.mxu0 0
        %1320 = vmatpush1.bf16.msra.mxu0 %v1296
        %1321 = vmatprep.subr.bf16.mxu0 0
        %1322 = vmatpush1.bf16.msra.mxu0 0
        %1323 = vmatprep.subr.bf16.mxu0 0
        %1324 = vmatpush1.bf16.msra.mxu0 0
        %1325 = vmatprep.subr.bf16.mxu0 0
        %1326 = vmatpush1.bf16.msra.mxu0 0
        %1327 = vmatprep.subr.bf16.mxu0 0
        %1328 = vmatpush1.bf16.msra.mxu0 0
        %1329 = vmatprep.subr.bf16.mxu0 0
        %1330 = vmatpush1.bf16.msra.mxu0 0
        %1331 = vmatprep.subr.bf16.mxu0 0
        %1332 = vmatpush1.bf16.msra.mxu0 0
        %1333 = vmatprep.subr.bf16.mxu0 0
        %1334 = vmatpush1.bf16.msra.mxu0 0
        %1335 = vmatprep.subr.bf16.mxu0 0
        %1336 = vmatpush1.bf16.msra.mxu0 0
        %1337 = vmatprep.mubr.bf16.mxu0 0
        %1338 = vmatmul.mubr.bf16.gmra.mrb[0].mxu0 %v1240
        %v1339 = vpop.f32.mrb[0].mxu0
        %v1340 = vadd.f32 %v618, %v1339
        %v1341 = vpop.f32.mrb[0].mxu0
        %v1342 = vpop.f32.mrb[0].mxu0
        %v1343 = vpop.f32.mrb[0].mxu0
        %1344 = vdwg.mxu0
        %v1345 = vmul.f32 %v1340, %v1340
        %1346 = vadd.xlane.f32.xlu0 %v1345
        %v1347 = vpop.xlane.xlu0 %1346
        %v1348 = vmul.f32 %v1347, %v622
        %v1349 = vadd.f32 %v1348, 1e-06
        %v1350 = vrsqrt.pop %v1349
        %v1351 = vmul.f32 %v1340, %v1350
        %v1352 = vld [vmem:[%s8] sm:$0x1]
        %v1354 = vlaneseq
        %v1355 = vshrl.u32 %v1354, 7
        %v1356 = vsub.s32 0, %v1355
        %v1357 = vrot.slane %v1352, %v1356
        %v1359 = vmul.f32 %v1351, %v1357
        %v1360 = vpack.c.bf16 %v1359, %v1359
        %v1361 = vld [vmem:[#allocation12] sm:$0xff]
        %v1362 = vld [vmem:[#allocation12 + $0x8] sm:$0xff]
        %v1363 = vld [vmem:[#allocation12 + $0x10] sm:$0xff]
        %v1364 = vld [vmem:[#allocation12 + $0x18] sm:$0xff]
        %v1365 = vld [vmem:[#allocation12 + $0x20] sm:$0xff]
        %v1366 = vld [vmem:[#allocation12 + $0x28] sm:$0xff]
        %v1367 = vld [vmem:[#allocation12 + $0x30] sm:$0xff]
        %v1368 = vld [vmem:[#allocation12 + $0x38] sm:$0xff]
        %v1369 = vld [vmem:[#allocation12 + $0x40] sm:$0xff]
        %v1370 = vld [vmem:[#allocation12 + $0x48] sm:$0xff]
        %v1371 = vld [vmem:[#allocation12 + $0x50] sm:$0xff]
        %v1372 = vld [vmem:[#allocation12 + $0x58] sm:$0xff]
        %v1373 = vld [vmem:[#allocation12 + $0x60] sm:$0xff]
        %v1374 = vld [vmem:[#allocation12 + $0x68] sm:$0xff]
        %v1375 = vld [vmem:[#allocation12 + $0x70] sm:$0xff]
        %v1376 = vld [vmem:[#allocation12 + $0x78] sm:$0xff]
        %v1377 = vld [vmem:[#allocation12 + $0x80] sm:$0xff]
        %v1378 = vld [vmem:[#allocation12 + $0x88] sm:$0xff]
        %v1379 = vld [vmem:[#allocation12 + $0x90] sm:$0xff]
        %v1380 = vld [vmem:[#allocation12 + $0x98] sm:$0xff]
        %v1381 = vld [vmem:[#allocation12 + $0xa0] sm:$0xff]
        %v1382 = vld [vmem:[#allocation12 + $0xa8] sm:$0xff]
        %v1383 = vld [vmem:[#allocation12 + $0xb0] sm:$0xff]
        %v1384 = vld [vmem:[#allocation12 + $0xb8] sm:$0xff]
        %v1385 = vld [vmem:[#allocation12 + $0xc0] sm:$0xff]
        %v1386 = vld [vmem:[#allocation12 + $0xc8] sm:$0xff]
        %v1387 = vld [vmem:[#allocation12 + $0xd0] sm:$0xff]
        %v1388 = vld [vmem:[#allocation12 + $0xd8] sm:$0xff]
        %v1389 = vld [vmem:[#allocation12 + $0xe0] sm:$0xff]
        %v1390 = vld [vmem:[#allocation12 + $0xe8] sm:$0xff]
        %v1391 = vld [vmem:[#allocation12 + $0xf0] sm:$0xff]
        %v1392 = vld [vmem:[#allocation12 + $0xf8] sm:$0xff]
        %v1393 = vld [vmem:[%s10] sm:$0xf]
        %v1395 = vlaneseq
        %v1396 = vshrl.u32 %v1395, 7
        %v1397 = vsub.s32 0, %v1396
        %v1398 = vrot.slane %v1393, %v1397
        %v1399 = vlaneseq
        %v1400 = vshrl.u32 %v1399, 7
        %v1401 = vsub.s32 1, %v1400
        %v1402 = vrot.slane %v1393, %v1401
        %v1403 = vlaneseq
        %v1404 = vshrl.u32 %v1403, 7
        %v1405 = vsub.s32 2, %v1404
        %v1406 = vrot.slane %v1393, %v1405
        %v1407 = vlaneseq
        %v1408 = vshrl.u32 %v1407, 7
        %v1409 = vsub.s32 3, %v1408
        %v1410 = vrot.slane %v1393, %v1409
        %v1447 = vunpack.c.l.b16 %v1361
        %v1448 = vunpack.c.h.b16 %v1361
        %v1449 = vunpack.c.l.b16 %v1362
        %v1450 = vunpack.c.h.b16 %v1362
        %v1451 = vunpack.c.l.b16 %v1363
        %v1452 = vunpack.c.h.b16 %v1363
        %v1453 = vunpack.c.l.b16 %v1364
        %v1454 = vunpack.c.h.b16 %v1364
        %v1455 = vunpack.c.l.b16 %v1365
        %v1456 = vunpack.c.h.b16 %v1365
        %v1457 = vunpack.c.l.b16 %v1366
        %v1458 = vunpack.c.h.b16 %v1366
        %v1459 = vunpack.c.l.b16 %v1367
        %v1460 = vunpack.c.h.b16 %v1367
        %v1461 = vunpack.c.l.b16 %v1368
        %v1462 = vunpack.c.h.b16 %v1368
        %v1463 = vunpack.c.l.b16 %v1369
        %v1464 = vunpack.c.h.b16 %v1369
        %v1465 = vunpack.c.l.b16 %v1370
        %v1466 = vunpack.c.h.b16 %v1370
        %v1467 = vunpack.c.l.b16 %v1371
        %v1468 = vunpack.c.h.b16 %v1371
        %v1469 = vunpack.c.l.b16 %v1372
        %v1470 = vunpack.c.h.b16 %v1372
        %v1471 = vunpack.c.l.b16 %v1373
        %v1472 = vunpack.c.h.b16 %v1373
        %v1473 = vunpack.c.l.b16 %v1374
        %v1474 = vunpack.c.h.b16 %v1374
        %v1475 = vunpack.c.l.b16 %v1375
        %v1476 = vunpack.c.h.b16 %v1375
        %v1477 = vunpack.c.l.b16 %v1376
        %v1478 = vunpack.c.h.b16 %v1376
        %v1479 = vunpack.c.l.b16 %v1377
        %v1480 = vunpack.c.h.b16 %v1377
        %v1481 = vunpack.c.l.b16 %v1378
        %v1482 = vunpack.c.h.b16 %v1378
        %v1483 = vunpack.c.l.b16 %v1379
        %v1484 = vunpack.c.h.b16 %v1379
        %v1485 = vunpack.c.l.b16 %v1380
        %v1486 = vunpack.c.h.b16 %v1380
        %v1487 = vunpack.c.l.b16 %v1381
        %v1488 = vunpack.c.h.b16 %v1381
        %v1489 = vunpack.c.l.b16 %v1382
        %v1490 = vunpack.c.h.b16 %v1382
        %v1491 = vunpack.c.l.b16 %v1383
        %v1492 = vunpack.c.h.b16 %v1383
        %v1493 = vunpack.c.l.b16 %v1384
        %v1494 = vunpack.c.h.b16 %v1384
        %v1495 = vunpack.c.l.b16 %v1385
        %v1496 = vunpack.c.h.b16 %v1385
        %v1497 = vunpack.c.l.b16 %v1386
        %v1498 = vunpack.c.h.b16 %v1386
        %v1499 = vunpack.c.l.b16 %v1387
        %v1500 = vunpack.c.h.b16 %v1387
        %v1501 = vunpack.c.l.b16 %v1388
        %v1502 = vunpack.c.h.b16 %v1388
        %v1503 = vunpack.c.l.b16 %v1389
        %v1504 = vunpack.c.h.b16 %v1389
        %v1505 = vunpack.c.l.b16 %v1390
        %v1506 = vunpack.c.h.b16 %v1390
        %v1507 = vunpack.c.l.b16 %v1391
        %v1508 = vunpack.c.h.b16 %v1391
        %v1509 = vunpack.c.l.b16 %v1392
        %v1510 = vunpack.c.h.b16 %v1392
        %v1511 = vpack.c.b16 %v1451, %v1447
        %v1512 = vpack.c.b16 %v1452, %v1448
        %v1513 = vpack.c.b16 %v1453, %v1449
        %v1514 = vpack.c.b16 %v1454, %v1450
        %v1515 = vpack.c.b16 %v1459, %v1455
        %v1516 = vpack.c.b16 %v1460, %v1456
        %v1517 = vpack.c.b16 %v1461, %v1457
        %v1518 = vpack.c.b16 %v1462, %v1458
        %v1519 = vpack.c.b16 %v1467, %v1463
        %v1520 = vpack.c.b16 %v1468, %v1464
        %v1521 = vpack.c.b16 %v1469, %v1465
        %v1522 = vpack.c.b16 %v1470, %v1466
        %v1523 = vpack.c.b16 %v1475, %v1471
        %v1524 = vpack.c.b16 %v1476, %v1472
        %v1525 = vpack.c.b16 %v1477, %v1473
        %v1526 = vpack.c.b16 %v1478, %v1474
        %v1527 = vpack.c.b16 %v1483, %v1479
        %v1528 = vpack.c.b16 %v1484, %v1480
        %v1529 = vpack.c.b16 %v1485, %v1481
        %v1530 = vpack.c.b16 %v1486, %v1482
        %v1531 = vpack.c.b16 %v1491, %v1487
        %v1532 = vpack.c.b16 %v1492, %v1488
        %v1533 = vpack.c.b16 %v1493, %v1489
        %v1534 = vpack.c.b16 %v1494, %v1490
        %v1535 = vpack.c.b16 %v1499, %v1495
        %v1536 = vpack.c.b16 %v1500, %v1496
        %v1537 = vpack.c.b16 %v1501, %v1497
        %v1538 = vpack.c.b16 %v1502, %v1498
        %v1539 = vpack.c.b16 %v1507, %v1503
        %v1540 = vpack.c.b16 %v1508, %v1504
        %v1541 = vpack.c.b16 %v1509, %v1505
        %v1542 = vpack.c.b16 %v1510, %v1506
        %1575 = vmatprep.subr.bf16.mxu0 %v1512
        %1576 = vmatpush1.bf16.msra.mxu0 %v1511
        %1577 = vmatprep.subr.bf16.mxu0 %v1516
        %1578 = vmatpush1.bf16.msra.mxu0 %v1515
        %1579 = vmatprep.subr.bf16.mxu0 %v1520
        %1580 = vmatpush1.bf16.msra.mxu0 %v1519
        %1581 = vmatprep.subr.bf16.mxu0 %v1524
        %1582 = vmatpush1.bf16.msra.mxu0 %v1523
        %1583 = vmatprep.subr.bf16.mxu0 %v1528
        %1584 = vmatpush1.bf16.msra.mxu0 %v1527
        %1585 = vmatprep.subr.bf16.mxu0 %v1532
        %1586 = vmatpush1.bf16.msra.mxu0 %v1531
        %1587 = vmatprep.subr.bf16.mxu0 %v1536
        %1588 = vmatpush1.bf16.msra.mxu0 %v1535
        %1589 = vmatprep.subr.bf16.mxu0 %v1540
        %1590 = vmatpush1.bf16.msra.mxu0 %v1539
        %1591 = vmatprep.subr.bf16.mxu0 0
        %1592 = vmatpush1.bf16.msra.mxu0 0
        %1593 = vmatprep.subr.bf16.mxu0 0
        %1594 = vmatpush1.bf16.msra.mxu0 0
        %1595 = vmatprep.subr.bf16.mxu0 0
        %1596 = vmatpush1.bf16.msra.mxu0 0
        %1597 = vmatprep.subr.bf16.mxu0 0
        %1598 = vmatpush1.bf16.msra.mxu0 0
        %1599 = vmatprep.subr.bf16.mxu0 0
        %1600 = vmatpush1.bf16.msra.mxu0 0
        %1601 = vmatprep.subr.bf16.mxu0 0
        %1602 = vmatpush1.bf16.msra.mxu0 0
        %1603 = vmatprep.subr.bf16.mxu0 0
        %1604 = vmatpush1.bf16.msra.mxu0 0
        %1605 = vmatprep.subr.bf16.mxu0 0
        %1606 = vmatpush1.bf16.msra.mxu0 0
        %1607 = vmatprep.mubr.bf16.mxu0 0
        %1608 = vmatmul.mubr.bf16.gmra.mrb[0].mxu0 %v1360
        %v1609 = vpop.f32.mrb[0].mxu0
        %v1610 = vadd.f32 %v1398, %v1609
        %v1611 = vpop.f32.mrb[0].mxu0
        %v1612 = vadd.f32 %v1402, %v1611
        %v1613 = vpop.f32.mrb[0].mxu0
        %v1614 = vpop.f32.mrb[0].mxu0
        %1615 = vdwg.mxu0
        %1616 = vmatprep.subr.bf16.mxu0 %v1514
        %1617 = vmatpush1.bf16.msra.mxu0 %v1513
        %1618 = vmatprep.subr.bf16.mxu0 %v1518
        %1619 = vmatpush1.bf16.msra.mxu0 %v1517
        %1620 = vmatprep.subr.bf16.mxu0 %v1522
        %1621 = vmatpush1.bf16.msra.mxu0 %v1521
        %1622 = vmatprep.subr.bf16.mxu0 %v1526
        %1623 = vmatpush1.bf16.msra.mxu0 %v1525
        %1624 = vmatprep.subr.bf16.mxu0 %v1530
        %1625 = vmatpush1.bf16.msra.mxu0 %v1529
        %1626 = vmatprep.subr.bf16.mxu0 %v1534
        %1627 = vmatpush1.bf16.msra.mxu0 %v1533
        %1628 = vmatprep.subr.bf16.mxu0 %v1538
        %1629 = vmatpush1.bf16.msra.mxu0 %v1537
        %1630 = vmatprep.subr.bf16.mxu0 %v1542
        %1631 = vmatpush1.bf16.msra.mxu0 %v1541
        %1632 = vmatprep.subr.bf16.mxu0 0
        %1633 = vmatpush1.bf16.msra.mxu0 0
        %1634 = vmatprep.subr.bf16.mxu0 0
        %1635 = vmatpush1.bf16.msra.mxu0 0
        %1636 = vmatprep.subr.bf16.mxu0 0
        %1637 = vmatpush1.bf16.msra.mxu0 0
        %1638 = vmatprep.subr.bf16.mxu0 0
        %1639 = vmatpush1.bf16.msra.mxu0 0
        %1640 = vmatprep.subr.bf16.mxu0 0
        %1641 = vmatpush1.bf16.msra.mxu0 0
        %1642 = vmatprep.subr.bf16.mxu0 0
        %1643 = vmatpush1.bf16.msra.mxu0 0
        %1644 = vmatprep.subr.bf16.mxu0 0
        %1645 = vmatpush1.bf16.msra.mxu0 0
        %1646 = vmatprep.subr.bf16.mxu0 0
        %1647 = vmatpush1.bf16.msra.mxu0 0
        %1648 = vmatprep.mubr.bf16.mxu0 0
        %1649 = vmatmul.mubr.bf16.gmra.mrb[0].mxu0 %v1360
        %v1650 = vpop.f32.mrb[0].mxu0
        %v1651 = vadd.f32 %v1406, %v1650
        %v1652 = vpop.f32.mrb[0].mxu0
        %v1653 = vadd.f32 %v1410, %v1652
        %v1654 = vpop.f32.mrb[0].mxu0
        %v1655 = vpop.f32.mrb[0].mxu0
        %1656 = vdwg.mxu0
        %v1657 = vxor.u32 %v1651, 2147483648
        %v1658 = vxor.u32 %v1653, 2147483648
        %v1659 = vmul.f32 %v1657, 1.442695
        %v1660 = vpow.pop %v1659
        %v1661 = vmul.f32 %v1658, 1.442695
        %v1662 = vpow.pop %v1661
        %v1663 = vadd.f32 %v1660, 1.0
        %v1664 = vadd.f32 %v1662, 1.0
        %v1665 = vrcp.pop %v1663
        %v1666 = vmul.f32 1.0, %v1665
        %v1667 = vrcp.pop %v1664
        %v1668 = vmul.f32 1.0, %v1667
        %v1669 = vmul.f32 %v1651, %v1666
        %v1670 = vmul.f32 %v1653, %v1668
        %v1671 = vmul.f32 %v1610, %v1669
        %v1672 = vmul.f32 %v1612, %v1670
        %v1673 = vpack.c.bf16 %v1671, %v1671
        %v1674 = vpack.c.bf16 %v1672, %v1672
        %v1675 = vld [vmem:[#allocation13] sm:$0xf]
        %v1676 = vld [vmem:[#allocation13 + $0x4] sm:$0xf]
        %v1677 = vld [vmem:[#allocation13 + $0x8] sm:$0xf]
        %v1678 = vld [vmem:[#allocation13 + $0xc] sm:$0xf]
        %v1679 = vld [vmem:[#allocation13 + $0x10] sm:$0xf]
        %v1680 = vld [vmem:[#allocation13 + $0x14] sm:$0xf]
        %v1681 = vld [vmem:[#allocation13 + $0x18] sm:$0xf]
        %v1682 = vld [vmem:[#allocation13 + $0x1c] sm:$0xf]
        %v1683 = vld [vmem:[#allocation13 + $0x20] sm:$0xf]
        %v1684 = vld [vmem:[#allocation13 + $0x24] sm:$0xf]
        %v1685 = vld [vmem:[#allocation13 + $0x28] sm:$0xf]
        %v1686 = vld [vmem:[#allocation13 + $0x2c] sm:$0xf]
        %v1687 = vld [vmem:[#allocation13 + $0x30] sm:$0xf]
        %v1688 = vld [vmem:[#allocation13 + $0x34] sm:$0xf]
        %v1689 = vld [vmem:[#allocation13 + $0x38] sm:$0xf]
        %v1690 = vld [vmem:[#allocation13 + $0x3c] sm:$0xf]
        %v1691 = vld [vmem:[#allocation13 + $0x40] sm:$0xf]
        %v1692 = vld [vmem:[#allocation13 + $0x44] sm:$0xf]
        %v1693 = vld [vmem:[#allocation13 + $0x48] sm:$0xf]
        %v1694 = vld [vmem:[#allocation13 + $0x4c] sm:$0xf]
        %v1695 = vld [vmem:[#allocation13 + $0x50] sm:$0xf]
        %v1696 = vld [vmem:[#allocation13 + $0x54] sm:$0xf]
        %v1697 = vld [vmem:[#allocation13 + $0x58] sm:$0xf]
        %v1698 = vld [vmem:[#allocation13 + $0x5c] sm:$0xf]
        %v1699 = vld [vmem:[#allocation13 + $0x60] sm:$0xf]
        %v1700 = vld [vmem:[#allocation13 + $0x64] sm:$0xf]
        %v1701 = vld [vmem:[#allocation13 + $0x68] sm:$0xf]
        %v1702 = vld [vmem:[#allocation13 + $0x6c] sm:$0xf]
        %v1703 = vld [vmem:[#allocation13 + $0x70] sm:$0xf]
        %v1704 = vld [vmem:[#allocation13 + $0x74] sm:$0xf]
        %v1705 = vld [vmem:[#allocation13 + $0x78] sm:$0xf]
        %v1706 = vld [vmem:[#allocation13 + $0x7c] sm:$0xf]
        %v1707 = vld [vmem:[%s12] sm:$0x1]
        %v1709 = vlaneseq
        %v1710 = vshrl.u32 %v1709, 7
        %v1711 = vsub.s32 0, %v1710
        %v1712 = vrot.slane %v1707, %v1711
        %v1746 = vunpack.c.l.b16 %v1675
        %v1747 = vunpack.c.l.b16 %v1676
        %v1748 = vunpack.c.l.b16 %v1677
        %v1749 = vunpack.c.l.b16 %v1678
        %v1750 = vunpack.c.l.b16 %v1679
        %v1751 = vunpack.c.l.b16 %v1680
        %v1752 = vunpack.c.l.b16 %v1681
        %v1753 = vunpack.c.l.b16 %v1682
        %v1754 = vunpack.c.l.b16 %v1683
        %v1755 = vunpack.c.l.b16 %v1684
        %v1756 = vunpack.c.l.b16 %v1685
        %v1757 = vunpack.c.l.b16 %v1686
        %v1758 = vunpack.c.l.b16 %v1687
        %v1759 = vunpack.c.l.b16 %v1688
        %v1760 = vunpack.c.l.b16 %v1689
        %v1761 = vunpack.c.l.b16 %v1690
        %v1762 = vunpack.c.l.b16 %v1691
        %v1763 = vunpack.c.l.b16 %v1692
        %v1764 = vunpack.c.l.b16 %v1693
        %v1765 = vunpack.c.l.b16 %v1694
        %v1766 = vunpack.c.l.b16 %v1695
        %v1767 = vunpack.c.l.b16 %v1696
        %v1768 = vunpack.c.l.b16 %v1697
        %v1769 = vunpack.c.l.b16 %v1698
        %v1770 = vunpack.c.l.b16 %v1699
        %v1771 = vunpack.c.l.b16 %v1700
        %v1772 = vunpack.c.l.b16 %v1701
        %v1773 = vunpack.c.l.b16 %v1702
        %v1774 = vunpack.c.l.b16 %v1703
        %v1775 = vunpack.c.l.b16 %v1704
        %v1776 = vunpack.c.l.b16 %v1705
        %v1777 = vunpack.c.l.b16 %v1706
        %v1778 = vpack.c.b16 %v1747, %v1746
        %v1779 = vpack.c.b16 %v1749, %v1748
        %v1780 = vpack.c.b16 %v1751, %v1750
        %v1781 = vpack.c.b16 %v1753, %v1752
        %v1782 = vpack.c.b16 %v1755, %v1754
        %v1783 = vpack.c.b16 %v1757, %v1756
        %v1784 = vpack.c.b16 %v1759, %v1758
        %v1785 = vpack.c.b16 %v1761, %v1760
        %v1786 = vpack.c.b16 %v1763, %v1762
        %v1787 = vpack.c.b16 %v1765, %v1764
        %v1788 = vpack.c.b16 %v1767, %v1766
        %v1789 = vpack.c.b16 %v1769, %v1768
        %v1790 = vpack.c.b16 %v1771, %v1770
        %v1791 = vpack.c.b16 %v1773, %v1772
        %v1792 = vpack.c.b16 %v1775, %v1774
        %v1793 = vpack.c.b16 %v1777, %v1776
        %1810 = vmatprep.subr.bf16.mxu0 0
        %1811 = vmatpush1.bf16.msra.mxu0 %v1778
        %1812 = vmatprep.subr.bf16.mxu0 0
        %1813 = vmatpush1.bf16.msra.mxu0 %v1779
        %1814 = vmatprep.subr.bf16.mxu0 0
        %1815 = vmatpush1.bf16.msra.mxu0 %v1780
        %1816 = vmatprep.subr.bf16.mxu0 0
        %1817 = vmatpush1.bf16.msra.mxu0 %v1781
        %1818 = vmatprep.subr.bf16.mxu0 0
        %1819 = vmatpush1.bf16.msra.mxu0 %v1782
        %1820 = vmatprep.subr.bf16.mxu0 0
        %1821 = vmatpush1.bf16.msra.mxu0 %v1783
        %1822 = vmatprep.subr.bf16.mxu0 0
        %1823 = vmatpush1.bf16.msra.mxu0 %v1784
        %1824 = vmatprep.subr.bf16.mxu0 0
        %1825 = vmatpush1.bf16.msra.mxu0 %v1785
        %1826 = vmatprep.subr.bf16.mxu0 0
        %1827 = vmatpush1.bf16.msra.mxu0 %v1786
        %1828 = vmatprep.subr.bf16.mxu0 0
        %1829 = vmatpush1.bf16.msra.mxu0 %v1787
        %1830 = vmatprep.subr.bf16.mxu0 0
        %1831 = vmatpush1.bf16.msra.mxu0 %v1788
        %1832 = vmatprep.subr.bf16.mxu0 0
        %1833 = vmatpush1.bf16.msra.mxu0 %v1789
        %1834 = vmatprep.subr.bf16.mxu0 0
        %1835 = vmatpush1.bf16.msra.mxu0 %v1790
        %1836 = vmatprep.subr.bf16.mxu0 0
        %1837 = vmatpush1.bf16.msra.mxu0 %v1791
        %1838 = vmatprep.subr.bf16.mxu0 0
        %1839 = vmatpush1.bf16.msra.mxu0 %v1792
        %1840 = vmatprep.subr.bf16.mxu0 0
        %1841 = vmatpush1.bf16.msra.mxu0 %v1793
        %1842 = vmatprep.mubr.bf16.mxu0 %v1674
        %1843 = vmatmul.mubr.bf16.gmra.mrb[0].mxu0 %v1673
        %v1844 = vpop.f32.mrb[0].mxu0
        %v1845 = vadd.f32 %v1712, %v1844
        %v1846 = vpop.f32.mrb[0].mxu0
        %v1847 = vpop.f32.mrb[0].mxu0
        %v1848 = vpop.f32.mrb[0].mxu0
        %1849 = vdwg.mxu0
        %v1850 = vadd.f32 %v1845, %v1340
        %1851 = vst [vmem:[%s600] sm:$0xff] %v1850
        %s1852 = sand.u32 %s379, 1
        %s1853 = scalar_lea.sflag [#allocation6], %s1852
        %s1854 = sand.u32 %s379, 1
        %s1855 = smul.addr %s1854, 8
        %s1856 = scalar_lea.vmem [#allocation15], %s1855
        // Predicated region
        $region113: #{tpu_custom_call.1} parent=79 // pred_check
          %p1857 = pneg %p389
        $region114: #{tpu_custom_call.1} parent=79 // pred_check_branch
          %1859 = sbr.rel (%p1857) target = $region116
        $region115: #{tpu_custom_call.1} parent=79 // pred_region
          %s1861 = ssub.s32 128, 128
          %1862 = vsyncadd %s1853, %s1861
          %s1863 = smul.addr %s39, 2
          %s1864 = sadd.s32 %s40, %s1863
          %s1865 = smul.addr %s1864, 128
          %s1866 = scalar_lea.hbm %s15, %s1865
          %s1868 = sshll.u32 %s1856, 4
          %s1869 = int_to_ptr.vmem [resolvable:$true] %s1868
          %1871 = dma.vmem_to_hbm [thread:$0]  %s1869, 128, %s1866, %s1853
        $region116: #{tpu_custom_call.1} parent=79 // pred_fallthru
          _
      $region80: #{tpu_custom_call.1} parent=5 // pred_fallthru
        _
      %p1872 = scmp.le.s32.totalorder 2, %s30
      // Predicated region
      $region117: #{tpu_custom_call.1} parent=5 // pred_check
        %p1873 = pneg %p1872
      $region118: #{tpu_custom_call.1} parent=5 // pred_check_branch
        %1875 = sbr.rel (%p1873) target = $region120
      $region119: #{tpu_custom_call.1} parent=5 // pred_region
        %s1876 = ssub.s32 %s30, 2
        // Predicated region
        $region121: #{tpu_custom_call.1} parent=119 // pred_check
          %p1877 = pneg %p395
        $region122: #{tpu_custom_call.1} parent=119 // pred_check_branch
          %1879 = sbr.rel (%p1877) target = $region124
        $region123: #{tpu_custom_call.1} parent=119 // pred_region
          %s1880 = sand.u32 %s380, 1
          %s1881 = scalar_lea.sflag [#allocation6], %s1880
          %s1882 = sand.u32 %s380, 1
          %s1883 = smul.addr %s1882, 8
          %s1884 = scalar_lea.vmem [#allocation15], %s1883
          %1885 = dma.done %s1881, 128
        $region124: #{tpu_custom_call.1} parent=119 // pred_fallthru
          _
      $region120: #{tpu_custom_call.1} parent=5 // pred_fallthru
        _
    $region6: #{tpu_custom_call.1} parent=1 // loop_footer
      %s34 = sadd.s32 1, %s30
    $region7: #{tpu_custom_call.1} parent=1 // loop_footer_branch
      %29 = sbr.rel target = $region3
    $region8: #{tpu_custom_call.1} parent=1 // loop_exit
      _
    %1886 = vsyncpa [#allocation5], 1
    %s1887 = scalar_lea.sflag [#allocation5], 1
    %1888 = vsyncpa %s1887, 1
    %1889 = vsyncpa [#allocation8], 1
    %1890 = vsyncpa [#allocation11], 1
    %1891 = vsyncpa [#allocation14], 1
    %1892 = vsyncpa [#allocation6], 1
    %s1893 = scalar_lea.sflag [#allocation6], 1
    %1894 = vsyncpa %s1893, 1

// kernel: tpu_custom_call.1
$region0: #{tpu_custom_call.1}
  #allocation0 [shape = 'u32[]', space=smem, size = 0x4, offset = 0x4, fixed_abs, tag = 'smem constant byte address 0x4 - core index']
  #allocation1 [shape = 'u32[144,128]{1,0:T(1,128)}', space=vmem, size = 0x12000, scoped, tag = 'internal scratch']
  #allocation2 [shape = 'f32[16,128]{1,0:T(8,128)}', space=vmem, size = 0x2000, scoped, tag = 'scratch operand']
  #allocation3 [shape = 'f32[16,128]{1,0:T(8,128)}', space=vmem, size = 0x2000, scoped, tag = 'scratch operand']
  %s0 = inlined_call_operand.hbm [shape: f32[2,16,128], index: 0, kind: input, shape index: {}]
  %s1 = inlined_call_operand.vmem [shape: bf16[128,128], index: 1, kind: input, shape index: {}]
  %s2 = inlined_call_operand.hbm [shape: bf16[128,128], index: 2, kind: input, shape index: {}]
  %s3 = inlined_call_operand.hbm [shape: bf16[128,128], index: 3, kind: input, shape index: {}]
  %s4 = inlined_call_operand.hbm [shape: bf16[128,128], index: 4, kind: input, shape index: {}]
  %s5 = inlined_call_operand.vmem [shape: f32[8,128], index: 5, kind: input, shape index: {}]
  %s6 = inlined_call_operand.vmem [shape: f32[8,128], index: 6, kind: input, shape index: {}]
  %s7 = inlined_call_operand.vmem [shape: f32[1,128], index: 7, kind: input, shape index: {}]
  %s8 = inlined_call_operand.vmem [shape: f32[1,128], index: 8, kind: input, shape index: {}]
  %s9 = inlined_call_operand.hbm [shape: bf16[128,512], index: 9, kind: input, shape index: {}]
  %s10 = inlined_call_operand.vmem [shape: f32[1,512], index: 10, kind: input, shape index: {}]
  %s11 = inlined_call_operand.hbm [shape: bf16[256,128], index: 11, kind: input, shape index: {}]
  %s12 = inlined_call_operand.vmem [shape: f32[1,128], index: 12, kind: input, shape index: {}]
  %s13 = inlined_call_operand.vmem [shape: bf16[128,4], index: 13, kind: input, shape index: {}]
  %s14 = inlined_call_operand.vmem [shape: bf16[4,128], index: 14, kind: input, shape index: {}]
  %s15 = inlined_call_operand.hbm [shape: f32[2,16,128], index: 15, kind: output, shape index: {}]
  %s16 = sld [smem:[#allocation0]]
  $region125: #{tpu_custom_call.1} parent=0
    _
  %s18 = ssub.s32 1, %s16
  %s19 = scalar_select 0, %s18, %s16
  $region1: #{tpu_custom_call.1} parent=0
    #allocation4 [shape = 'u8[8192]{0}', space=vmem, size = 0x2000, scoped, tag = 'input window, operand 0']
    #allocation5 [shape = 's32[2]{0}', space=sflag, size = 0x8, scoped, tag = 'scoped memory for tpu_custom_call.1']
    #allocation6 [shape = 's32[2]{0}', space=sflag, size = 0x8, scoped, tag = 'scoped memory for tpu_custom_call.1']
    #allocation7 [shape = 'u8[32768]{0}', space=vmem, size = 0x8000, scoped, tag = 'input window, operand 2, single buffered']
    #allocation8 [shape = 's32[1]{0}', space=sflag, size = 0x4, scoped, tag = 'scoped memory for tpu_custom_call.1']
    #allocation9 [shape = 'u8[32768]{0}', space=vmem, size = 0x8000, scoped, tag = 'input window, operand 3, single buffered']
    #allocation10 [shape = 'u8[32768]{0}', space=vmem, size = 0x8000, scoped, tag = 'input window, operand 4, single buffered']
    #allocation11 [shape = 's32[1]{0}', space=sflag, size = 0x4, scoped, tag = 'scoped memory for tpu_custom_call.1']
    #allocation12 [shape = 'u8[131072]{0}', space=vmem, size = 0x20000, scoped, tag = 'input window, operand 9, single buffered']
    #allocation13 [shape = 'u8[65536]{0}', space=vmem, size = 0x10000, scoped, tag = 'input window, operand 11, single buffered']
    #allocation14 [shape = 's32[1]{0}', space=sflag, size = 0x4, scoped, tag = 'scoped memory for tpu_custom_call.1']
    #allocation15 [shape = 'u8[8192]{0}', space=vmem, size = 0x2000, scoped, tag = 'output window, operand 0']
    %20 = vsyncpa [#allocation5], 0
    %s21 = scalar_lea.sflag [#allocation5], 1
    %22 = vsyncpa %s21, 0
    %23 = vsyncpa [#allocation8], 0
    %24 = vsyncpa [#allocation11], 0
    %25 = vsyncpa [#allocation14], 0
    %26 = vsyncpa [#allocation6], 0
    %s27 = scalar_lea.sflag [#allocation6], 1
    %28 = vsyncpa %s27, 0
    loop: start=0, step=1, limit=6
    $region2: #{tpu_custom_call.1} parent=1 // loop_pre_header
      _
    $region3: #{tpu_custom_call.1} parent=1 // loop_header
      %s30 = sphi 0, %s34
      %p31 = scmp.ge.s32.totalorder %s30, 6
      %s37 = sphi 0, %s49
      %s38 = sphi 0, %s45
      %s39 = sphi 0, %s37
      %s40 = sphi 0, %s38
      %s41 = sphi 0, %s39
      %s42 = sphi 0, %s40
      %s54 = sphi 0, %s56
      %s57 = sphi 0, %s54
      %s58 = sphi 0, %s57
      %s74 = sphi 0, %s58
      %s78 = sphi 0, %s78
      %s80 = sphi 0, %s78
      %s81 = sphi 0, %s80
      %s95 = sphi 0, %s81
      %s99 = sphi 0, %s99
      %s101 = sphi 0, %s99
      %s102 = sphi 0, %s101
      %s116 = sphi 0, %s102
      %s120 = sphi 0, %s120
      %s122 = sphi 0, %s120
      %s123 = sphi 0, %s122
      %s137 = sphi 0, %s123
      %s141 = sphi 0, %s141
      %s143 = sphi 0, %s141
      %s144 = sphi 0, %s143
      %s158 = sphi 0, %s144
      %s162 = sphi 0, %s162
      %s164 = sphi 0, %s162
      %s165 = sphi 0, %s164
      %s179 = sphi 0, %s165
      %s183 = sphi 0, %s183
      %s185 = sphi 0, %s183
      %s186 = sphi 0, %s185
      %s200 = sphi 0, %s186
      %s204 = sphi 0, %s204
      %s206 = sphi 0, %s204
      %s207 = sphi 0, %s206
      %s221 = sphi 0, %s207
      %s225 = sphi 0, %s225
      %s227 = sphi 0, %s225
      %s228 = sphi 0, %s227
      %s242 = sphi 0, %s228
      %s246 = sphi 0, %s246
      %s248 = sphi 0, %s246
      %s249 = sphi 0, %s248
      %s263 = sphi 0, %s249
      %s267 = sphi 0, %s267
      %s269 = sphi 0, %s267
      %s270 = sphi 0, %s269
      %s284 = sphi 0, %s270
      %s288 = sphi 0, %s288
      %s290 = sphi 0, %s288
      %s291 = sphi 0, %s290
      %s305 = sphi 0, %s291
      %s309 = sphi 0, %s309
      %s311 = sphi 0, %s309
      %s312 = sphi 0, %s311
      %s326 = sphi 0, %s312
      %s330 = sphi 0, %s330
      %s332 = sphi 0, %s330
      %s333 = sphi 0, %s332
      %s347 = sphi 0, %s333
      %s351 = sphi 0, %s351
      %s353 = sphi 0, %s351
      %s354 = sphi 0, %s353
      %s368 = sphi 0, %s354
      %s376 = sphi 0, %s378
      %s379 = sphi 0, %s376
      %s380 = sphi 0, %s379
      %s396 = sphi 0, %s380
    $region4: #{tpu_custom_call.1} parent=1 // loop_header_branch
      %33 = sbr.rel (%p31) target = $region8
    $region5: #{tpu_custom_call.1} parent=1 // loop_body
      %s35 = ssub.s32 %s30, 1
      %s36 = ssub.s32 %s30, 2
      %s43 = sadd.s32 1, %s38
      %p44 = scmp.ge.s32.totalorder %s43, 2
      %s45 = scalar_select %p44, 0, %s43
      %s46 = sadd.s32 1, %s37
      %s47 = scalar_select %p44, %s46, %s37
      %p48 = scmp.ge.s32.totalorder %s47, 2
      %s49 = scalar_select %p48, 0, %s47
      %s50 = ssub.s32 %s37, %s49
      %s51 = ssub.s32 %s38, %s45
      %s52 = sor.u32 %s50, %s51
      %p53 = scmp.eq.s32.totalorder %s52, 0
      %s55 = sadd.s32 %s54, 1
      %s56 = scalar_select %p53, %s54, %s55
      %p59 = pneg %p53
      %p60 = scmp.eq.s32.totalorder %s30, 3
      %p61 = por %p59, %p60
      %p62 = scmp.ne.s32.totalorder %s54, %s57
      %p63 = scmp.eq.s32.totalorder %s30, 0
      %p64 = por %p62, %p63
      %p65 = scmp.ne.s32.totalorder %s54, %s57
      %p66 = scmp.eq.s32.totalorder %s35, 3
      %p67 = por %p65, %p66
      %p68 = scmp.ne.s32.totalorder %s57, %s58
      %p69 = scmp.eq.s32.totalorder %s35, 0
      %p70 = por %p68, %p69
      %p71 = scmp.ne.s32.totalorder %s57, %s58
      %p72 = scmp.eq.s32.totalorder %s36, 3
      %p73 = por %p71, %p72
      %p75 = scmp.ne.s32.totalorder %s58, %s74
      %p76 = scmp.eq.s32.totalorder %s36, 0
      %p77 = por %p75, %p76
      %s79 = sadd.s32 %s78, 1
      %p82 = scmp.eq.s32.totalorder %s30, 3
      %p83 = scmp.ne.s32.totalorder %s78, %s80
      %p84 = scmp.eq.s32.totalorder %s30, 0
      %p85 = por %p83, %p84
      %p86 = scmp.ne.s32.totalorder %s78, %s80
      %p87 = scmp.eq.s32.totalorder %s35, 3
      %p88 = por %p86, %p87
      %p89 = scmp.ne.s32.totalorder %s80, %s81
      %p90 = scmp.eq.s32.totalorder %s35, 0
      %p91 = por %p89, %p90
      %p92 = scmp.ne.s32.totalorder %s80, %s81
      %p93 = scmp.eq.s32.totalorder %s36, 3
      %p94 = por %p92, %p93
      %p96 = scmp.ne.s32.totalorder %s81, %s95
      %p97 = scmp.eq.s32.totalorder %s36, 0
      %p98 = por %p96, %p97
      %s100 = sadd.s32 %s99, 1
      %p103 = scmp.eq.s32.totalorder %s30, 3
      %p104 = scmp.ne.s32.totalorder %s99, %s101
      %p105 = scmp.eq.s32.totalorder %s30, 0
      %p106 = por %p104, %p105
      %p107 = scmp.ne.s32.totalorder %s99, %s101
      %p108 = scmp.eq.s32.totalorder %s35, 3
      %p109 = por %p107, %p108
      %p110 = scmp.ne.s32.totalorder %s101, %s102
      %p111 = scmp.eq.s32.totalorder %s35, 0
      %p112 = por %p110, %p111
      %p113 = scmp.ne.s32.totalorder %s101, %s102
      %p114 = scmp.eq.s32.totalorder %s36, 3
      %p115 = por %p113, %p114
      %p117 = scmp.ne.s32.totalorder %s102, %s116
      %p118 = scmp.eq.s32.totalorder %s36, 0
      %p119 = por %p117, %p118
      %s121 = sadd.s32 %s120, 1
      %p124 = scmp.eq.s32.totalorder %s30, 3
      %p125 = scmp.ne.s32.totalorder %s120, %s122
      %p126 = scmp.eq.s32.totalorder %s30, 0
      %p127 = por %p125, %p126
      %p128 = scmp.ne.s32.totalorder %s120, %s122
      %p129 = scmp.eq.s32.totalorder %s35, 3
      %p130 = por %p128, %p129
      %p131 = scmp.ne.s32.totalorder %s122, %s123
      %p132 = scmp.eq.s32.totalorder %s35, 0
      %p133 = por %p131, %p132
      %p134 = scmp.ne.s32.totalorder %s122, %s123
      %p135 = scmp.eq.s32.totalorder %s36, 3
      %p136 = por %p134, %p135
      %p138 = scmp.ne.s32.totalorder %s123, %s137
      %p139 = scmp.eq.s32.totalorder %s36, 0
      %p140 = por %p138, %p139
      %s142 = sadd.s32 %s141, 1
      %p145 = scmp.eq.s32.totalorder %s30, 3
      %p146 = scmp.ne.s32.totalorder %s141, %s143
      %p147 = scmp.eq.s32.totalorder %s30, 0
      %p148 = por %p146, %p147
      %p149 = scmp.ne.s32.totalorder %s141, %s143
      %p150 = scmp.eq.s32.totalorder %s35, 3
      %p151 = por %p149, %p150
      %p152 = scmp.ne.s32.totalorder %s143, %s144
      %p153 = scmp.eq.s32.totalorder %s35, 0
      %p154 = por %p152, %p153
      %p155 = scmp.ne.s32.totalorder %s143, %s144
      %p156 = scmp.eq.s32.totalorder %s36, 3
      %p157 = por %p155, %p156
      %p159 = scmp.ne.s32.totalorder %s144, %s158
      %p160 = scmp.eq.s32.totalorder %s36, 0
      %p161 = por %p159, %p160
      %s163 = sadd.s32 %s162, 1
      %p166 = scmp.eq.s32.totalorder %s30, 3
      %p167 = scmp.ne.s32.totalorder %s162, %s164
      %p168 = scmp.eq.s32.totalorder %s30, 0
      %p169 = por %p167, %p168
      %p170 = scmp.ne.s32.totalorder %s162, %s164
      %p171 = scmp.eq.s32.totalorder %s35, 3
      %p172 = por %p170, %p171
      %p173 = scmp.ne.s32.totalorder %s164, %s165
      %p174 = scmp.eq.s32.totalorder %s35, 0
      %p175 = por %p173, %p174
      %p176 = scmp.ne.s32.totalorder %s164, %s165
      %p177 = scmp.eq.s32.totalorder %s36, 3
      %p178 = por %p176, %p177
      %p180 = scmp.ne.s32.totalorder %s165, %s179
      %p181 = scmp.eq.s32.totalorder %s36, 0
      %p182 = por %p180, %p181
      %s184 = sadd.s32 %s183, 1
      %p187 = scmp.eq.s32.totalorder %s30, 3
      %p188 = scmp.ne.s32.totalorder %s183, %s185
      %p189 = scmp.eq.s32.totalorder %s30, 0
      %p190 = por %p188, %p189
      %p191 = scmp.ne.s32.totalorder %s183, %s185
      %p192 = scmp.eq.s32.totalorder %s35, 3
      %p193 = por %p191, %p192
      %p194 = scmp.ne.s32.totalorder %s185, %s186
      %p195 = scmp.eq.s32.totalorder %s35, 0
      %p196 = por %p194, %p195
      %p197 = scmp.ne.s32.totalorder %s185, %s186
      %p198 = scmp.eq.s32.totalorder %s36, 3
      %p199 = por %p197, %p198
      %p201 = scmp.ne.s32.totalorder %s186, %s200
      %p202 = scmp.eq.s32.totalorder %s36, 0
      %p203 = por %p201, %p202
      %s205 = sadd.s32 %s204, 1
      %p208 = scmp.eq.s32.totalorder %s30, 3
      %p209 = scmp.ne.s32.totalorder %s204, %s206
      %p210 = scmp.eq.s32.totalorder %s30, 0
      %p211 = por %p209, %p210
      %p212 = scmp.ne.s32.totalorder %s204, %s206
      %p213 = scmp.eq.s32.totalorder %s35, 3
      %p214 = por %p212, %p213
      %p215 = scmp.ne.s32.totalorder %s206, %s207
      %p216 = scmp.eq.s32.totalorder %s35, 0
      %p217 = por %p215, %p216
      %p218 = scmp.ne.s32.totalorder %s206, %s207
      %p219 = scmp.eq.s32.totalorder %s36, 3
      %p220 = por %p218, %p219
      %p222 = scmp.ne.s32.totalorder %s207, %s221
      %p223 = scmp.eq.s32.totalorder %s36, 0
      %p224 = por %p222, %p223
      %s226 = sadd.s32 %s225, 1
      %p229 = scmp.eq.s32.totalorder %s30, 3
      %p230 = scmp.ne.s32.totalorder %s225, %s227
      %p231 = scmp.eq.s32.totalorder %s30, 0
      %p232 = por %p230, %p231
      %p233 = scmp.ne.s32.totalorder %s225, %s227
      %p234 = scmp.eq.s32.totalorder %s35, 3
      %p235 = por %p233, %p234
      %p236 = scmp.ne.s32.totalorder %s227, %s228
      %p237 = scmp.eq.s32.totalorder %s35, 0
      %p238 = por %p236, %p237
      %p239 = scmp.ne.s32.totalorder %s227, %s228
      %p240 = scmp.eq.s32.totalorder %s36, 3
      %p241 = por %p239, %p240
      %p243 = scmp.ne.s32.totalorder %s228, %s242
      %p244 = scmp.eq.s32.totalorder %s36, 0
      %p245 = por %p243, %p244
      %s247 = sadd.s32 %s246, 1
      %p250 = scmp.eq.s32.totalorder %s30, 3
      %p251 = scmp.ne.s32.totalorder %s246, %s248
      %p252 = scmp.eq.s32.totalorder %s30, 0
      %p253 = por %p251, %p252
      %p254 = scmp.ne.s32.totalorder %s246, %s248
      %p255 = scmp.eq.s32.totalorder %s35, 3
      %p256 = por %p254, %p255
      %p257 = scmp.ne.s32.totalorder %s248, %s249
      %p258 = scmp.eq.s32.totalorder %s35, 0
      %p259 = por %p257, %p258
      %p260 = scmp.ne.s32.totalorder %s248, %s249
      %p261 = scmp.eq.s32.totalorder %s36, 3
      %p262 = por %p260, %p261
      %p264 = scmp.ne.s32.totalorder %s249, %s263
      %p265 = scmp.eq.s32.totalorder %s36, 0
      %p266 = por %p264, %p265
      %s268 = sadd.s32 %s267, 1
      %p271 = scmp.eq.s32.totalorder %s30, 3
      %p272 = scmp.ne.s32.totalorder %s267, %s269
      %p273 = scmp.eq.s32.totalorder %s30, 0
      %p274 = por %p272, %p273
      %p275 = scmp.ne.s32.totalorder %s267, %s269
      %p276 = scmp.eq.s32.totalorder %s35, 3
      %p277 = por %p275, %p276
      %p278 = scmp.ne.s32.totalorder %s269, %s270
      %p279 = scmp.eq.s32.totalorder %s35, 0
      %p280 = por %p278, %p279
      %p281 = scmp.ne.s32.totalorder %s269, %s270
      %p282 = scmp.eq.s32.totalorder %s36, 3
      %p283 = por %p281, %p282
      %p285 = scmp.ne.s32.totalorder %s270, %s284
      %p286 = scmp.eq.s32.totalorder %s36, 0
      %p287 = por %p285, %p286
      %s289 = sadd.s32 %s288, 1
      %p292 = scmp.eq.s32.totalorder %s30, 3
      %p293 = scmp.ne.s32.totalorder %s288, %s290
      %p294 = scmp.eq.s32.totalorder %s30, 0
      %p295 = por %p293, %p294
      %p296 = scmp.ne.s32.totalorder %s288, %s290
      %p297 = scmp.eq.s32.totalorder %s35, 3
      %p298 = por %p296, %p297
      %p299 = scmp.ne.s32.totalorder %s290, %s291
      %p300 = scmp.eq.s32.totalorder %s35, 0
      %p301 = por %p299, %p300
      %p302 = scmp.ne.s32.totalorder %s290, %s291
      %p303 = scmp.eq.s32.totalorder %s36, 3
      %p304 = por %p302, %p303
      %p306 = scmp.ne.s32.totalorder %s291, %s305
      %p307 = scmp.eq.s32.totalorder %s36, 0
      %p308 = por %p306, %p307
      %s310 = sadd.s32 %s309, 1
      %p313 = scmp.eq.s32.totalorder %s30, 3
      %p314 = scmp.ne.s32.totalorder %s309, %s311
      %p315 = scmp.eq.s32.totalorder %s30, 0
      %p316 = por %p314, %p315
      %p317 = scmp.ne.s32.totalorder %s309, %s311
      %p318 = scmp.eq.s32.totalorder %s35, 3
      %p319 = por %p317, %p318
      %p320 = scmp.ne.s32.totalorder %s311, %s312
      %p321 = scmp.eq.s32.totalorder %s35, 0
      %p322 = por %p320, %p321
      %p323 = scmp.ne.s32.totalorder %s311, %s312
      %p324 = scmp.eq.s32.totalorder %s36, 3
      %p325 = por %p323, %p324
      %p327 = scmp.ne.s32.totalorder %s312, %s326
      %p328 = scmp.eq.s32.totalorder %s36, 0
      %p329 = por %p327, %p328
      %s331 = sadd.s32 %s330, 1
      %p334 = scmp.eq.s32.totalorder %s30, 3
      %p335 = scmp.ne.s32.totalorder %s330, %s332
      %p336 = scmp.eq.s32.totalorder %s30, 0
      %p337 = por %p335, %p336
      %p338 = scmp.ne.s32.totalorder %s330, %s332
      %p339 = scmp.eq.s32.totalorder %s35, 3
      %p340 = por %p338, %p339
      %p341 = scmp.ne.s32.totalorder %s332, %s333
      %p342 = scmp.eq.s32.totalorder %s35, 0
      %p343 = por %p341, %p342
      %p344 = scmp.ne.s32.totalorder %s332, %s333
      %p345 = scmp.eq.s32.totalorder %s36, 3
      %p346 = por %p344, %p345
      %p348 = scmp.ne.s32.totalorder %s333, %s347
      %p349 = scmp.eq.s32.totalorder %s36, 0
      %p350 = por %p348, %p349
      %s352 = sadd.s32 %s351, 1
      %p355 = scmp.eq.s32.totalorder %s30, 3
      %p356 = scmp.ne.s32.totalorder %s351, %s353
      %p357 = scmp.eq.s32.totalorder %s30, 0
      %p358 = por %p356, %p357
      %p359 = scmp.ne.s32.totalorder %s351, %s353
      %p360 = scmp.eq.s32.totalorder %s35, 3
      %p361 = por %p359, %p360
      %p362 = scmp.ne.s32.totalorder %s353, %s354
      %p363 = scmp.eq.s32.totalorder %s35, 0
      %p364 = por %p362, %p363
      %p365 = scmp.ne.s32.totalorder %s353, %s354
      %p366 = scmp.eq.s32.totalorder %s36, 3
      %p367 = por %p365, %p366
      %p369 = scmp.ne.s32.totalorder %s354, %s368
      %p370 = scmp.eq.s32.totalorder %s36, 0
      %p371 = por %p369, %p370
      %s372 = ssub.s32 %s37, %s49
      %s373 = ssub.s32 %s38, %s45
      %s374 = sor.u32 %s372, %s373
      %p375 = scmp.eq.s32.totalorder %s374, 0
      %s377 = sadd.s32 %s376, 1
      %s378 = scalar_select %p375, %s376, %s377
      %p381 = pneg %p375
      %p382 = scmp.eq.s32.totalorder %s30, 3
      %p383 = por %p381, %p382
      %p384 = scmp.ne.s32.totalorder %s376, %s379
      %p385 = scmp.eq.s32.totalorder %s30, 0
      %p386 = por %p384, %p385
      %p387 = scmp.ne.s32.totalorder %s376, %s379
      %p388 = scmp.eq.s32.totalorder %s35, 3
      %p389 = por %p387, %p388
      %p390 = scmp.ne.s32.totalorder %s379, %s380
      %p391 = scmp.eq.s32.totalorder %s35, 0
      %p392 = por %p390, %p391
      %p393 = scmp.ne.s32.totalorder %s379, %s380
      %p394 = scmp.eq.s32.totalorder %s36, 3
      %p395 = por %p393, %p394
      %p397 = scmp.ne.s32.totalorder %s380, %s396
      %p398 = scmp.eq.s32.totalorder %s36, 0
      %p399 = por %p397, %p398
      %p400 = scmp.le.s32.totalorder 1, %s30
      %p401 = scmp.lt.s32.totalorder %s30, 5
      %p402 = pnand %p400, %p401
      %p403 = pneg %p402
      // Predicated region
      $region9: #{tpu_custom_call.1} parent=5 // pred_check
        _
      $region10: #{tpu_custom_call.1} parent=5 // pred_check_branch
        %405 = sbr.rel (%p402) target = $region12
      $region11: #{tpu_custom_call.1} parent=5 // pred_region
        %s406 = ssub.s32 %s30, 1
        // Predicated region
        $region13: #{tpu_custom_call.1} parent=11 // pred_check
          %p407 = pneg %p91
        $region14: #{tpu_custom_call.1} parent=11 // pred_check_branch
          %409 = sbr.rel (%p407) target = $region16
        $region15: #{tpu_custom_call.1} parent=11 // pred_region
          _
        $region16: #{tpu_custom_call.1} parent=11 // pred_fallthru
          _
        // Predicated region
        $region17: #{tpu_custom_call.1} parent=11 // pred_check
          %p410 = pneg %p112
        $region18: #{tpu_custom_call.1} parent=11 // pred_check_branch
          %412 = sbr.rel (%p410) target = $region20
        $region19: #{tpu_custom_call.1} parent=11 // pred_region
          %s414 = ssub.s32 1024, 1024
          %415 = vsyncadd [#allocation8], %s414
          %s416 = sshll.u32 [#allocation7], 4
          %s417 = int_to_ptr.vmem [resolvable:$true] %s416
          %422 = dma.hbm_to_vmem [thread:$0]  %s2, 1024, %s417, [#allocation8], 64, 64, 4
        $region20: #{tpu_custom_call.1} parent=11 // pred_fallthru
          _
        // Predicated region
        $region21: #{tpu_custom_call.1} parent=11 // pred_check
          %p423 = pneg %p133
        $region22: #{tpu_custom_call.1} parent=11 // pred_check_branch
          %425 = sbr.rel (%p423) target = $region24
        $region23: #{tpu_custom_call.1} parent=11 // pred_region
          %s427 = ssub.s32 1024, 1024
          %428 = vsyncadd [#allocation8], %s427
          %s429 = sshll.u32 [#allocation9], 4
          %s430 = int_to_ptr.vmem [resolvable:$true] %s429
          %435 = dma.hbm_to_vmem [thread:$0]  %s3, 1024, %s430, [#allocation8], 64, 64, 4
        $region24: #{tpu_custom_call.1} parent=11 // pred_fallthru
          _
        // Predicated region
        $region25: #{tpu_custom_call.1} parent=11 // pred_check
          %p436 = pneg %p154
        $region26: #{tpu_custom_call.1} parent=11 // pred_check_branch
          %438 = sbr.rel (%p436) target = $region28
        $region27: #{tpu_custom_call.1} parent=11 // pred_region
          %s440 = ssub.s32 1024, 1024
          %441 = vsyncadd [#allocation11], %s440
          %s442 = sshll.u32 [#allocation10], 4
          %s443 = int_to_ptr.vmem [resolvable:$true] %s442
          %448 = dma.hbm_to_vmem [thread:$0]  %s4, 1024, %s443, [#allocation11], 64, 64, 4
        $region28: #{tpu_custom_call.1} parent=11 // pred_fallthru
          _
        // Predicated region
        $region29: #{tpu_custom_call.1} parent=11 // pred_check
          %p449 = pneg %p175
        $region30: #{tpu_custom_call.1} parent=11 // pred_check_branch
          %451 = sbr.rel (%p449) target = $region32
        $region31: #{tpu_custom_call.1} parent=11 // pred_region
          _
        $region32: #{tpu_custom_call.1} parent=11 // pred_fallthru
          _
        // Predicated region
        $region33: #{tpu_custom_call.1} parent=11 // pred_check
          %p452 = pneg %p196
        $region34: #{tpu_custom_call.1} parent=11 // pred_check_branch
          %454 = sbr.rel (%p452) target = $region36
        $region35: #{tpu_custom_call.1} parent=11 // pred_region
          _
        $region36: #{tpu_custom_call.1} parent=11 // pred_fallthru
          _
        // Predicated region
        $region37: #{tpu_custom_call.1} parent=11 // pred_check
          %p455 = pneg %p217
        $region38: #{tpu_custom_call.1} parent=11 // pred_check_branch
          %457 = sbr.rel (%p455) target = $region40
        $region39: #{tpu_custom_call.1} parent=11 // pred_region
          _
        $region40: #{tpu_custom_call.1} parent=11 // pred_fallthru
          _
        // Predicated region
        $region41: #{tpu_custom_call.1} parent=11 // pred_check
          %p458 = pneg %p238
        $region42: #{tpu_custom_call.1} parent=11 // pred_check_branch
          %460 = sbr.rel (%p458) target = $region44
        $region43: #{tpu_custom_call.1} parent=11 // pred_region
          _
        $region44: #{tpu_custom_call.1} parent=11 // pred_fallthru
          _
        // Predicated region
        $region45: #{tpu_custom_call.1} parent=11 // pred_check
          %p461 = pneg %p259
        $region46: #{tpu_custom_call.1} parent=11 // pred_check_branch
          %463 = sbr.rel (%p461) target = $region48
        $region47: #{tpu_custom_call.1} parent=11 // pred_region
          %s465 = ssub.s32 4096, 4096
          %466 = vsyncadd [#allocation11], %s465
          %s467 = sshll.u32 [#allocation12], 4
          %s468 = int_to_ptr.vmem [resolvable:$true] %s467
          %473 = dma.hbm_to_vmem [thread:$0]  %s9, 4096, %s468, [#allocation11], 256, 256, 16
        $region48: #{tpu_custom_call.1} parent=11 // pred_fallthru
          _
        // Predicated region
        $region49: #{tpu_custom_call.1} parent=11 // pred_check
          %p474 = pneg %p280
        $region50: #{tpu_custom_call.1} parent=11 // pred_check_branch
          %476 = sbr.rel (%p474) target = $region52
        $region51: #{tpu_custom_call.1} parent=11 // pred_region
          _
        $region52: #{tpu_custom_call.1} parent=11 // pred_fallthru
          _
        // Predicated region
        $region53: #{tpu_custom_call.1} parent=11 // pred_check
          %p477 = pneg %p301
        $region54: #{tpu_custom_call.1} parent=11 // pred_check_branch
          %479 = sbr.rel (%p477) target = $region56
        $region55: #{tpu_custom_call.1} parent=11 // pred_region
          %s481 = ssub.s32 2048, 2048
          %482 = vsyncadd [#allocation14], %s481
          %s483 = sshll.u32 [#allocation13], 4
          %s484 = int_to_ptr.vmem [resolvable:$true] %s483
          %489 = dma.hbm_to_vmem [thread:$0]  %s11, 2048, %s484, [#allocation14], 64, 64, 4
        $region56: #{tpu_custom_call.1} parent=11 // pred_fallthru
          _
        // Predicated region
        $region57: #{tpu_custom_call.1} parent=11 // pred_check
          %p490 = pneg %p322
        $region58: #{tpu_custom_call.1} parent=11 // pred_check_branch
          %492 = sbr.rel (%p490) target = $region60
        $region59: #{tpu_custom_call.1} parent=11 // pred_region
          _
        $region60: #{tpu_custom_call.1} parent=11 // pred_fallthru
          _
        // Predicated region
        $region61: #{tpu_custom_call.1} parent=11 // pred_check
          %p493 = pneg %p343
        $region62: #{tpu_custom_call.1} parent=11 // pred_check_branch
          %495 = sbr.rel (%p493) target = $region64
        $region63: #{tpu_custom_call.1} parent=11 // pred_region
          _
        $region64: #{tpu_custom_call.1} parent=11 // pred_fallthru
          _
        // Predicated region
        $region65: #{tpu_custom_call.1} parent=11 // pred_check
          %p496 = pneg %p364
        $region66: #{tpu_custom_call.1} parent=11 // pred_check_branch
          %498 = sbr.rel (%p496) target = $region68
        $region67: #{tpu_custom_call.1} parent=11 // pred_region
          _
        $region68: #{tpu_custom_call.1} parent=11 // pred_fallthru
          _
      $region12: #{tpu_custom_call.1} parent=5 // pred_fallthru
        _
      %p499 = scmp.lt.s32.totalorder %s30, 4
      // Predicated region
      $region69: #{tpu_custom_call.1} parent=5 // pred_check
        %p500 = pneg %p499
      $region70: #{tpu_custom_call.1} parent=5 // pred_check_branch
        %502 = sbr.rel (%p500) target = $region72
      $region71: #{tpu_custom_call.1} parent=5 // pred_region
        // Predicated region
        $region73: #{tpu_custom_call.1} parent=71 // pred_check
          %p503 = pneg %p64
        $region74: #{tpu_custom_call.1} parent=71 // pred_check_branch
          %505 = sbr.rel (%p503) target = $region76
        $region75: #{tpu_custom_call.1} parent=71 // pred_region
          %s506 = sand.u32 %s54, 1
          %s507 = scalar_lea.sflag [#allocation5], %s506
          %s508 = sand.u32 %s54, 1
          %s509 = smul.addr %s508, 8
          %s510 = scalar_lea.vmem [#allocation4], %s509
          %s512 = ssub.s32 128, 128
          %513 = vsyncadd %s507, %s512
          %s514 = smul.addr %s37, 2
          %s515 = sadd.s32 %s38, %s514
          %s516 = smul.addr %s515, 128
          %s517 = scalar_lea.hbm %s0, %s516
          %s519 = sshll.u32 %s510, 4
          %s520 = int_to_ptr.vmem [resolvable:$true] %s519
          %522 = dma.hbm_to_vmem [thread:$0]  %s517, 128, %s520, %s507
        $region76: #{tpu_custom_call.1} parent=71 // pred_fallthru
          _
      $region72: #{tpu_custom_call.1} parent=5 // pred_fallthru
        _
      %p523 = scmp.le.s32.totalorder 1, %s30
      %p524 = scmp.lt.s32.totalorder %s30, 5
      %p525 = pnand %p523, %p524
      %p526 = pneg %p525
      // Predicated region
      $region77: #{tpu_custom_call.1} parent=5 // pred_check
        _
      $region78: #{tpu_custom_call.1} parent=5 // pred_check_branch
        %528 = sbr.rel (%p525) target = $region80
      $region79: #{tpu_custom_call.1} parent=5 // pred_region
        %s529 = ssub.s32 %s30, 1
        %s530 = sand.u32 %s57, 1
        %s531 = scalar_lea.sflag [#allocation5], %s530
        %s532 = sand.u32 %s57, 1
        %s533 = smul.addr %s532, 8
        %s534 = scalar_lea.vmem [#allocation4], %s533
        // Predicated region
        $region81: #{tpu_custom_call.1} parent=79 // pred_check
          %p535 = pneg %p70
        $region82: #{tpu_custom_call.1} parent=79 // pred_check_branch
          %537 = sbr.rel (%p535) target = $region84
        $region83: #{tpu_custom_call.1} parent=79 // pred_region
          %538 = dma.done %s531, 128
        $region84: #{tpu_custom_call.1} parent=79 // pred_fallthru
          _
        // Predicated region
        $region85: #{tpu_custom_call.1} parent=79 // pred_check
          %p539 = pneg %p112
        $region86: #{tpu_custom_call.1} parent=79 // pred_check_branch
          %541 = sbr.rel (%p539) target = $region88
        $region87: #{tpu_custom_call.1} parent=79 // pred_region
          %542 = dma.done [#allocation8], 1024
        $region88: #{tpu_custom_call.1} parent=79 // pred_fallthru
          _
        // Predicated region
        $region89: #{tpu_custom_call.1} parent=79 // pred_check
          %p543 = pneg %p133
        $region90: #{tpu_custom_call.1} parent=79 // pred_check_branch
          %545 = sbr.rel (%p543) target = $region92
        $region91: #{tpu_custom_call.1} parent=79 // pred_region
          %546 = dma.done [#allocation8], 1024
        $region92: #{tpu_custom_call.1} parent=79 // pred_fallthru
          _
        // Predicated region
        $region93: #{tpu_custom_call.1} parent=79 // pred_check
          %p547 = pneg %p154
        $region94: #{tpu_custom_call.1} parent=79 // pred_check_branch
          %549 = sbr.rel (%p547) target = $region96
        $region95: #{tpu_custom_call.1} parent=79 // pred_region
          %550 = dma.done [#allocation11], 1024
        $region96: #{tpu_custom_call.1} parent=79 // pred_fallthru
          _
        // Predicated region
        $region97: #{tpu_custom_call.1} parent=79 // pred_check
          %p551 = pneg %p259
        $region98: #{tpu_custom_call.1} parent=79 // pred_check_branch
          %553 = sbr.rel (%p551) target = $region100
        $region99: #{tpu_custom_call.1} parent=79 // pred_region
          %554 = dma.done [#allocation11], 4096
        $region100: #{tpu_custom_call.1} parent=79 // pred_fallthru
          _
        // Predicated region
        $region101: #{tpu_custom_call.1} parent=79 // pred_check
          %p555 = pneg %p301
        $region102: #{tpu_custom_call.1} parent=79 // pred_check_branch
          %557 = sbr.rel (%p555) target = $region104
        $region103: #{tpu_custom_call.1} parent=79 // pred_region
          %558 = dma.done [#allocation14], 2048
        $region104: #{tpu_custom_call.1} parent=79 // pred_fallthru
          _
        %s559 = sand.u32 %s57, 1
        %s560 = scalar_lea.sflag [#allocation5], %s559
        %s561 = sand.u32 %s57, 1
        %s562 = smul.addr %s561, 8
        %s563 = scalar_lea.vmem [#allocation4], %s562
        %p564 = pneg %p70
        %p565 = pneg %p67
        %p566 = pneg %p91
        %p567 = pneg %p88
        %p568 = pneg %p112
        %p569 = pneg %p109
        %p570 = pneg %p133
        %p571 = pneg %p130
        %p572 = pneg %p154
        %p573 = pneg %p151
        %p574 = pneg %p175
        %p575 = pneg %p172
        %p576 = pneg %p196
        %p577 = pneg %p193
        %p578 = pneg %p217
        %p579 = pneg %p214
        %p580 = pneg %p238
        %p581 = pneg %p235
        %p582 = pneg %p259
        %p583 = pneg %p256
        %p584 = pneg %p280
        %p585 = pneg %p277
        %p586 = pneg %p301
        %p587 = pneg %p298
        %p588 = pneg %p322
        %p589 = pneg %p319
        %p590 = pneg %p343
        %p591 = pneg %p340
        %p592 = pneg %p364
        %p593 = pneg %p361
        %p594 = pneg %p392
        %p595 = pneg %p389
        %s596 = sand.u32 %s379, 1
        %s597 = scalar_lea.sflag [#allocation6], %s596
        %s598 = sand.u32 %s379, 1
        %s599 = smul.addr %s598, 8
        %s600 = scalar_lea.vmem [#allocation15], %s599
        %p602 = scmp.eq.s32.totalorder %s40, 0
        // Predicated region
        $region105: #{tpu_custom_call.1} parent=79 // pred_check
          %p603 = pneg %p602
        $region106: #{tpu_custom_call.1} parent=79 // pred_check_branch
          %605 = sbr.rel (%p603) target = $region108
        $region107: #{tpu_custom_call.1} parent=79 // pred_region
          %v606 = vld [vmem:[%s5] sm:$0xff]
          %607 = vst [vmem:[#allocation2] sm:$0xff] %v606
          %v608 = vld [vmem:[%s6] sm:$0xff]
          %609 = vst [vmem:[#allocation3] sm:$0xff] %v608
        $region108: #{tpu_custom_call.1} parent=79 // pred_fallthru
          _
        %p610 = scmp.ne.s32.totalorder %s40, 0
        // Predicated region
        $region109: #{tpu_custom_call.1} parent=79 // pred_check
          %p611 = pneg %p610
        $region110: #{tpu_custom_call.1} parent=79 // pred_check_branch
          %613 = sbr.rel (%p611) target = $region112
        $region111: #{tpu_custom_call.1} parent=79 // pred_region
          %v614 = vld [vmem:[#allocation2 + $0x8] sm:$0xff]
          %615 = vst [vmem:[#allocation2] sm:$0xff] %v614
          %v616 = vld [vmem:[#allocation3 + $0x8] sm:$0xff]
          %617 = vst [vmem:[#allocation3] sm:$0xff] %v616
        $region112: #{tpu_custom_call.1} parent=79 // pred_fallthru
          _
        %v618 = vld [vmem:[%s534] sm:$0xff]
        %v619 = vmul.f32 %v618, %v618
        %620 = vadd.xlane.f32.xlu0 %v619
        %v621 = vpop.xlane.xlu0 %620
        %v622 = vrcp.pop 128.0
        %v623 = vmul.f32 %v621, %v622
        %v624 = vadd.f32 %v623, 1e-06
        %v625 = vrsqrt.pop %v624
        %v626 = vmul.f32 %v618, %v625
        %v627 = vld [vmem:[%s7] sm:$0x1]
        %v629 = vlaneseq
        %v630 = vshrl.u32 %v629, 7
        %v631 = vsub.s32 0, %v630
        %v632 = vrot.slane %v627, %v631
        %v634 = vmul.f32 %v626, %v632
        %v635 = vpack.c.bf16 %v634, %v634
        %v636 = vld [vmem:[%s1] sm:$0xf]
        %v637 = vld [vmem:[%s1 + $0x4] sm:$0xf]
        %v638 = vld [vmem:[%s1 + $0x8] sm:$0xf]
        %v639 = vld [vmem:[%s1 + $0xc] sm:$0xf]
        %v640 = vld [vmem:[%s1 + $0x10] sm:$0xf]
        %v641 = vld [vmem:[%s1 + $0x14] sm:$0xf]
        %v642 = vld [vmem:[%s1 + $0x18] sm:$0xf]
        %v643 = vld [vmem:[%s1 + $0x1c] sm:$0xf]
        %v644 = vld [vmem:[%s1 + $0x20] sm:$0xf]
        %v645 = vld [vmem:[%s1 + $0x24] sm:$0xf]
        %v646 = vld [vmem:[%s1 + $0x28] sm:$0xf]
        %v647 = vld [vmem:[%s1 + $0x2c] sm:$0xf]
        %v648 = vld [vmem:[%s1 + $0x30] sm:$0xf]
        %v649 = vld [vmem:[%s1 + $0x34] sm:$0xf]
        %v650 = vld [vmem:[%s1 + $0x38] sm:$0xf]
        %v651 = vld [vmem:[%s1 + $0x3c] sm:$0xf]
        %v668 = vunpack.c.l.b16 %v636
        %v669 = vunpack.c.l.b16 %v637
        %v670 = vunpack.c.l.b16 %v638
        %v671 = vunpack.c.l.b16 %v639
        %v672 = vunpack.c.l.b16 %v640
        %v673 = vunpack.c.l.b16 %v641
        %v674 = vunpack.c.l.b16 %v642
        %v675 = vunpack.c.l.b16 %v643
        %v676 = vunpack.c.l.b16 %v644
        %v677 = vunpack.c.l.b16 %v645
        %v678 = vunpack.c.l.b16 %v646
        %v679 = vunpack.c.l.b16 %v647
        %v680 = vunpack.c.l.b16 %v648
        %v681 = vunpack.c.l.b16 %v649
        %v682 = vunpack.c.l.b16 %v650
        %v683 = vunpack.c.l.b16 %v651
        %v684 = vpack.c.b16 %v669, %v668
        %v685 = vpack.c.b16 %v671, %v670
        %v686 = vpack.c.b16 %v673, %v672
        %v687 = vpack.c.b16 %v675, %v674
        %v688 = vpack.c.b16 %v677, %v676
        %v689 = vpack.c.b16 %v679, %v678
        %v690 = vpack.c.b16 %v681, %v680
        %v691 = vpack.c.b16 %v683, %v682
        %700 = vmatprep.subr.bf16.mxu0 0
        %701 = vmatpush1.bf16.msra.mxu0 %v684
        %702 = vmatprep.subr.bf16.mxu0 0
        %703 = vmatpush1.bf16.msra.mxu0 %v685
        %704 = vmatprep.subr.bf16.mxu0 0
        %705 = vmatpush1.bf16.msra.mxu0 %v686
        %706 = vmatprep.subr.bf16.mxu0 0
        %707 = vmatpush1.bf16.msra.mxu0 %v687
        %708 = vmatprep.subr.bf16.mxu0 0
        %709 = vmatpush1.bf16.msra.mxu0 %v688
        %710 = vmatprep.subr.bf16.mxu0 0
        %711 = vmatpush1.bf16.msra.mxu0 %v689
        %712 = vmatprep.subr.bf16.mxu0 0
        %713 = vmatpush1.bf16.msra.mxu0 %v690
        %714 = vmatprep.subr.bf16.mxu0 0
        %715 = vmatpush1.bf16.msra.mxu0 %v691
        %716 = vmatprep.subr.bf16.mxu0 0
        %717 = vmatpush1.bf16.msra.mxu0 0
        %718 = vmatprep.subr.bf16.mxu0 0
        %719 = vmatpush1.bf16.msra.mxu0 0
        %720 = vmatprep.subr.bf16.mxu0 0
        %721 = vmatpush1.bf16.msra.mxu0 0
        %722 = vmatprep.subr.bf16.mxu0 0
        %723 = vmatpush1.bf16.msra.mxu0 0
        %724 = vmatprep.subr.bf16.mxu0 0
        %725 = vmatpush1.bf16.msra.mxu0 0
        %726 = vmatprep.subr.bf16.mxu0 0
        %727 = vmatpush1.bf16.msra.mxu0 0
        %728 = vmatprep.subr.bf16.mxu0 0
        %729 = vmatpush1.bf16.msra.mxu0 0
        %730 = vmatprep.subr.bf16.mxu0 0
        %731 = vmatpush1.bf16.msra.mxu0 0
        %732 = vmatprep.mubr.bf16.mxu0 0
        %733 = vmatmul.mubr.bf16.gmra.mrb[0].mxu0 %v635
        %v734 = vpop.f32.mrb[0].mxu0
        %v735 = vadd.f32 0.0, %v734
        %v736 = vpop.f32.mrb[0].mxu0
        %v737 = vpop.f32.mrb[0].mxu0
        %v738 = vpop.f32.mrb[0].mxu0
        %739 = vdwg.mxu0
        %v740 = vld [vmem:[#allocation7] sm:$0xf]
        %v741 = vld [vmem:[#allocation7 + $0x4] sm:$0xf]
        %v742 = vld [vmem:[#allocation7 + $0x8] sm:$0xf]
        %v743 = vld [vmem:[#allocation7 + $0xc] sm:$0xf]
        %v744 = vld [vmem:[#allocation7 + $0x10] sm:$0xf]
        %v745 = vld [vmem:[#allocation7 + $0x14] sm:$0xf]
        %v746 = vld [vmem:[#allocation7 + $0x18] sm:$0xf]
        %v747 = vld [vmem:[#allocation7 + $0x1c] sm:$0xf]
        %v748 = vld [vmem:[#allocation7 + $0x20] sm:$0xf]
        %v749 = vld [vmem:[#allocation7 + $0x24] sm:$0xf]
        %v750 = vld [vmem:[#allocation7 + $0x28] sm:$0xf]
        %v751 = vld [vmem:[#allocation7 + $0x2c] sm:$0xf]
        %v752 = vld [vmem:[#allocation7 + $0x30] sm:$0xf]
        %v753 = vld [vmem:[#allocation7 + $0x34] sm:$0xf]
        %v754 = vld [vmem:[#allocation7 + $0x38] sm:$0xf]
        %v755 = vld [vmem:[#allocation7 + $0x3c] sm:$0xf]
        %v772 = vunpack.c.l.b16 %v740
        %v773 = vunpack.c.l.b16 %v741
        %v774 = vunpack.c.l.b16 %v742
        %v775 = vunpack.c.l.b16 %v743
        %v776 = vunpack.c.l.b16 %v744
        %v777 = vunpack.c.l.b16 %v745
        %v778 = vunpack.c.l.b16 %v746
        %v779 = vunpack.c.l.b16 %v747
        %v780 = vunpack.c.l.b16 %v748
        %v781 = vunpack.c.l.b16 %v749
        %v782 = vunpack.c.l.b16 %v750
        %v783 = vunpack.c.l.b16 %v751
        %v784 = vunpack.c.l.b16 %v752
        %v785 = vunpack.c.l.b16 %v753
        %v786 = vunpack.c.l.b16 %v754
        %v787 = vunpack.c.l.b16 %v755
        %v788 = vpack.c.b16 %v773, %v772
        %v789 = vpack.c.b16 %v775, %v774
        %v790 = vpack.c.b16 %v777, %v776
        %v791 = vpack.c.b16 %v779, %v778
        %v792 = vpack.c.b16 %v781, %v780
        %v793 = vpack.c.b16 %v783, %v782
        %v794 = vpack.c.b16 %v785, %v784
        %v795 = vpack.c.b16 %v787, %v786
        %804 = vmatprep.subr.bf16.mxu0 0
        %805 = vmatpush1.bf16.msra.mxu0 %v788
        %806 = vmatprep.subr.bf16.mxu0 0
        %807 = vmatpush1.bf16.msra.mxu0 %v789
        %808 = vmatprep.subr.bf16.mxu0 0
        %809 = vmatpush1.bf16.msra.mxu0 %v790
        %810 = vmatprep.subr.bf16.mxu0 0
        %811 = vmatpush1.bf16.msra.mxu0 %v791
        %812 = vmatprep.subr.bf16.mxu0 0
        %813 = vmatpush1.bf16.msra.mxu0 %v792
        %814 = vmatprep.subr.bf16.mxu0 0
        %815 = vmatpush1.bf16.msra.mxu0 %v793
        %816 = vmatprep.subr.bf16.mxu0 0
        %817 = vmatpush1.bf16.msra.mxu0 %v794
        %818 = vmatprep.subr.bf16.mxu0 0
        %819 = vmatpush1.bf16.msra.mxu0 %v795
        %820 = vmatprep.subr.bf16.mxu0 0
        %821 = vmatpush1.bf16.msra.mxu0 0
        %822 = vmatprep.subr.bf16.mxu0 0
        %823 = vmatpush1.bf16.msra.mxu0 0
        %824 = vmatprep.subr.bf16.mxu0 0
        %825 = vmatpush1.bf16.msra.mxu0 0
        %826 = vmatprep.subr.bf16.mxu0 0
        %827 = vmatpush1.bf16.msra.mxu0 0
        %828 = vmatprep.subr.bf16.mxu0 0
        %829 = vmatpush1.bf16.msra.mxu0 0
        %830 = vmatprep.subr.bf16.mxu0 0
        %831 = vmatpush1.bf16.msra.mxu0 0
        %832 = vmatprep.subr.bf16.mxu0 0
        %833 = vmatpush1.bf16.msra.mxu0 0
        %834 = vmatprep.subr.bf16.mxu0 0
        %835 = vmatpush1.bf16.msra.mxu0 0
        %836 = vmatprep.mubr.bf16.mxu0 0
        %837 = vmatmul.mubr.bf16.gmra.mrb[0].mxu0 %v635
        %v838 = vpop.f32.mrb[0].mxu0
        %v839 = vadd.f32 0.0, %v838
        %v840 = vpop.f32.mrb[0].mxu0
        %v841 = vpop.f32.mrb[0].mxu0
        %v842 = vpop.f32.mrb[0].mxu0
        %843 = vdwg.mxu0
        %v844 = vld [vmem:[#allocation9] sm:$0xf]
        %v845 = vld [vmem:[#allocation9 + $0x4] sm:$0xf]
        %v846 = vld [vmem:[#allocation9 + $0x8] sm:$0xf]
        %v847 = vld [vmem:[#allocation9 + $0xc] sm:$0xf]
        %v848 = vld [vmem:[#allocation9 + $0x10] sm:$0xf]
        %v849 = vld [vmem:[#allocation9 + $0x14] sm:$0xf]
        %v850 = vld [vmem:[#allocation9 + $0x18] sm:$0xf]
        %v851 = vld [vmem:[#allocation9 + $0x1c] sm:$0xf]
        %v852 = vld [vmem:[#allocation9 + $0x20] sm:$0xf]
        %v853 = vld [vmem:[#allocation9 + $0x24] sm:$0xf]
        %v854 = vld [vmem:[#allocation9 + $0x28] sm:$0xf]
        %v855 = vld [vmem:[#allocation9 + $0x2c] sm:$0xf]
        %v856 = vld [vmem:[#allocation9 + $0x30] sm:$0xf]
        %v857 = vld [vmem:[#allocation9 + $0x34] sm:$0xf]
        %v858 = vld [vmem:[#allocation9 + $0x38] sm:$0xf]
        %v859 = vld [vmem:[#allocation9 + $0x3c] sm:$0xf]
        %v876 = vunpack.c.l.b16 %v844
        %v877 = vunpack.c.l.b16 %v845
        %v878 = vunpack.c.l.b16 %v846
        %v879 = vunpack.c.l.b16 %v847
        %v880 = vunpack.c.l.b16 %v848
        %v881 = vunpack.c.l.b16 %v849
        %v882 = vunpack.c.l.b16 %v850
        %v883 = vunpack.c.l.b16 %v851
        %v884 = vunpack.c.l.b16 %v852
        %v885 = vunpack.c.l.b16 %v853
        %v886 = vunpack.c.l.b16 %v854
        %v887 = vunpack.c.l.b16 %v855
        %v888 = vunpack.c.l.b16 %v856
        %v889 = vunpack.c.l.b16 %v857
        %v890 = vunpack.c.l.b16 %v858
        %v891 = vunpack.c.l.b16 %v859
        %v892 = vpack.c.b16 %v877, %v876
        %v893 = vpack.c.b16 %v879, %v878
        %v894 = vpack.c.b16 %v881, %v880
        %v895 = vpack.c.b16 %v883, %v882
        %v896 = vpack.c.b16 %v885, %v884
        %v897 = vpack.c.b16 %v887, %v886
        %v898 = vpack.c.b16 %v889, %v888
        %v899 = vpack.c.b16 %v891, %v890
        %908 = vmatprep.subr.bf16.mxu0 0
        %909 = vmatpush1.bf16.msra.mxu0 %v892
        %910 = vmatprep.subr.bf16.mxu0 0
        %911 = vmatpush1.bf16.msra.mxu0 %v893
        %912 = vmatprep.subr.bf16.mxu0 0
        %913 = vmatpush1.bf16.msra.mxu0 %v894
        %914 = vmatprep.subr.bf16.mxu0 0
        %915 = vmatpush1.bf16.msra.mxu0 %v895
        %916 = vmatprep.subr.bf16.mxu0 0
        %917 = vmatpush1.bf16.msra.mxu0 %v896
        %918 = vmatprep.subr.bf16.mxu0 0
        %919 = vmatpush1.bf16.msra.mxu0 %v897
        %920 = vmatprep.subr.bf16.mxu0 0
        %921 = vmatpush1.bf16.msra.mxu0 %v898
        %922 = vmatprep.subr.bf16.mxu0 0
        %923 = vmatpush1.bf16.msra.mxu0 %v899
        %924 = vmatprep.subr.bf16.mxu0 0
        %925 = vmatpush1.bf16.msra.mxu0 0
        %926 = vmatprep.subr.bf16.mxu0 0
        %927 = vmatpush1.bf16.msra.mxu0 0
        %928 = vmatprep.subr.bf16.mxu0 0
        %929 = vmatpush1.bf16.msra.mxu0 0
        %930 = vmatprep.subr.bf16.mxu0 0
        %931 = vmatpush1.bf16.msra.mxu0 0
        %932 = vmatprep.subr.bf16.mxu0 0
        %933 = vmatpush1.bf16.msra.mxu0 0
        %934 = vmatprep.subr.bf16.mxu0 0
        %935 = vmatpush1.bf16.msra.mxu0 0
        %936 = vmatprep.subr.bf16.mxu0 0
        %937 = vmatpush1.bf16.msra.mxu0 0
        %938 = vmatprep.subr.bf16.mxu0 0
        %939 = vmatpush1.bf16.msra.mxu0 0
        %940 = vmatprep.mubr.bf16.mxu0 0
        %941 = vmatmul.mubr.bf16.gmra.mrb[0].mxu0 %v635
        %v942 = vpop.f32.mrb[0].mxu0
        %v943 = vadd.f32 0.0, %v942
        %v944 = vpop.f32.mrb[0].mxu0
        %v945 = vpop.f32.mrb[0].mxu0
        %v946 = vpop.f32.mrb[0].mxu0
        %947 = vdwg.mxu0
        %948 = vst [vmem:[#allocation2 + $0x8] sm:$0xff] %v839
        %949 = vst [vmem:[#allocation3 + $0x8] sm:$0xff] %v943
        %v950 = vld [vmem:[%s13] sm:$0xf]
        %v951 = vld [vmem:[%s13 + $0x4] sm:$0xf]
        %v952 = vld [vmem:[%s13 + $0x8] sm:$0xf]
        %v953 = vld [vmem:[%s13 + $0xc] sm:$0xf]
        %v954 = vld [vmem:[%s13 + $0x10] sm:$0xf]
        %v955 = vld [vmem:[%s13 + $0x14] sm:$0xf]
        %v956 = vld [vmem:[%s13 + $0x18] sm:$0xf]
        %v957 = vld [vmem:[%s13 + $0x1c] sm:$0xf]
        %v958 = vld [vmem:[%s13 + $0x20] sm:$0xf]
        %v959 = vld [vmem:[%s13 + $0x24] sm:$0xf]
        %v960 = vld [vmem:[%s13 + $0x28] sm:$0xf]
        %v961 = vld [vmem:[%s13 + $0x2c] sm:$0xf]
        %v962 = vld [vmem:[%s13 + $0x30] sm:$0xf]
        %v963 = vld [vmem:[%s13 + $0x34] sm:$0xf]
        %v964 = vld [vmem:[%s13 + $0x38] sm:$0xf]
        %v965 = vld [vmem:[%s13 + $0x3c] sm:$0xf]
        %v966 = vld [vmem:[%s14] sm:$0x3]
        %v967 = vld [vmem:[#allocation2 + $0x5] sm:$0xff]
        %v968 = vmul.f32 %v735, %v967
        %v969 = vpack.c.bf16 %v968, %v968
        %v970 = vld [vmem:[#allocation2 + $0x6] sm:$0xff]
        %v971 = vmul.f32 %v735, %v970
        %v972 = vpack.c.bf16 %v971, %v971
        %v973 = vld [vmem:[#allocation2 + $0x7] sm:$0xff]
        %v974 = vmul.f32 %v735, %v973
        %v975 = vpack.c.bf16 %v974, %v974
        %v976 = vld [vmem:[#allocation2 + $0x8] sm:$0xff]
        %v977 = vmul.f32 %v735, %v976
        %v978 = vpack.c.bf16 %v977, %v977
        %v980 = vrot.slane %v972, 4
        %v982 = vrot.slane %v978, 4
        %vm983 = vcmask 1043456
        %v986 = vsel %vm983, %v969, %v980
        %v990 = vsel %vm983, %v975, %v982
        %v1008 = vunpack.c.l.b16 %v950
        %v1009 = vunpack.c.l.b16 %v951
        %v1010 = vunpack.c.l.b16 %v952
        %v1011 = vunpack.c.l.b16 %v953
        %v1012 = vunpack.c.l.b16 %v954
        %v1013 = vunpack.c.l.b16 %v955
        %v1014 = vunpack.c.l.b16 %v956
        %v1015 = vunpack.c.l.b16 %v957
        %v1016 = vunpack.c.l.b16 %v958
        %v1017 = vunpack.c.l.b16 %v959
        %v1018 = vunpack.c.l.b16 %v960
        %v1019 = vunpack.c.l.b16 %v961
        %v1020 = vunpack.c.l.b16 %v962
        %v1021 = vunpack.c.l.b16 %v963
        %v1022 = vunpack.c.l.b16 %v964
        %v1023 = vunpack.c.l.b16 %v965
        %v1024 = vpack.c.b16 %v1009, %v1008
        %v1025 = vpack.c.b16 %v1011, %v1010
        %v1026 = vpack.c.b16 %v1013, %v1012
        %v1027 = vpack.c.b16 %v1015, %v1014
        %v1028 = vpack.c.b16 %v1017, %v1016
        %v1029 = vpack.c.b16 %v1019, %v1018
        %v1030 = vpack.c.b16 %v1021, %v1020
        %v1031 = vpack.c.b16 %v1023, %v1022
        %1040 = vmatprep.subr.bf16.mxu0 0
        %1041 = vmatpush1.bf16.msra.mxu0 %v1024
        %1042 = vmatprep.subr.bf16.mxu0 0
        %1043 = vmatpush1.bf16.msra.mxu0 %v1025
        %1044 = vmatprep.subr.bf16.mxu0 0
        %1045 = vmatpush1.bf16.msra.mxu0 %v1026
        %1046 = vmatprep.subr.bf16.mxu0 0
        %1047 = vmatpush1.bf16.msra.mxu0 %v1027
        %1048 = vmatprep.subr.bf16.mxu0 0
        %1049 = vmatpush1.bf16.msra.mxu0 %v1028
        %1050 = vmatprep.subr.bf16.mxu0 0
        %1051 = vmatpush1.bf16.msra.mxu0 %v1029
        %1052 = vmatprep.subr.bf16.mxu0 0
        %1053 = vmatpush1.bf16.msra.mxu0 %v1030
        %1054 = vmatprep.subr.bf16.mxu0 0
        %1055 = vmatpush1.bf16.msra.mxu0 %v1031
        %1056 = vmatprep.subr.bf16.mxu0 0
        %1057 = vmatpush1.bf16.msra.mxu0 0
        %1058 = vmatprep.subr.bf16.mxu0 0
        %1059 = vmatpush1.bf16.msra.mxu0 0
        %1060 = vmatprep.subr.bf16.mxu0 0
        %1061 = vmatpush1.bf16.msra.mxu0 0
        %1062 = vmatprep.subr.bf16.mxu0 0
        %1063 = vmatpush1.bf16.msra.mxu0 0
        %1064 = vmatprep.subr.bf16.mxu0 0
        %1065 = vmatpush1.bf16.msra.mxu0 0
        %1066 = vmatprep.subr.bf16.mxu0 0
        %1067 = vmatpush1.bf16.msra.mxu0 0
        %1068 = vmatprep.subr.bf16.mxu0 0
        %1069 = vmatpush1.bf16.msra.mxu0 0
        %1070 = vmatprep.subr.bf16.mxu0 0
        %1071 = vmatpush1.bf16.msra.mxu0 0
        %1072 = vmatprep.mubr.bf16.mxu0 0
        %1073 = vmatmul.mubr.bf16.gmra.mrb[0].mxu0 %v986
        %v1074 = vpop.f32.mrb[0].mxu0
        %v1075 = vadd.f32 0.0, %v1074
        %v1076 = vpop.f32.mrb[0].mxu0
        %v1077 = vpop.f32.mrb[0].mxu0
        %v1078 = vadd.f32 0.0, %v1077
        %v1079 = vpop.f32.mrb[0].mxu0
        %1080 = vmatprep.mubr.bf16.mxu0 0
        %1081 = vmatmul.mubr.bf16.gmra.mrb[0].mxu0 %v990
        %v1082 = vpop.f32.mrb[0].mxu0
        %v1083 = vadd.f32 0.0, %v1082
        %v1084 = vpop.f32.mrb[0].mxu0
        %v1085 = vpop.f32.mrb[0].mxu0
        %v1086 = vadd.f32 0.0, %v1085
        %v1087 = vpop.f32.mrb[0].mxu0
        %1088 = vdwg.mxu0
        %v1089 = vmul.f32 %v1075, 0.17677669
        %v1090 = vmul.f32 %v1078, 0.17677669
        %v1091 = vmul.f32 %v1083, 0.17677669
        %v1092 = vmul.f32 %v1086, 0.17677669
        %v1093 = vmax.f32 %v1089, %v1090
        %v1094 = vmax.f32 %v1093, %v1091
        %v1095 = vmax.f32 %v1094, %v1092
        %v1096 = vsub.f32 %v1089, %v1095
        %v1097 = vmul.f32 %v1096, 1.442695
        %v1098 = vpow.pop %v1097
        %v1099 = vsub.f32 %v1090, %v1095
        %v1100 = vmul.f32 %v1099, 1.442695
        %v1101 = vpow.pop %v1100
        %v1102 = vsub.f32 %v1091, %v1095
        %v1103 = vmul.f32 %v1102, 1.442695
        %v1104 = vpow.pop %v1103
        %v1105 = vsub.f32 %v1092, %v1095
        %v1106 = vmul.f32 %v1105, 1.442695
        %v1107 = vpow.pop %v1106
        %v1108 = vadd.f32 %v1098, %v1101
        %v1109 = vadd.f32 %v1108, %v1104
        %v1110 = vadd.f32 %v1109, %v1107
        %v1111 = vpack.c.bf16 %v1098, %v1098
        %v1112 = vpack.c.bf16 %v1101, %v1101
        %v1113 = vpack.c.bf16 %v1104, %v1104
        %v1114 = vpack.c.bf16 %v1107, %v1107
        %v1116 = vrot.slane %v1112, 4
        %v1118 = vrot.slane %v1114, 4
        %v1121 = vsel %vm983, %v1111, %v1116
        %v1124 = vsel %vm983, %v1113, %v1118
        %vm1125 = vcmask 31744
        %v1126 = vsel %vm1125, %v1121, 0
        %v1128 = vsel %vm1125, %v1124, 0
        %vm1130 = vcmask 1041408
        %v1132 = vsel %vm1130, %v966, 0
        %1134 = vmatprep.subr.bf16.mxu0 0
        %1135 = vmatpush1.bf16.msra.mxu0 %v1132
        %1136 = vmatprep.subr.bf16.mxu0 0
        %1137 = vmatpush1.bf16.msra.mxu0 0
        %1138 = vmatprep.subr.bf16.mxu0 0
        %1139 = vmatpush1.bf16.msra.mxu0 0
        %1140 = vmatprep.subr.bf16.mxu0 0
        %1141 = vmatpush1.bf16.msra.mxu0 0
        %1142 = vmatprep.subr.bf16.mxu0 0
        %1143 = vmatpush1.bf16.msra.mxu0 0
        %1144 = vmatprep.subr.bf16.mxu0 0
        %1145 = vmatpush1.bf16.msra.mxu0 0
        %1146 = vmatprep.subr.bf16.mxu0 0
        %1147 = vmatpush1.bf16.msra.mxu0 0
        %1148 = vmatprep.subr.bf16.mxu0 0
        %1149 = vmatpush1.bf16.msra.mxu0 0
        %1150 = vmatprep.subr.bf16.mxu0 0
        %1151 = vmatpush1.bf16.msra.mxu0 0
        %1152 = vmatprep.subr.bf16.mxu0 0
        %1153 = vmatpush1.bf16.msra.mxu0 0
        %1154 = vmatprep.subr.bf16.mxu0 0
        %1155 = vmatpush1.bf16.msra.mxu0 0
        %1156 = vmatprep.subr.bf16.mxu0 0
        %1157 = vmatpush1.bf16.msra.mxu0 0
        %1158 = vmatprep.subr.bf16.mxu0 0
        %1159 = vmatpush1.bf16.msra.mxu0 0
        %1160 = vmatprep.subr.bf16.mxu0 0
        %1161 = vmatpush1.bf16.msra.mxu0 0
        %1162 = vmatprep.subr.bf16.mxu0 0
        %1163 = vmatpush1.bf16.msra.mxu0 0
        %1164 = vmatprep.subr.bf16.mxu0 0
        %1165 = vmatpush1.bf16.msra.mxu0 0
        %1166 = vmatprep.mubr.bf16.mxu0 0
        %1167 = vmatmul.mubr.bf16.gmra.mrb[0].mxu0 %v1126
        %v1168 = vpop.f32.mrb[0].mxu0
        %v1169 = vadd.f32 0.0, %v1168
        %v1170 = vpop.f32.mrb[0].mxu0
        %v1171 = vpop.f32.mrb[0].mxu0
        %v1172 = vadd.f32 0.0, %v1171
        %v1173 = vpop.f32.mrb[0].mxu0
        %1174 = vmatprep.mubr.bf16.mxu0 0
        %1175 = vmatmul.mubr.bf16.gmra.mrb[0].mxu0 %v1128
        %v1176 = vpop.f32.mrb[0].mxu0
        %v1177 = vadd.f32 0.0, %v1176
        %v1178 = vpop.f32.mrb[0].mxu0
        %v1179 = vpop.f32.mrb[0].mxu0
        %v1180 = vadd.f32 0.0, %v1179
        %v1181 = vpop.f32.mrb[0].mxu0
        %1182 = vdwg.mxu0
        %v1183 = vld [vmem:[#allocation3 + $0x5] sm:$0xff]
        %v1184 = vmul.f32 %v1169, %v1183
        %v1185 = vld [vmem:[#allocation3 + $0x6] sm:$0xff]
        %v1186 = vmul.f32 %v1172, %v1185
        %v1187 = vadd.f32 %v1184, %v1186
        %v1188 = vld [vmem:[#allocation3 + $0x7] sm:$0xff]
        %v1189 = vmul.f32 %v1177, %v1188
        %v1190 = vadd.f32 %v1187, %v1189
        %v1191 = vld [vmem:[#allocation3 + $0x8] sm:$0xff]
        %v1192 = vmul.f32 %v1180, %v1191
        %v1193 = vadd.f32 %v1190, %v1192
        %v1194 = vrcp.pop %v1110
        %v1195 = vpack.c.bf16 %v1194, %v1194
        %v1197 = vsel %vm1125, %v1195, 0
        %1199 = vmatprep.subr.bf16.mxu0 0
        %1200 = vmatpush1.bf16.msra.mxu0 %v1132
        %1201 = vmatprep.subr.bf16.mxu0 0
        %1202 = vmatpush1.bf16.msra.mxu0 0
        %1203 = vmatprep.subr.bf16.mxu0 0
        %1204 = vmatpush1.bf16.msra.mxu0 0
        %1205 = vmatprep.subr.bf16.mxu0 0
        %1206 = vmatpush1.bf16.msra.mxu0 0
        %1207 = vmatprep.subr.bf16.mxu0 0
        %1208 = vmatpush1.bf16.msra.mxu0 0
        %1209 = vmatprep.subr.bf16.mxu0 0
        %1210 = vmatpush1.bf16.msra.mxu0 0
        %1211 = vmatprep.subr.bf16.mxu0 0
        %1212 = vmatpush1.bf16.msra.mxu0 0
        %1213 = vmatprep.subr.bf16.mxu0 0
        %1214 = vmatpush1.bf16.msra.mxu0 0
        %1215 = vmatprep.subr.bf16.mxu0 0
        %1216 = vmatpush1.bf16.msra.mxu0 0
        %1217 = vmatprep.subr.bf16.mxu0 0
        %1218 = vmatpush1.bf16.msra.mxu0 0
        %1219 = vmatprep.subr.bf16.mxu0 0
        %1220 = vmatpush1.bf16.msra.mxu0 0
        %1221 = vmatprep.subr.bf16.mxu0 0
        %1222 = vmatpush1.bf16.msra.mxu0 0
        %1223 = vmatprep.subr.bf16.mxu0 0
        %1224 = vmatpush1.bf16.msra.mxu0 0
        %1225 = vmatprep.subr.bf16.mxu0 0
        %1226 = vmatpush1.bf16.msra.mxu0 0
        %1227 = vmatprep.subr.bf16.mxu0 0
        %1228 = vmatpush1.bf16.msra.mxu0 0
        %1229 = vmatprep.subr.bf16.mxu0 0
        %1230 = vmatpush1.bf16.msra.mxu0 0
        %1231 = vmatprep.mubr.bf16.mxu0 0
        %1232 = vmatmul.mubr.bf16.gmra.mrb[0].mxu0 %v1197
        %v1233 = vpop.f32.mrb[0].mxu0
        %v1234 = vadd.f32 0.0, %v1233
        %v1235 = vpop.f32.mrb[0].mxu0
        %v1236 = vpop.f32.mrb[0].mxu0
        %v1237 = vpop.f32.mrb[0].mxu0
        %1238 = vdwg.mxu0
        %v1239 = vmul.f32 %v1193, %v1234
        %v1240 = vpack.c.bf16 %v1239, %v1239
        %v1241 = vld [vmem:[#allocation10] sm:$0xf]
        %v1242 = vld [vmem:[#allocation10 + $0x4] sm:$0xf]
        %v1243 = vld [vmem:[#allocation10 + $0x8] sm:$0xf]
        %v1244 = vld [vmem:[#allocation10 + $0xc] sm:$0xf]
        %v1245 = vld [vmem:[#allocation10 + $0x10] sm:$0xf]
        %v1246 = vld [vmem:[#allocation10 + $0x14] sm:$0xf]
        %v1247 = vld [vmem:[#allocation10 + $0x18] sm:$0xf]
        %v1248 = vld [vmem:[#allocation10 + $0x1c] sm:$0xf]
        %v1249 = vld [vmem:[#allocation10 + $0x20] sm:$0xf]
        %v1250 = vld [vmem:[#allocation10 + $0x24] sm:$0xf]
        %v1251 = vld [vmem:[#allocation10 + $0x28] sm:$0xf]
        %v1252 = vld [vmem:[#allocation10 + $0x2c] sm:$0xf]
        %v1253 = vld [vmem:[#allocation10 + $0x30] sm:$0xf]
        %v1254 = vld [vmem:[#allocation10 + $0x34] sm:$0xf]
        %v1255 = vld [vmem:[#allocation10 + $0x38] sm:$0xf]
        %v1256 = vld [vmem:[#allocation10 + $0x3c] sm:$0xf]
        %v1273 = vunpack.c.l.b16 %v1241
        %v1274 = vunpack.c.l.b16 %v1242
        %v1275 = vunpack.c.l.b16 %v1243
        %v1276 = vunpack.c.l.b16 %v1244
        %v1277 = vunpack.c.l.b16 %v1245
        %v1278 = vunpack.c.l.b16 %v1246
        %v1279 = vunpack.c.l.b16 %v1247
        %v1280 = vunpack.c.l.b16 %v1248
        %v1281 = vunpack.c.l.b16 %v1249
        %v1282 = vunpack.c.l.b16 %v1250
        %v1283 = vunpack.c.l.b16 %v1251
        %v1284 = vunpack.c.l.b16 %v1252
        %v1285 = vunpack.c.l.b16 %v1253
        %v1286 = vunpack.c.l.b16 %v1254
        %v1287 = vunpack.c.l.b16 %v1255
        %v1288 = vunpack.c.l.b16 %v1256
        %v1289 = vpack.c.b16 %v1274, %v1273
        %v1290 = vpack.c.b16 %v1276, %v1275
        %v1291 = vpack.c.b16 %v1278, %v1277
        %v1292 = vpack.c.b16 %v1280, %v1279
        %v1293 = vpack.c.b16 %v1282, %v1281
        %v1294 = vpack.c.b16 %v1284, %v1283
        %v1295 = vpack.c.b16 %v1286, %v1285
        %v1296 = vpack.c.b16 %v1288, %v1287
        %1305 = vmatprep.subr.bf16.mxu0 0
        %1306 = vmatpush1.bf16.msra.mxu0 %v1289
        %1307 = vmatprep.subr.bf16.mxu0 0
        %1308 = vmatpush1.bf16.msra.mxu0 %v1290
        %1309 = vmatprep.subr.bf16.mxu0 0
        %1310 = vmatpush1.bf16.msra.mxu0 %v1291
        %1311 = vmatprep.subr.bf16.mxu0 0
        %1312 = vmatpush1.bf16.msra.mxu0 %v1292
        %1313 = vmatprep.subr.bf16.mxu0 0
        %1314 = vmatpush1.bf16.msra.mxu0 %v1293
        %1315 = vmatprep.subr.bf16.mxu0 0
        %1316 = vmatpush1.bf16.msra.mxu0 %v1294
        %1317 = vmatprep.subr.bf16.mxu0 0
        %1318 = vmatpush1.bf16.msra.mxu0 %v1295
        %1319 = vmatprep.subr.bf16.mxu0 0
        %1320 = vmatpush1.bf16.msra.mxu0 %v1296
        %1321 = vmatprep.subr.bf16.mxu0 0
        %1322 = vmatpush1.bf16.msra.mxu0 0
        %1323 = vmatprep.subr.bf16.mxu0 0
        %1324 = vmatpush1.bf16.msra.mxu0 0
        %1325 = vmatprep.subr.bf16.mxu0 0
        %1326 = vmatpush1.bf16.msra.mxu0 0
        %1327 = vmatprep.subr.bf16.mxu0 0
        %1328 = vmatpush1.bf16.msra.mxu0 0
        %1329 = vmatprep.subr.bf16.mxu0 0
        %1330 = vmatpush1.bf16.msra.mxu0 0
        %1331 = vmatprep.subr.bf16.mxu0 0
        %1332 = vmatpush1.bf16.msra.mxu0 0
        %1333 = vmatprep.subr.bf16.mxu0 0
        %1334 = vmatpush1.bf16.msra.mxu0 0
        %1335 = vmatprep.subr.bf16.mxu0 0
        %1336 = vmatpush1.bf16.msra.mxu0 0
        %1337 = vmatprep.mubr.bf16.mxu0 0
        %1338 = vmatmul.mubr.bf16.gmra.mrb[0].mxu0 %v1240
        %v1339 = vpop.f32.mrb[0].mxu0
        %v1340 = vadd.f32 %v618, %v1339
        %v1341 = vpop.f32.mrb[0].mxu0
        %v1342 = vpop.f32.mrb[0].mxu0
        %v1343 = vpop.f32.mrb[0].mxu0
        %1344 = vdwg.mxu0
        %v1345 = vmul.f32 %v1340, %v1340
        %1346 = vadd.xlane.f32.xlu0 %v1345
        %v1347 = vpop.xlane.xlu0 %1346
        %v1348 = vmul.f32 %v1347, %v622
        %v1349 = vadd.f32 %v1348, 1e-06
        %v1350 = vrsqrt.pop %v1349
        %v1351 = vmul.f32 %v1340, %v1350
        %v1352 = vld [vmem:[%s8] sm:$0x1]
        %v1354 = vlaneseq
        %v1355 = vshrl.u32 %v1354, 7
        %v1356 = vsub.s32 0, %v1355
        %v1357 = vrot.slane %v1352, %v1356
        %v1359 = vmul.f32 %v1351, %v1357
        %v1360 = vpack.c.bf16 %v1359, %v1359
        %v1361 = vld [vmem:[#allocation12] sm:$0xff]
        %v1362 = vld [vmem:[#allocation12 + $0x8] sm:$0xff]
        %v1363 = vld [vmem:[#allocation12 + $0x10] sm:$0xff]
        %v1364 = vld [vmem:[#allocation12 + $0x18] sm:$0xff]
        %v1365 = vld [vmem:[#allocation12 + $0x20] sm:$0xff]
        %v1366 = vld [vmem:[#allocation12 + $0x28] sm:$0xff]
        %v1367 = vld [vmem:[#allocation12 + $0x30] sm:$0xff]
        %v1368 = vld [vmem:[#allocation12 + $0x38] sm:$0xff]
        %v1369 = vld [vmem:[#allocation12 + $0x40] sm:$0xff]
        %v1370 = vld [vmem:[#allocation12 + $0x48] sm:$0xff]
        %v1371 = vld [vmem:[#allocation12 + $0x50] sm:$0xff]
        %v1372 = vld [vmem:[#allocation12 + $0x58] sm:$0xff]
        %v1373 = vld [vmem:[#allocation12 + $0x60] sm:$0xff]
        %v1374 = vld [vmem:[#allocation12 + $0x68] sm:$0xff]
        %v1375 = vld [vmem:[#allocation12 + $0x70] sm:$0xff]
        %v1376 = vld [vmem:[#allocation12 + $0x78] sm:$0xff]
        %v1377 = vld [vmem:[#allocation12 + $0x80] sm:$0xff]
        %v1378 = vld [vmem:[#allocation12 + $0x88] sm:$0xff]
        %v1379 = vld [vmem:[#allocation12 + $0x90] sm:$0xff]
        %v1380 = vld [vmem:[#allocation12 + $0x98] sm:$0xff]
        %v1381 = vld [vmem:[#allocation12 + $0xa0] sm:$0xff]
        %v1382 = vld [vmem:[#allocation12 + $0xa8] sm:$0xff]
        %v1383 = vld [vmem:[#allocation12 + $0xb0] sm:$0xff]
        %v1384 = vld [vmem:[#allocation12 + $0xb8] sm:$0xff]
        %v1385 = vld [vmem:[#allocation12 + $0xc0] sm:$0xff]
        %v1386 = vld [vmem:[#allocation12 + $0xc8] sm:$0xff]
        %v1387 = vld [vmem:[#allocation12 + $0xd0] sm:$0xff]
        %v1388 = vld [vmem:[#allocation12 + $0xd8] sm:$0xff]
        %v1389 = vld [vmem:[#allocation12 + $0xe0] sm:$0xff]
        %v1390 = vld [vmem:[#allocation12 + $0xe8] sm:$0xff]
        %v1391 = vld [vmem:[#allocation12 + $0xf0] sm:$0xff]
        %v1392 = vld [vmem:[#allocation12 + $0xf8] sm:$0xff]
        %v1393 = vld [vmem:[%s10] sm:$0xf]
        %v1395 = vlaneseq
        %v1396 = vshrl.u32 %v1395, 7
        %v1397 = vsub.s32 0, %v1396
        %v1398 = vrot.slane %v1393, %v1397
        %v1399 = vlaneseq
        %v1400 = vshrl.u32 %v1399, 7
        %v1401 = vsub.s32 1, %v1400
        %v1402 = vrot.slane %v1393, %v1401
        %v1403 = vlaneseq
        %v1404 = vshrl.u32 %v1403, 7
        %v1405 = vsub.s32 2, %v1404
        %v1406 = vrot.slane %v1393, %v1405
        %v1407 = vlaneseq
        %v1408 = vshrl.u32 %v1407, 7
        %v1409 = vsub.s32 3, %v1408
        %v1410 = vrot.slane %v1393, %v1409
        %v1447 = vunpack.c.l.b16 %v1361
        %v1448 = vunpack.c.h.b16 %v1361
        %v1449 = vunpack.c.l.b16 %v1362
        %v1450 = vunpack.c.h.b16 %v1362
        %v1451 = vunpack.c.l.b16 %v1363
        %v1452 = vunpack.c.h.b16 %v1363
        %v1453 = vunpack.c.l.b16 %v1364
        %v1454 = vunpack.c.h.b16 %v1364
        %v1455 = vunpack.c.l.b16 %v1365
        %v1456 = vunpack.c.h.b16 %v1365
        %v1457 = vunpack.c.l.b16 %v1366
        %v1458 = vunpack.c.h.b16 %v1366
        %v1459 = vunpack.c.l.b16 %v1367
        %v1460 = vunpack.c.h.b16 %v1367
        %v1461 = vunpack.c.l.b16 %v1368
        %v1462 = vunpack.c.h.b16 %v1368
        %v1463 = vunpack.c.l.b16 %v1369
        %v1464 = vunpack.c.h.b16 %v1369
        %v1465 = vunpack.c.l.b16 %v1370
        %v1466 = vunpack.c.h.b16 %v1370
        %v1467 = vunpack.c.l.b16 %v1371
        %v1468 = vunpack.c.h.b16 %v1371
        %v1469 = vunpack.c.l.b16 %v1372
        %v1470 = vunpack.c.h.b16 %v1372
        %v1471 = vunpack.c.l.b16 %v1373
        %v1472 = vunpack.c.h.b16 %v1373
        %v1473 = vunpack.c.l.b16 %v1374
        %v1474 = vunpack.c.h.b16 %v1374
        %v1475 = vunpack.c.l.b16 %v1375
        %v1476 = vunpack.c.h.b16 %v1375
        %v1477 = vunpack.c.l.b16 %v1376
        %v1478 = vunpack.c.h.b16 %v1376
        %v1479 = vunpack.c.l.b16 %v1377
        %v1480 = vunpack.c.h.b16 %v1377
        %v1481 = vunpack.c.l.b16 %v1378
        %v1482 = vunpack.c.h.b16 %v1378
        %v1483 = vunpack.c.l.b16 %v1379
        %v1484 = vunpack.c.h.b16 %v1379
        %v1485 = vunpack.c.l.b16 %v1380
        %v1486 = vunpack.c.h.b16 %v1380
        %v1487 = vunpack.c.l.b16 %v1381
        %v1488 = vunpack.c.h.b16 %v1381
        %v1489 = vunpack.c.l.b16 %v1382
        %v1490 = vunpack.c.h.b16 %v1382
        %v1491 = vunpack.c.l.b16 %v1383
        %v1492 = vunpack.c.h.b16 %v1383
        %v1493 = vunpack.c.l.b16 %v1384
        %v1494 = vunpack.c.h.b16 %v1384
        %v1495 = vunpack.c.l.b16 %v1385
        %v1496 = vunpack.c.h.b16 %v1385
        %v1497 = vunpack.c.l.b16 %v1386
        %v1498 = vunpack.c.h.b16 %v1386
        %v1499 = vunpack.c.l.b16 %v1387
        %v1500 = vunpack.c.h.b16 %v1387
        %v1501 = vunpack.c.l.b16 %v1388
        %v1502 = vunpack.c.h.b16 %v1388
        %v1503 = vunpack.c.l.b16 %v1389
        %v1504 = vunpack.c.h.b16 %v1389
        %v1505 = vunpack.c.l.b16 %v1390
        %v1506 = vunpack.c.h.b16 %v1390
        %v1507 = vunpack.c.l.b16 %v1391
        %v1508 = vunpack.c.h.b16 %v1391
        %v1509 = vunpack.c.l.b16 %v1392
        %v1510 = vunpack.c.h.b16 %v1392
        %v1511 = vpack.c.b16 %v1451, %v1447
        %v1512 = vpack.c.b16 %v1452, %v1448
        %v1513 = vpack.c.b16 %v1453, %v1449
        %v1514 = vpack.c.b16 %v1454, %v1450
        %v1515 = vpack.c.b16 %v1459, %v1455
        %v1516 = vpack.c.b16 %v1460, %v1456
        %v1517 = vpack.c.b16 %v1461, %v1457
        %v1518 = vpack.c.b16 %v1462, %v1458
        %v1519 = vpack.c.b16 %v1467, %v1463
        %v1520 = vpack.c.b16 %v1468, %v1464
        %v1521 = vpack.c.b16 %v1469, %v1465
        %v1522 = vpack.c.b16 %v1470, %v1466
        %v1523 = vpack.c.b16 %v1475, %v1471
        %v1524 = vpack.c.b16 %v1476, %v1472
        %v1525 = vpack.c.b16 %v1477, %v1473
        %v1526 = vpack.c.b16 %v1478, %v1474
        %v1527 = vpack.c.b16 %v1483, %v1479
        %v1528 = vpack.c.b16 %v1484, %v1480
        %v1529 = vpack.c.b16 %v1485, %v1481
        %v1530 = vpack.c.b16 %v1486, %v1482
        %v1531 = vpack.c.b16 %v1491, %v1487
        %v1532 = vpack.c.b16 %v1492, %v1488
        %v1533 = vpack.c.b16 %v1493, %v1489
        %v1534 = vpack.c.b16 %v1494, %v1490
        %v1535 = vpack.c.b16 %v1499, %v1495
        %v1536 = vpack.c.b16 %v1500, %v1496
        %v1537 = vpack.c.b16 %v1501, %v1497
        %v1538 = vpack.c.b16 %v1502, %v1498
        %v1539 = vpack.c.b16 %v1507, %v1503
        %v1540 = vpack.c.b16 %v1508, %v1504
        %v1541 = vpack.c.b16 %v1509, %v1505
        %v1542 = vpack.c.b16 %v1510, %v1506
        %1575 = vmatprep.subr.bf16.mxu0 %v1512
        %1576 = vmatpush1.bf16.msra.mxu0 %v1511
        %1577 = vmatprep.subr.bf16.mxu0 %v1516
        %1578 = vmatpush1.bf16.msra.mxu0 %v1515
        %1579 = vmatprep.subr.bf16.mxu0 %v1520
        %1580 = vmatpush1.bf16.msra.mxu0 %v1519
        %1581 = vmatprep.subr.bf16.mxu0 %v1524
        %1582 = vmatpush1.bf16.msra.mxu0 %v1523
        %1583 = vmatprep.subr.bf16.mxu0 %v1528
        %1584 = vmatpush1.bf16.msra.mxu0 %v1527
        %1585 = vmatprep.subr.bf16.mxu0 %v1532
        %1586 = vmatpush1.bf16.msra.mxu0 %v1531
        %1587 = vmatprep.subr.bf16.mxu0 %v1536
        %1588 = vmatpush1.bf16.msra.mxu0 %v1535
        %1589 = vmatprep.subr.bf16.mxu0 %v1540
        %1590 = vmatpush1.bf16.msra.mxu0 %v1539
        %1591 = vmatprep.subr.bf16.mxu0 0
        %1592 = vmatpush1.bf16.msra.mxu0 0
        %1593 = vmatprep.subr.bf16.mxu0 0
        %1594 = vmatpush1.bf16.msra.mxu0 0
        %1595 = vmatprep.subr.bf16.mxu0 0
        %1596 = vmatpush1.bf16.msra.mxu0 0
        %1597 = vmatprep.subr.bf16.mxu0 0
        %1598 = vmatpush1.bf16.msra.mxu0 0
        %1599 = vmatprep.subr.bf16.mxu0 0
        %1600 = vmatpush1.bf16.msra.mxu0 0
        %1601 = vmatprep.subr.bf16.mxu0 0
        %1602 = vmatpush1.bf16.msra.mxu0 0
        %1603 = vmatprep.subr.bf16.mxu0 0
        %1604 = vmatpush1.bf16.msra.mxu0 0
        %1605 = vmatprep.subr.bf16.mxu0 0
        %1606 = vmatpush1.bf16.msra.mxu0 0
        %1607 = vmatprep.mubr.bf16.mxu0 0
        %1608 = vmatmul.mubr.bf16.gmra.mrb[0].mxu0 %v1360
        %v1609 = vpop.f32.mrb[0].mxu0
        %v1610 = vadd.f32 %v1398, %v1609
        %v1611 = vpop.f32.mrb[0].mxu0
        %v1612 = vadd.f32 %v1402, %v1611
        %v1613 = vpop.f32.mrb[0].mxu0
        %v1614 = vpop.f32.mrb[0].mxu0
        %1615 = vdwg.mxu0
        %1616 = vmatprep.subr.bf16.mxu0 %v1514
        %1617 = vmatpush1.bf16.msra.mxu0 %v1513
        %1618 = vmatprep.subr.bf16.mxu0 %v1518
        %1619 = vmatpush1.bf16.msra.mxu0 %v1517
        %1620 = vmatprep.subr.bf16.mxu0 %v1522
        %1621 = vmatpush1.bf16.msra.mxu0 %v1521
        %1622 = vmatprep.subr.bf16.mxu0 %v1526
        %1623 = vmatpush1.bf16.msra.mxu0 %v1525
        %1624 = vmatprep.subr.bf16.mxu0 %v1530
        %1625 = vmatpush1.bf16.msra.mxu0 %v1529
        %1626 = vmatprep.subr.bf16.mxu0 %v1534
        %1627 = vmatpush1.bf16.msra.mxu0 %v1533
        %1628 = vmatprep.subr.bf16.mxu0 %v1538
        %1629 = vmatpush1.bf16.msra.mxu0 %v1537
        %1630 = vmatprep.subr.bf16.mxu0 %v1542
        %1631 = vmatpush1.bf16.msra.mxu0 %v1541
        %1632 = vmatprep.subr.bf16.mxu0 0
        %1633 = vmatpush1.bf16.msra.mxu0 0
        %1634 = vmatprep.subr.bf16.mxu0 0
        %1635 = vmatpush1.bf16.msra.mxu0 0
        %1636 = vmatprep.subr.bf16.mxu0 0
        %1637 = vmatpush1.bf16.msra.mxu0 0
        %1638 = vmatprep.subr.bf16.mxu0 0
        %1639 = vmatpush1.bf16.msra.mxu0 0
        %1640 = vmatprep.subr.bf16.mxu0 0
        %1641 = vmatpush1.bf16.msra.mxu0 0
        %1642 = vmatprep.subr.bf16.mxu0 0
        %1643 = vmatpush1.bf16.msra.mxu0 0
        %1644 = vmatprep.subr.bf16.mxu0 0
        %1645 = vmatpush1.bf16.msra.mxu0 0
        %1646 = vmatprep.subr.bf16.mxu0 0
        %1647 = vmatpush1.bf16.msra.mxu0 0
        %1648 = vmatprep.mubr.bf16.mxu0 0
        %1649 = vmatmul.mubr.bf16.gmra.mrb[0].mxu0 %v1360
        %v1650 = vpop.f32.mrb[0].mxu0
        %v1651 = vadd.f32 %v1406, %v1650
        %v1652 = vpop.f32.mrb[0].mxu0
        %v1653 = vadd.f32 %v1410, %v1652
        %v1654 = vpop.f32.mrb[0].mxu0
        %v1655 = vpop.f32.mrb[0].mxu0
        %1656 = vdwg.mxu0
        %v1657 = vxor.u32 %v1651, 2147483648
        %v1658 = vxor.u32 %v1653, 2147483648
        %v1659 = vmul.f32 %v1657, 1.442695
        %v1660 = vpow.pop %v1659
        %v1661 = vmul.f32 %v1658, 1.442695
        %v1662 = vpow.pop %v1661
        %v1663 = vadd.f32 %v1660, 1.0
        %v1664 = vadd.f32 %v1662, 1.0
        %v1665 = vrcp.pop %v1663
        %v1666 = vmul.f32 1.0, %v1665
        %v1667 = vrcp.pop %v1664
        %v1668 = vmul.f32 1.0, %v1667
        %v1669 = vmul.f32 %v1651, %v1666
        %v1670 = vmul.f32 %v1653, %v1668
        %v1671 = vmul.f32 %v1610, %v1669
        %v1672 = vmul.f32 %v1612, %v1670
        %v1673 = vpack.c.bf16 %v1671, %v1671
        %v1674 = vpack.c.bf16 %v1672, %v1672
        %v1675 = vld [vmem:[#allocation13] sm:$0xf]
        %v1676 = vld [vmem:[#allocation13 + $0x4] sm:$0xf]
        %v1677 = vld [vmem:[#allocation13 + $0x8] sm:$0xf]
        %v1678 = vld [vmem:[#allocation13 + $0xc] sm:$0xf]
        %v1679 = vld [vmem:[#allocation13 + $0x10] sm:$0xf]
        %v1680 = vld [vmem:[#allocation13 + $0x14] sm:$0xf]
        %v1681 = vld [vmem:[#allocation13 + $0x18] sm:$0xf]
        %v1682 = vld [vmem:[#allocation13 + $0x1c] sm:$0xf]
        %v1683 = vld [vmem:[#allocation13 + $0x20] sm:$0xf]
        %v1684 = vld [vmem:[#allocation13 + $0x24] sm:$0xf]
        %v1685 = vld [vmem:[#allocation13 + $0x28] sm:$0xf]
        %v1686 = vld [vmem:[#allocation13 + $0x2c] sm:$0xf]
        %v1687 = vld [vmem:[#allocation13 + $0x30] sm:$0xf]
        %v1688 = vld [vmem:[#allocation13 + $0x34] sm:$0xf]
        %v1689 = vld [vmem:[#allocation13 + $0x38] sm:$0xf]
        %v1690 = vld [vmem:[#allocation13 + $0x3c] sm:$0xf]
        %v1691 = vld [vmem:[#allocation13 + $0x40] sm:$0xf]
        %v1692 = vld [vmem:[#allocation13 + $0x44] sm:$0xf]
        %v1693 = vld [vmem:[#allocation13 + $0x48] sm:$0xf]
        %v1694 = vld [vmem:[#allocation13 + $0x4c] sm:$0xf]
        %v1695 = vld [vmem:[#allocation13 + $0x50] sm:$0xf]
        %v1696 = vld [vmem:[#allocation13 + $0x54] sm:$0xf]
        %v1697 = vld [vmem:[#allocation13 + $0x58] sm:$0xf]
        %v1698 = vld [vmem:[#allocation13 + $0x5c] sm:$0xf]
        %v1699 = vld [vmem:[#allocation13 + $0x60] sm:$0xf]
        %v1700 = vld [vmem:[#allocation13 + $0x64] sm:$0xf]
        %v1701 = vld [vmem:[#allocation13 + $0x68] sm:$0xf]
        %v1702 = vld [vmem:[#allocation13 + $0x6c] sm:$0xf]
        %v1703 = vld [vmem:[#allocation13 + $0x70] sm:$0xf]
        %v1704 = vld [vmem:[#allocation13 + $0x74] sm:$0xf]
        %v1705 = vld [vmem:[#allocation13 + $0x78] sm:$0xf]
        %v1706 = vld [vmem:[#allocation13 + $0x7c] sm:$0xf]
        %v1707 = vld [vmem:[%s12] sm:$0x1]
        %v1709 = vlaneseq
        %v1710 = vshrl.u32 %v1709, 7
        %v1711 = vsub.s32 0, %v1710
        %v1712 = vrot.slane %v1707, %v1711
        %v1746 = vunpack.c.l.b16 %v1675
        %v1747 = vunpack.c.l.b16 %v1676
        %v1748 = vunpack.c.l.b16 %v1677
        %v1749 = vunpack.c.l.b16 %v1678
        %v1750 = vunpack.c.l.b16 %v1679
        %v1751 = vunpack.c.l.b16 %v1680
        %v1752 = vunpack.c.l.b16 %v1681
        %v1753 = vunpack.c.l.b16 %v1682
        %v1754 = vunpack.c.l.b16 %v1683
        %v1755 = vunpack.c.l.b16 %v1684
        %v1756 = vunpack.c.l.b16 %v1685
        %v1757 = vunpack.c.l.b16 %v1686
        %v1758 = vunpack.c.l.b16 %v1687
        %v1759 = vunpack.c.l.b16 %v1688
        %v1760 = vunpack.c.l.b16 %v1689
        %v1761 = vunpack.c.l.b16 %v1690
        %v1762 = vunpack.c.l.b16 %v1691
        %v1763 = vunpack.c.l.b16 %v1692
        %v1764 = vunpack.c.l.b16 %v1693
        %v1765 = vunpack.c.l.b16 %v1694
        %v1766 = vunpack.c.l.b16 %v1695
        %v1767 = vunpack.c.l.b16 %v1696
        %v1768 = vunpack.c.l.b16 %v1697
        %v1769 = vunpack.c.l.b16 %v1698
        %v1770 = vunpack.c.l.b16 %v1699
        %v1771 = vunpack.c.l.b16 %v1700
        %v1772 = vunpack.c.l.b16 %v1701
        %v1773 = vunpack.c.l.b16 %v1702
        %v1774 = vunpack.c.l.b16 %v1703
        %v1775 = vunpack.c.l.b16 %v1704
        %v1776 = vunpack.c.l.b16 %v1705
        %v1777 = vunpack.c.l.b16 %v1706
        %v1778 = vpack.c.b16 %v1747, %v1746
        %v1779 = vpack.c.b16 %v1749, %v1748
        %v1780 = vpack.c.b16 %v1751, %v1750
        %v1781 = vpack.c.b16 %v1753, %v1752
        %v1782 = vpack.c.b16 %v1755, %v1754
        %v1783 = vpack.c.b16 %v1757, %v1756
        %v1784 = vpack.c.b16 %v1759, %v1758
        %v1785 = vpack.c.b16 %v1761, %v1760
        %v1786 = vpack.c.b16 %v1763, %v1762
        %v1787 = vpack.c.b16 %v1765, %v1764
        %v1788 = vpack.c.b16 %v1767, %v1766
        %v1789 = vpack.c.b16 %v1769, %v1768
        %v1790 = vpack.c.b16 %v1771, %v1770
        %v1791 = vpack.c.b16 %v1773, %v1772
        %v1792 = vpack.c.b16 %v1775, %v1774
        %v1793 = vpack.c.b16 %v1777, %v1776
        %1810 = vmatprep.subr.bf16.mxu0 0
        %1811 = vmatpush1.bf16.msra.mxu0 %v1778
        %1812 = vmatprep.subr.bf16.mxu0 0
        %1813 = vmatpush1.bf16.msra.mxu0 %v1779
        %1814 = vmatprep.subr.bf16.mxu0 0
        %1815 = vmatpush1.bf16.msra.mxu0 %v1780
        %1816 = vmatprep.subr.bf16.mxu0 0
        %1817 = vmatpush1.bf16.msra.mxu0 %v1781
        %1818 = vmatprep.subr.bf16.mxu0 0
        %1819 = vmatpush1.bf16.msra.mxu0 %v1782
        %1820 = vmatprep.subr.bf16.mxu0 0
        %1821 = vmatpush1.bf16.msra.mxu0 %v1783
        %1822 = vmatprep.subr.bf16.mxu0 0
        %1823 = vmatpush1.bf16.msra.mxu0 %v1784
        %1824 = vmatprep.subr.bf16.mxu0 0
        %1825 = vmatpush1.bf16.msra.mxu0 %v1785
        %1826 = vmatprep.subr.bf16.mxu0 0
        %1827 = vmatpush1.bf16.msra.mxu0 %v1786
        %1828 = vmatprep.subr.bf16.mxu0 0
        %1829 = vmatpush1.bf16.msra.mxu0 %v1787
        %1830 = vmatprep.subr.bf16.mxu0 0
        %1831 = vmatpush1.bf16.msra.mxu0 %v1788
        %1832 = vmatprep.subr.bf16.mxu0 0
        %1833 = vmatpush1.bf16.msra.mxu0 %v1789
        %1834 = vmatprep.subr.bf16.mxu0 0
        %1835 = vmatpush1.bf16.msra.mxu0 %v1790
        %1836 = vmatprep.subr.bf16.mxu0 0
        %1837 = vmatpush1.bf16.msra.mxu0 %v1791
        %1838 = vmatprep.subr.bf16.mxu0 0
        %1839 = vmatpush1.bf16.msra.mxu0 %v1792
        %1840 = vmatprep.subr.bf16.mxu0 0
        %1841 = vmatpush1.bf16.msra.mxu0 %v1793
        %1842 = vmatprep.mubr.bf16.mxu0 %v1674
        %1843 = vmatmul.mubr.bf16.gmra.mrb[0].mxu0 %v1673
        %v1844 = vpop.f32.mrb[0].mxu0
        %v1845 = vadd.f32 %v1712, %v1844
        %v1846 = vpop.f32.mrb[0].mxu0
        %v1847 = vpop.f32.mrb[0].mxu0
        %v1848 = vpop.f32.mrb[0].mxu0
        %1849 = vdwg.mxu0
        %v1850 = vadd.f32 %v1845, %v1340
        %1851 = vst [vmem:[%s600] sm:$0xff] %v1850
        %s1852 = sand.u32 %s379, 1
        %s1853 = scalar_lea.sflag [#allocation6], %s1852
        %s1854 = sand.u32 %s379, 1
        %s1855 = smul.addr %s1854, 8
        %s1856 = scalar_lea.vmem [#allocation15], %s1855
        // Predicated region
        $region113: #{tpu_custom_call.1} parent=79 // pred_check
          %p1857 = pneg %p389
        $region114: #{tpu_custom_call.1} parent=79 // pred_check_branch
          %1859 = sbr.rel (%p1857) target = $region116
        $region115: #{tpu_custom_call.1} parent=79 // pred_region
          %s1861 = ssub.s32 128, 128
          %1862 = vsyncadd %s1853, %s1861
          %s1863 = smul.addr %s39, 2
          %s1864 = sadd.s32 %s40, %s1863
          %s1865 = smul.addr %s1864, 128
          %s1866 = scalar_lea.hbm %s15, %s1865
          %s1868 = sshll.u32 %s1856, 4
          %s1869 = int_to_ptr.vmem [resolvable:$true] %s1868
          %1871 = dma.vmem_to_hbm [thread:$0]  %s1869, 128, %s1866, %s1853
        $region116: #{tpu_custom_call.1} parent=79 // pred_fallthru
          _
      $region80: #{tpu_custom_call.1} parent=5 // pred_fallthru
        _
      %p1872 = scmp.le.s32.totalorder 2, %s30
      // Predicated region
      $region117: #{tpu_custom_call.1} parent=5 // pred_check
        %p1873 = pneg %p1872
      $region118: #{tpu_custom_call.1} parent=5 // pred_check_branch
        %1875 = sbr.rel (%p1873) target = $region120
      $region119: #{tpu_custom_call.1} parent=5 // pred_region
        %s1876 = ssub.s32 %s30, 2
        // Predicated region
        $region121: #{tpu_custom_call.1} parent=119 // pred_check
          %p1877 = pneg %p395
        $region122: #{tpu_custom_call.1} parent=119 // pred_check_branch
          %1879 = sbr.rel (%p1877) target = $region124
        $region123: #{tpu_custom_call.1} parent=119 // pred_region
          %s1880 = sand.u32 %s380, 1
          %s1881 = scalar_lea.sflag [#allocation6], %s1880
          %s1882 = sand.u32 %s380, 1
          %s1883 = smul.addr %s1882, 8
          %s1884 = scalar_lea.vmem [#allocation15], %s1883
          %1885 = dma.done %s1881, 128
        $region124: #{tpu_custom_call.1} parent=119 // pred_fallthru
          _
      $region120: #{tpu_custom_call.1} parent=5 // pred_fallthru
        _
    $region6: #{tpu_custom_call.1} parent=1 // loop_footer
      %s34 = sadd.s32 1, %s30
    $region7: #{tpu_custom_call.1} parent=1 // loop_footer_branch
      %29 = sbr.rel target = $region3
    $region8: #{tpu_custom_call.1} parent=1 // loop_exit
      _
    %1886 = vsyncpa [#allocation5], 1
    %s1887 = scalar_lea.sflag [#allocation5], 1
    %1888 = vsyncpa %s1887, 1
    %1889 = vsyncpa [#allocation8], 1
    %1890 = vsyncpa [#allocation11], 1
    %1891 = vsyncpa [#allocation14], 1
    %1892 = vsyncpa [#allocation6], 1
    %s1893 = scalar_lea.sflag [#allocation6], 1
    %1894 = vsyncpa %s1893, 1

</llo_original>
